<compile_context>
chip_gen: v7x
topology: tpu7x:2x2x1
jax: 0.10.0
libtpu: 0.0.40
codegen_flags: <defaults>
</compile_context>

<pallas_src>
import functools

import jax
import jax.numpy as jnp
from jax.experimental import pallas as pl
from jax.experimental.pallas import tpu as pltpu


def _resblock_kernel(x_ref, w1_ref, b1_ref, w2_ref, b2_ref, o_ref, hpad_ref,
                     *, cin, mxu_dtype):
    # x_ref : (1, 1, tH+4, W+2, 3*Cin)  f32  zero-padded, dx-unfolded row slab
    # w1_ref: (3, 3*Cin, Cexp)          mxu  conv1 weights, [dy, dx*Cin+ci, co]
    # b1_ref: (1, Cexp)                 f32
    # w2_ref: (3, 3, Cexp, Cout)        mxu  conv2 weights (scaling folded in)
    # b2_ref: (1, Cout)                 f32  (scaling folded in)
    # o_ref : (1, tH*W, Cout)
    # hpad_ref: (tH+2, W+2, Cexp) f32 VMEM scratch — zero-bordered hidden map
    tH = x_ref.shape[2] - 4
    Wp = x_ref.shape[3]            # W + 2
    W = Wp - 2
    Cexp = w1_ref.shape[2]
    Cout = w2_ref.shape[3]
    Hp = tH + 2

    xs = x_ref[0, 0]               # (tH+4, W+2, 3*Cin)

    # ---- conv1 (3x3, pad=1) + bias + ReLU on the (tH+2, W+2) extended grid.
    # dx is already folded into the K dim by the wrapper-side unfold, so each dy
    # is one contiguous slice and one MXU matmul with K = 3*Cin.
    acc1 = jnp.zeros((Hp * Wp, Cexp), jnp.float32)
    for dy in range(3):
        patch = xs[dy:dy + Hp].reshape(Hp * Wp, 3 * cin)
        acc1 = acc1 + jnp.dot(patch.astype(mxu_dtype), w1_ref[dy],
                              preferred_element_type=jnp.float32)
    hpad_ref[...] = jnp.maximum(acc1 + b1_ref[...], 0.0).reshape(Hp, Wp, Cexp)

    # conv2's zero padding: hidden positions outside the image must be exactly 0.
    # Only the halo border is touched (no full-map iota/where mask).
    zero_col = jnp.zeros((Hp, 1, Cexp), jnp.float32)
    hpad_ref[:, 0:1, :] = zero_col            # image column -1
    hpad_ref[:, Wp - 1:Wp, :] = zero_col      # image column W

    h_idx = pl.program_id(1)

    @pl.when(h_idx == 0)
    def _():                                  # image row -1 (first row tile)
        hpad_ref[0:1, :, :] = jnp.zeros((1, Wp, Cexp), jnp.float32)

    @pl.when(h_idx == pl.num_programs(1) - 1)
    def _():                                  # image row H (last row tile)
        hpad_ref[Hp - 1:Hp, :, :] = jnp.zeros((1, Wp, Cexp), jnp.float32)

    # ---- conv2 (3x3, pad=1) + bias; scaling already folded into w2/b2.
    hp = hpad_ref[...]                        # (tH+2, W+2, Cexp)
    acc2 = jnp.zeros((tH * W, Cout), jnp.float32)
    for dy in range(3):
        for dx in range(3):
            patch = hp[dy:dy + tH, dx:dx + W, :].reshape(tH * W, Cexp)
            acc2 = acc2 + jnp.dot(patch.astype(mxu_dtype), w2_ref[dy, dx],
                                  preferred_element_type=jnp.float32)
    y = acc2 + b2_ref[...]

    # ---- residual add (requires Cin == Cout).  The dx=0 channel chunk of the
    # unfolded slab at column c+2 is the original pixel x[r0+u, c, :].
    resid = xs[2:2 + tH, 2:2 + W, 0:cin].reshape(tH * W, cin)
    o_ref[0] = (resid + y).astype(o_ref.dtype)


def _choose_tile_h(H, W, Cin, Cexp, Cout, budget_bytes=6 * 1024 * 1024):
    """Largest row tile (multiple of 8 dividing H, or H itself) under the budget."""
    cands = sorted({t for t in range(8, H + 1, 8) if H % t == 0} | {H})

    def footprint(t):
        slab = 2 * (t + 4) * (W + 2) * 3 * Cin * 4   # double-buffered input slab
        hid = (t + 2) * (W + 2) * Cexp * 4           # hpad scratch
        tmp = 2 * (t + 2) * (W + 2) * Cexp * 4       # acc1 / patch temporaries
        out = 3 * t * W * Cout * 4                   # acc2 + double-buffered out
        return slab + hid + tmp + out

    fitting = [t for t in cands if footprint(t) <= budget_bytes]
    return max(fitting) if fitting else cands[0]


def residual_block_a(x_nchw, w1_oihw, b1, w2_oihw, b2, scaling=None,
                     tile_h=None, mxu_dtype=jnp.bfloat16):
    """Matches ResidualBlockA.forward.  Input/output NCHW, weights OIHW
    (weight-norm already folded into the effective weights)."""
    N, Cin, H, W = x_nchw.shape
    Cexp = w1_oihw.shape[0]
    Cout = w2_oihw.shape[0]
    assert w1_oihw.shape == (Cexp, Cin, 3, 3)
    assert w2_oihw.shape == (Cout, Cexp, 3, 3)
    assert Cin == Cout, "residual add requires in_channels == out_channels"

    if tile_h is None:
        tile_h = _choose_tile_h(H, W, Cin, Cexp, Cout)
    assert H % tile_h == 0, "tile_h must divide H"
    n_h = H // tile_h

    # ---- weight / bias prep (trace-time, tiny constant tensors) -------------
    w1 = jnp.transpose(w1_oihw, (2, 3, 1, 0)).reshape(3, 3 * Cin, Cexp)
    w2 = jnp.transpose(w2_oihw, (2, 3, 1, 0))            # (3, 3, Cexp, Cout)
    b1 = b1.reshape(1, Cexp).astype(jnp.float32)
    b2 = b2.reshape(1, Cout).astype(jnp.float32)
    if scaling is not None:
        w2 = w2 * scaling                                # fold residual scaling
        b2 = b2 * scaling
    w1 = w1.astype(mxu_dtype)
    w2 = w2.astype(mxu_dtype)

    # ---- input prep: NHWC, zero-pad by 2, dx-unfold, halo'd row slabs --------
    x_nhwc = jnp.transpose(x_nchw, (0, 2, 3, 1))
    xpad = jnp.pad(x_nhwc, ((0, 0), (2, 2), (2, 2), (0, 0)))
    # dx-unfold: xu[n, i, j, dx*Cin+ci] = xpad[n, i, j+dx, ci]; (N, H+4, W+2, 3*Cin)
    xu = jnp.concatenate([xpad[:, :, dx:dx + W + 2, :] for dx in range(3)], axis=-1)
    # Halo'd row slabs so the H grid axis maps to non-overlapping blocks:
    # (N, n_h, tile_h+4, W+2, 3*Cin)
    slabs = jnp.stack(
        [xu[:, h * tile_h:h * tile_h + tile_h + 4] for h in range(n_h)], axis=1)
    # TODO(synk): the pad/unfold/slab gather is an extra HBM pass over the input;
    # for memory-bound configs move the halo DMA in-kernel (pl.ANY + manual
    # make_async_copy double-buffering) instead.

    kernel = functools.partial(_resblock_kernel, cin=Cin, mxu_dtype=mxu_dtype)
    out_flat = pl.pallas_call(
        kernel,
        out_shape=jax.ShapeDtypeStruct((N, H * W, Cout), x_nchw.dtype),
        grid_spec=pltpu.PrefetchScalarGridSpec(
            num_scalar_prefetch=0,
            grid=(N, n_h),
            in_specs=[
                pl.BlockSpec((1, 1, tile_h + 4, W + 2, 3 * Cin),
                             lambda n, h: (n, h, 0, 0, 0)),
                pl.BlockSpec((3, 3 * Cin, Cexp), lambda n, h: (0, 0, 0)),
                pl.BlockSpec((1, Cexp), lambda n, h: (0, 0)),
                pl.BlockSpec((3, 3, Cexp, Cout), lambda n, h: (0, 0, 0, 0)),
                pl.BlockSpec((1, Cout), lambda n, h: (0, 0)),
            ],
            out_specs=pl.BlockSpec((1, tile_h * W, Cout), lambda n, h: (n, h, 0)),
            scratch_shapes=[pltpu.VMEM((tile_h + 2, W + 2, Cexp), jnp.float32)],
        ),
        compiler_params=pltpu.CompilerParams(
            dimension_semantics=("parallel", "parallel"),
            vmem_limit_bytes=32 * 1024 * 1024),
    )(slabs, w1, b1, w2, b2)

    out_nhwc = out_flat.reshape(N, H, W, Cout)
    return jnp.transpose(out_nhwc, (0, 3, 1, 2))


def _weight_norm(v_oihw, g):
    # torch.nn.utils.weight_norm with dim=0: per-output-channel norm over (I,H,W)
    norm = jnp.sqrt(jnp.sum(v_oihw * v_oihw, axis=(1, 2, 3), keepdims=True))
    return g.reshape(-1, 1, 1, 1) * v_oihw / norm


def _ref_forward(x_nchw, w1_oihw, b1, w2_oihw, b2, scaling):
    dn = ("NHWC", "HWIO", "NHWC")
    x = jnp.transpose(x_nchw, (0, 2, 3, 1))
    w1 = jnp.transpose(w1_oihw, (2, 3, 1, 0))
    w2 = jnp.transpose(w2_oihw, (2, 3, 1, 0))
    h = jax.lax.conv_general_dilated(x, w1, (1, 1), "SAME",
                                     dimension_numbers=dn) + b1
    h = jnp.maximum(h, 0.0)
    y = jax.lax.conv_general_dilated(h, w2, (1, 1), "SAME",
                                     dimension_numbers=dn) + b2
    if scaling is not None:
        y = scaling * y
    return jnp.transpose(x + y, (0, 3, 1, 2))


if __name__ == "__main__":
    # Small shapes consistent with the module: N=2, C=4, H=W=16, expansion=4.
    N, C, H, W = 2, 4, 16, 16
    expansion_ratio = 4
    Cexp = C * expansion_ratio
    scaling = 0.1

    key = jax.random.PRNGKey(0)
    kx, kv1, kg1, kb1, kv2, kg2, kb2 = jax.random.split(key, 7)

    x = jax.random.normal(kx, (N, C, H, W), dtype=jnp.float32)

    # weight_norm parametrization: v (direction) and g (magnitude), folded here.
    v1 = jax.random.normal(kv1, (Cexp, C, 3, 3), dtype=jnp.float32) * 0.1
    g1 = jax.random.uniform(kg1, (Cexp,), minval=0.5, maxval=1.5)
    b1 = jax.random.normal(kb1, (Cexp,), dtype=jnp.float32) * 0.1
    v2 = jax.random.normal(kv2, (C, Cexp, 3, 3), dtype=jnp.float32) * 0.1
    g2 = jax.random.uniform(kg2, (C,), minval=0.5, maxval=1.5)
    b2 = jax.random.normal(kb2, (C,), dtype=jnp.float32) * 0.1

    w1 = _weight_norm(v1, g1)  # conv1 effective weight (OIHW)
    w2 = _weight_norm(v2, g2)  # conv2 effective weight (OIHW)

    # tile_h=8 -> two row tiles per image, exercising the halo / border path.
    out = residual_block_a(x, w1, b1, w2, b2, scaling=scaling, tile_h=8)
    out = jax.block_until_ready(out)

    ref = jax.block_until_ready(_ref_forward(x, w1, b1, w2, b2, scaling))
    assert out.shape == (N, C, H, W)
    max_err = jnp.max(jnp.abs(out - ref))
    # bf16 MXU operands with f32 accumulation: loosened tolerance vs the f32 ref.
    assert jnp.allclose(out, ref, atol=2e-2, rtol=2e-2), f"max abs err {max_err}"

    print("KERNEL_OK")
</pallas_src>

<mosaic_0001>
module attributes {stable_mosaic.version = 11 : i64} {
  func.func @_resblock_kernel(%arg0: i32, %arg1: i32, %arg2: memref<1x1x12x18x12xf32, #tpu.memory_space<vmem>>, %arg3: memref<3x12x16xbf16, #tpu.memory_space<vmem>>, %arg4: memref<1x16xf32, #tpu.memory_space<vmem>>, %arg5: memref<3x3x16x4xbf16, #tpu.memory_space<vmem>>, %arg6: memref<1x4xf32, #tpu.memory_space<vmem>>, %arg7: memref<1x128x4xf32, #tpu.memory_space<vmem>>, %arg8: memref<10x18x16xf32, #tpu.memory_space<vmem>>) attributes {dimension_semantics = [#tpu.dimension_semantics<parallel>, #tpu.dimension_semantics<parallel>], iteration_bounds = array<i64: 2, 2>, scalar_prefetch = 0 : i64, scratch_operands = 1 : i64, tpu.core_type = #tpu.core_type<tc>, window_params = [{transform_indices = @transform_0, window_bounds = array<i64: 1, 1, 12, 18, 12>}, {pipeline_mode = #tpu.pipeline_mode<synchronous>, transform_indices = @transform_1, window_bounds = array<i64: 3, 12, 16>}, {pipeline_mode = #tpu.pipeline_mode<synchronous>, transform_indices = @transform_2, window_bounds = array<i64: 1, 16>}, {pipeline_mode = #tpu.pipeline_mode<synchronous>, transform_indices = @transform_3, window_bounds = array<i64: 3, 3, 16, 4>}, {pipeline_mode = #tpu.pipeline_mode<synchronous>, transform_indices = @transform_4, window_bounds = array<i64: 1, 4>}, {transform_indices = @transform_5, window_bounds = array<i64: 1, 128, 4>}]} {
    %c0 = arith.constant 0 : index
    %c0_0 = arith.constant 0 : index
    %c0_1 = arith.constant 0 : index
    %c0_2 = arith.constant 0 : index
    %c0_3 = arith.constant 0 : index
    %0 = vector.load %arg2[%c0, %c0_0, %c0_1, %c0_2, %c0_3] : memref<1x1x12x18x12xf32, #tpu.memory_space<vmem>>, vector<1x1x12x18x12xf32>
    %1 = vector.shape_cast %0 : vector<1x1x12x18x12xf32> to vector<12x18x12xf32>
    %cst = arith.constant 0.000000e+00 : f32
    %2 = vector.broadcast %cst : f32 to vector<180x16xf32>
    %3 = vector.extract_strided_slice %1 {offsets = [0, 0, 0], sizes = [10, 18, 12], strides = [1, 1, 1]} : vector<12x18x12xf32> to vector<10x18x12xf32>
    %4 = vector.shape_cast %3 : vector<10x18x12xf32> to vector<180x12xf32>
    %5 = arith.truncf %4 : vector<180x12xf32> to vector<180x12xbf16>
    %c0_4 = arith.constant 0 : index
    %c0_5 = arith.constant 0 : index
    %c0_6 = arith.constant 0 : index
    %6 = vector.load %arg3[%c0_4, %c0_5, %c0_6] : memref<3x12x16xbf16, #tpu.memory_space<vmem>>, vector<1x12x16xbf16>
    %7 = vector.shape_cast %6 : vector<1x12x16xbf16> to vector<12x16xbf16>
    %cst_7 = arith.constant dense<0.000000e+00> : vector<180x16xf32>
    %8 = tpu.matmul %5, %7, %cst_7 {dimension_numbers = #tpu.dot_dimension_numbers<[1], [0], [0], [1], [0, 0, 1, 1], [], []>} : vector<180x12xbf16>, vector<12x16xbf16>, vector<180x16xf32> -> vector<180x16xf32>
    %9 = arith.addf %2, %8 : vector<180x16xf32>
    %10 = vector.extract_strided_slice %1 {offsets = [1, 0, 0], sizes = [10, 18, 12], strides = [1, 1, 1]} : vector<12x18x12xf32> to vector<10x18x12xf32>
    %11 = vector.shape_cast %10 : vector<10x18x12xf32> to vector<180x12xf32>
    %12 = arith.truncf %11 : vector<180x12xf32> to vector<180x12xbf16>
    %c1 = arith.constant 1 : index
    %c0_8 = arith.constant 0 : index
    %c0_9 = arith.constant 0 : index
    %13 = vector.load %arg3[%c1, %c0_8, %c0_9] : memref<3x12x16xbf16, #tpu.memory_space<vmem>>, vector<1x12x16xbf16>
    %14 = vector.shape_cast %13 : vector<1x12x16xbf16> to vector<12x16xbf16>
    %cst_10 = arith.constant dense<0.000000e+00> : vector<180x16xf32>
    %15 = tpu.matmul %12, %14, %cst_10 {dimension_numbers = #tpu.dot_dimension_numbers<[1], [0], [0], [1], [0, 0, 1, 1], [], []>} : vector<180x12xbf16>, vector<12x16xbf16>, vector<180x16xf32> -> vector<180x16xf32>
    %16 = arith.addf %9, %15 : vector<180x16xf32>
    %17 = vector.extract_strided_slice %1 {offsets = [2, 0, 0], sizes = [10, 18, 12], strides = [1, 1, 1]} : vector<12x18x12xf32> to vector<10x18x12xf32>
    %18 = vector.shape_cast %17 : vector<10x18x12xf32> to vector<180x12xf32>
    %19 = arith.truncf %18 : vector<180x12xf32> to vector<180x12xbf16>
    %c2 = arith.constant 2 : index
    %c0_11 = arith.constant 0 : index
    %c0_12 = arith.constant 0 : index
    %20 = vector.load %arg3[%c2, %c0_11, %c0_12] : memref<3x12x16xbf16, #tpu.memory_space<vmem>>, vector<1x12x16xbf16>
    %21 = vector.shape_cast %20 : vector<1x12x16xbf16> to vector<12x16xbf16>
    %cst_13 = arith.constant dense<0.000000e+00> : vector<180x16xf32>
    %22 = tpu.matmul %19, %21, %cst_13 {dimension_numbers = #tpu.dot_dimension_numbers<[1], [0], [0], [1], [0, 0, 1, 1], [], []>} : vector<180x12xbf16>, vector<12x16xbf16>, vector<180x16xf32> -> vector<180x16xf32>
    %23 = arith.addf %16, %22 : vector<180x16xf32>
    %c0_14 = arith.constant 0 : index
    %c0_15 = arith.constant 0 : index
    %24 = vector.load %arg4[%c0_14, %c0_15] : memref<1x16xf32, #tpu.memory_space<vmem>>, vector<1x16xf32>
    %25 = vector.broadcast %24 : vector<1x16xf32> to vector<180x16xf32>
    %26 = arith.addf %23, %25 : vector<180x16xf32>
    %cst_16 = arith.constant 0.000000e+00 : f32
    %27 = vector.broadcast %cst_16 : f32 to vector<180x16xf32>
    %28 = arith.maximumf %26, %27 : vector<180x16xf32>
    %29 = vector.shape_cast %28 : vector<180x16xf32> to vector<10x18x16xf32>
    %c0_17 = arith.constant 0 : index
    %c0_18 = arith.constant 0 : index
    %c0_19 = arith.constant 0 : index
    %30 = vector.load %arg8[%c0_17, %c0_18, %c0_19] : memref<10x18x16xf32, #tpu.memory_space<vmem>>, vector<10x18x16xf32>
    tpu.vector_store %arg8[%c0_17, %c0_18, %c0_19], %29 {strides = array<i32>} : memref<10x18x16xf32, #tpu.memory_space<vmem>>, vector<10x18x16xf32>,
    %cst_20 = arith.constant 0.000000e+00 : f32
    %31 = vector.broadcast %cst_20 : f32 to vector<10x1x16xf32>
    %c0_21 = arith.constant 0 : index
    %c0_22 = arith.constant 0 : index
    %c0_23 = arith.constant 0 : index
    %32 = vector.load %arg8[%c0_21, %c0_22, %c0_23] : memref<10x18x16xf32, #tpu.memory_space<vmem>>, vector<10x1x16xf32>
    tpu.vector_store %arg8[%c0_21, %c0_22, %c0_23], %31 {strides = array<i32>} : memref<10x18x16xf32, #tpu.memory_space<vmem>>, vector<10x1x16xf32>,
    %c0_24 = arith.constant 0 : index
    %c17 = arith.constant 17 : index
    %c0_25 = arith.constant 0 : index
    %33 = vector.load %arg8[%c0_24, %c17, %c0_25] : memref<10x18x16xf32, #tpu.memory_space<vmem>>, vector<10x1x16xf32>
    tpu.vector_store %arg8[%c0_24, %c17, %c0_25], %31 {strides = array<i32>} : memref<10x18x16xf32, #tpu.memory_space<vmem>>, vector<10x1x16xf32>,
    %c0_i32 = arith.constant 0 : i32
    %34 = arith.cmpi eq, %arg1, %c0_i32 : i32
    %35 = arith.extui %34 : i1 to i32
    %c0_i32_26 = arith.constant 0 : i32
    %36 = arith.cmpi ne, %35, %c0_i32_26 : i32
    scf.if %36 {
      %cst_82 = arith.constant 0.000000e+00 : f32
      %114 = vector.broadcast %cst_82 : f32 to vector<1x18x16xf32>
      %c0_83 = arith.constant 0 : index
      %c0_84 = arith.constant 0 : index
      %c0_85 = arith.constant 0 : index
      %115 = vector.load %arg8[%c0_83, %c0_84, %c0_85] : memref<10x18x16xf32, #tpu.memory_space<vmem>>, vector<1x18x16xf32>
      tpu.vector_store %arg8[%c0_83, %c0_84, %c0_85], %114 {strides = array<i32>} : memref<10x18x16xf32, #tpu.memory_space<vmem>>, vector<1x18x16xf32>,
    } else {
    }
    %c1_i32 = arith.constant 1 : i32
    %37 = arith.cmpi eq, %arg1, %c1_i32 : i32
    %38 = arith.extui %37 : i1 to i32
    %c0_i32_27 = arith.constant 0 : i32
    %39 = arith.cmpi ne, %38, %c0_i32_27 : i32
    scf.if %39 {
      %cst_82 = arith.constant 0.000000e+00 : f32
      %114 = vector.broadcast %cst_82 : f32 to vector<1x18x16xf32>
      %c9 = arith.constant 9 : index
      %c0_83 = arith.constant 0 : index
      %c0_84 = arith.constant 0 : index
      %115 = vector.load %arg8[%c9, %c0_83, %c0_84] : memref<10x18x16xf32, #tpu.memory_space<vmem>>, vector<1x18x16xf32>
      tpu.vector_store %arg8[%c9, %c0_83, %c0_84], %114 {strides = array<i32>} : memref<10x18x16xf32, #tpu.memory_space<vmem>>, vector<1x18x16xf32>,
    } else {
    }
    %c0_28 = arith.constant 0 : index
    %c0_29 = arith.constant 0 : index
    %c0_30 = arith.constant 0 : index
    %40 = vector.load %arg8[%c0_28, %c0_29, %c0_30] : memref<10x18x16xf32, #tpu.memory_space<vmem>>, vector<10x18x16xf32>
    %cst_31 = arith.constant 0.000000e+00 : f32
    %41 = vector.broadcast %cst_31 : f32 to vector<128x4xf32>
    %42 = vector.extract_strided_slice %40 {offsets = [0, 0, 0], sizes = [8, 16, 16], strides = [1, 1, 1]} : vector<10x18x16xf32> to vector<8x16x16xf32>
    %43 = vector.shape_cast %42 : vector<8x16x16xf32> to vector<128x16xf32>
    %44 = arith.truncf %43 : vector<128x16xf32> to vector<128x16xbf16>
    %c0_32 = arith.constant 0 : index
    %c0_33 = arith.constant 0 : index
    %c0_34 = arith.constant 0 : index
    %c0_35 = arith.constant 0 : index
    %45 = vector.load %arg5[%c0_32, %c0_33, %c0_34, %c0_35] : memref<3x3x16x4xbf16, #tpu.memory_space<vmem>>, vector<1x1x16x4xbf16>
    %46 = vector.shape_cast %45 : vector<1x1x16x4xbf16> to vector<16x4xbf16>
    %cst_36 = arith.constant dense<0.000000e+00> : vector<128x4xf32>
    %47 = tpu.matmul %44, %46, %cst_36 {dimension_numbers = #tpu.dot_dimension_numbers<[1], [0], [0], [1], [0, 0, 1, 1], [], []>} : vector<128x16xbf16>, vector<16x4xbf16>, vector<128x4xf32> -> vector<128x4xf32>
    %48 = arith.addf %41, %47 : vector<128x4xf32>
    %49 = vector.extract_strided_slice %40 {offsets = [0, 1, 0], sizes = [8, 16, 16], strides = [1, 1, 1]} : vector<10x18x16xf32> to vector<8x16x16xf32>
    %50 = vector.shape_cast %49 : vector<8x16x16xf32> to vector<128x16xf32>
    %51 = arith.truncf %50 : vector<128x16xf32> to vector<128x16xbf16>
    %c0_37 = arith.constant 0 : index
    %c1_38 = arith.constant 1 : index
    %c0_39 = arith.constant 0 : index
    %c0_40 = arith.constant 0 : index
    %52 = vector.load %arg5[%c0_37, %c1_38, %c0_39, %c0_40] : memref<3x3x16x4xbf16, #tpu.memory_space<vmem>>, vector<1x1x16x4xbf16>
    %53 = vector.shape_cast %52 : vector<1x1x16x4xbf16> to vector<16x4xbf16>
    %cst_41 = arith.constant dense<0.000000e+00> : vector<128x4xf32>
    %54 = tpu.matmul %51, %53, %cst_41 {dimension_numbers = #tpu.dot_dimension_numbers<[1], [0], [0], [1], [0, 0, 1, 1], [], []>} : vector<128x16xbf16>, vector<16x4xbf16>, vector<128x4xf32> -> vector<128x4xf32>
    %55 = arith.addf %48, %54 : vector<128x4xf32>
    %56 = vector.extract_strided_slice %40 {offsets = [0, 2, 0], sizes = [8, 16, 16], strides = [1, 1, 1]} : vector<10x18x16xf32> to vector<8x16x16xf32>
    %57 = vector.shape_cast %56 : vector<8x16x16xf32> to vector<128x16xf32>
    %58 = arith.truncf %57 : vector<128x16xf32> to vector<128x16xbf16>
    %c0_42 = arith.constant 0 : index
    %c2_43 = arith.constant 2 : index
    %c0_44 = arith.constant 0 : index
    %c0_45 = arith.constant 0 : index
    %59 = vector.load %arg5[%c0_42, %c2_43, %c0_44, %c0_45] : memref<3x3x16x4xbf16, #tpu.memory_space<vmem>>, vector<1x1x16x4xbf16>
    %60 = vector.shape_cast %59 : vector<1x1x16x4xbf16> to vector<16x4xbf16>
    %cst_46 = arith.constant dense<0.000000e+00> : vector<128x4xf32>
    %61 = tpu.matmul %58, %60, %cst_46 {dimension_numbers = #tpu.dot_dimension_numbers<[1], [0], [0], [1], [0, 0, 1, 1], [], []>} : vector<128x16xbf16>, vector<16x4xbf16>, vector<128x4xf32> -> vector<128x4xf32>
    %62 = arith.addf %55, %61 : vector<128x4xf32>
    %63 = vector.extract_strided_slice %40 {offsets = [1, 0, 0], sizes = [8, 16, 16], strides = [1, 1, 1]} : vector<10x18x16xf32> to vector<8x16x16xf32>
    %64 = vector.shape_cast %63 : vector<8x16x16xf32> to vector<128x16xf32>
    %65 = arith.truncf %64 : vector<128x16xf32> to vector<128x16xbf16>
    %c1_47 = arith.constant 1 : index
    %c0_48 = arith.constant 0 : index
    %c0_49 = arith.constant 0 : index
    %c0_50 = arith.constant 0 : index
    %66 = vector.load %arg5[%c1_47, %c0_48, %c0_49, %c0_50] : memref<3x3x16x4xbf16, #tpu.memory_space<vmem>>, vector<1x1x16x4xbf16>
    %67 = vector.shape_cast %66 : vector<1x1x16x4xbf16> to vector<16x4xbf16>
    %cst_51 = arith.constant dense<0.000000e+00> : vector<128x4xf32>
    %68 = tpu.matmul %65, %67, %cst_51 {dimension_numbers = #tpu.dot_dimension_numbers<[1], [0], [0], [1], [0, 0, 1, 1], [], []>} : vector<128x16xbf16>, vector<16x4xbf16>, vector<128x4xf32> -> vector<128x4xf32>
    %69 = arith.addf %62, %68 : vector<128x4xf32>
    %70 = vector.extract_strided_slice %40 {offsets = [1, 1, 0], sizes = [8, 16, 16], strides = [1, 1, 1]} : vector<10x18x16xf32> to vector<8x16x16xf32>
    %71 = vector.shape_cast %70 : vector<8x16x16xf32> to vector<128x16xf32>
    %72 = arith.truncf %71 : vector<128x16xf32> to vector<128x16xbf16>
    %c1_52 = arith.constant 1 : index
    %c1_53 = arith.constant 1 : index
    %c0_54 = arith.constant 0 : index
    %c0_55 = arith.constant 0 : index
    %73 = vector.load %arg5[%c1_52, %c1_53, %c0_54, %c0_55] : memref<3x3x16x4xbf16, #tpu.memory_space<vmem>>, vector<1x1x16x4xbf16>
    %74 = vector.shape_cast %73 : vector<1x1x16x4xbf16> to vector<16x4xbf16>
    %cst_56 = arith.constant dense<0.000000e+00> : vector<128x4xf32>
    %75 = tpu.matmul %72, %74, %cst_56 {dimension_numbers = #tpu.dot_dimension_numbers<[1], [0], [0], [1], [0, 0, 1, 1], [], []>} : vector<128x16xbf16>, vector<16x4xbf16>, vector<128x4xf32> -> vector<128x4xf32>
    %76 = arith.addf %69, %75 : vector<128x4xf32>
    %77 = vector.extract_strided_slice %40 {offsets = [1, 2, 0], sizes = [8, 16, 16], strides = [1, 1, 1]} : vector<10x18x16xf32> to vector<8x16x16xf32>
    %78 = vector.shape_cast %77 : vector<8x16x16xf32> to vector<128x16xf32>
    %79 = arith.truncf %78 : vector<128x16xf32> to vector<128x16xbf16>
    %c1_57 = arith.constant 1 : index
    %c2_58 = arith.constant 2 : index
    %c0_59 = arith.constant 0 : index
    %c0_60 = arith.constant 0 : index
    %80 = vector.load %arg5[%c1_57, %c2_58, %c0_59, %c0_60] : memref<3x3x16x4xbf16, #tpu.memory_space<vmem>>, vector<1x1x16x4xbf16>
    %81 = vector.shape_cast %80 : vector<1x1x16x4xbf16> to vector<16x4xbf16>
    %cst_61 = arith.constant dense<0.000000e+00> : vector<128x4xf32>
    %82 = tpu.matmul %79, %81, %cst_61 {dimension_numbers = #tpu.dot_dimension_numbers<[1], [0], [0], [1], [0, 0, 1, 1], [], []>} : vector<128x16xbf16>, vector<16x4xbf16>, vector<128x4xf32> -> vector<128x4xf32>
    %83 = arith.addf %76, %82 : vector<128x4xf32>
    %84 = vector.extract_strided_slice %40 {offsets = [2, 0, 0], sizes = [8, 16, 16], strides = [1, 1, 1]} : vector<10x18x16xf32> to vector<8x16x16xf32>
    %85 = vector.shape_cast %84 : vector<8x16x16xf32> to vector<128x16xf32>
    %86 = arith.truncf %85 : vector<128x16xf32> to vector<128x16xbf16>
    %c2_62 = arith.constant 2 : index
    %c0_63 = arith.constant 0 : index
    %c0_64 = arith.constant 0 : index
    %c0_65 = arith.constant 0 : index
    %87 = vector.load %arg5[%c2_62, %c0_63, %c0_64, %c0_65] : memref<3x3x16x4xbf16, #tpu.memory_space<vmem>>, vector<1x1x16x4xbf16>
    %88 = vector.shape_cast %87 : vector<1x1x16x4xbf16> to vector<16x4xbf16>
    %cst_66 = arith.constant dense<0.000000e+00> : vector<128x4xf32>
    %89 = tpu.matmul %86, %88, %cst_66 {dimension_numbers = #tpu.dot_dimension_numbers<[1], [0], [0], [1], [0, 0, 1, 1], [], []>} : vector<128x16xbf16>, vector<16x4xbf16>, vector<128x4xf32> -> vector<128x4xf32>
    %90 = arith.addf %83, %89 : vector<128x4xf32>
    %91 = vector.extract_strided_slice %40 {offsets = [2, 1, 0], sizes = [8, 16, 16], strides = [1, 1, 1]} : vector<10x18x16xf32> to vector<8x16x16xf32>
    %92 = vector.shape_cast %91 : vector<8x16x16xf32> to vector<128x16xf32>
    %93 = arith.truncf %92 : vector<128x16xf32> to vector<128x16xbf16>
    %c2_67 = arith.constant 2 : index
    %c1_68 = arith.constant 1 : index
    %c0_69 = arith.constant 0 : index
    %c0_70 = arith.constant 0 : index
    %94 = vector.load %arg5[%c2_67, %c1_68, %c0_69, %c0_70] : memref<3x3x16x4xbf16, #tpu.memory_space<vmem>>, vector<1x1x16x4xbf16>
    %95 = vector.shape_cast %94 : vector<1x1x16x4xbf16> to vector<16x4xbf16>
    %cst_71 = arith.constant dense<0.000000e+00> : vector<128x4xf32>
    %96 = tpu.matmul %93, %95, %cst_71 {dimension_numbers = #tpu.dot_dimension_numbers<[1], [0], [0], [1], [0, 0, 1, 1], [], []>} : vector<128x16xbf16>, vector<16x4xbf16>, vector<128x4xf32> -> vector<128x4xf32>
    %97 = arith.addf %90, %96 : vector<128x4xf32>
    %98 = vector.extract_strided_slice %40 {offsets = [2, 2, 0], sizes = [8, 16, 16], strides = [1, 1, 1]} : vector<10x18x16xf32> to vector<8x16x16xf32>
    %99 = vector.shape_cast %98 : vector<8x16x16xf32> to vector<128x16xf32>
    %100 = arith.truncf %99 : vector<128x16xf32> to vector<128x16xbf16>
    %c2_72 = arith.constant 2 : index
    %c2_73 = arith.constant 2 : index
    %c0_74 = arith.constant 0 : index
    %c0_75 = arith.constant 0 : index
    %101 = vector.load %arg5[%c2_72, %c2_73, %c0_74, %c0_75] : memref<3x3x16x4xbf16, #tpu.memory_space<vmem>>, vector<1x1x16x4xbf16>
    %102 = vector.shape_cast %101 : vector<1x1x16x4xbf16> to vector<16x4xbf16>
    %cst_76 = arith.constant dense<0.000000e+00> : vector<128x4xf32>
    %103 = tpu.matmul %100, %102, %cst_76 {dimension_numbers = #tpu.dot_dimension_numbers<[1], [0], [0], [1], [0, 0, 1, 1], [], []>} : vector<128x16xbf16>, vector<16x4xbf16>, vector<128x4xf32> -> vector<128x4xf32>
    %104 = arith.addf %97, %103 : vector<128x4xf32>
    %c0_77 = arith.constant 0 : index
    %c0_78 = arith.constant 0 : index
    %105 = vector.load %arg6[%c0_77, %c0_78] : memref<1x4xf32, #tpu.memory_space<vmem>>, vector<1x4xf32>
    %106 = vector.broadcast %105 : vector<1x4xf32> to vector<128x4xf32>
    %107 = arith.addf %104, %106 : vector<128x4xf32>
    %108 = vector.extract_strided_slice %1 {offsets = [2, 2, 0], sizes = [8, 16, 4], strides = [1, 1, 1]} : vector<12x18x12xf32> to vector<8x16x4xf32>
    %109 = vector.shape_cast %108 : vector<8x16x4xf32> to vector<128x4xf32>
    %110 = arith.addf %109, %107 : vector<128x4xf32>
    %c0_79 = arith.constant 0 : index
    %c0_80 = arith.constant 0 : index
    %c0_81 = arith.constant 0 : index
    %111 = vector.load %arg7[%c0_79, %c0_80, %c0_81] : memref<1x128x4xf32, #tpu.memory_space<vmem>>, vector<1x128x4xf32>
    %112 = vector.shape_cast %111 : vector<1x128x4xf32> to vector<128x4xf32>
    %113 = vector.shape_cast %110 : vector<128x4xf32> to vector<1x128x4xf32>
    tpu.vector_store %arg7[%c0_79, %c0_80, %c0_81], %113 {strides = array<i32>} : memref<1x128x4xf32, #tpu.memory_space<vmem>>, vector<1x128x4xf32>,
    return
  }
  func.func @transform_0(%arg0: i32, %arg1: i32) -> (i32, i32, i32, i32, i32) {
    %c0_i32 = arith.constant 0 : i32
    %c0_i32_0 = arith.constant 0 : i32
    %c0_i32_1 = arith.constant 0 : i32
    %c0_i32_2 = arith.constant 0 : i32
    return %arg0, %arg1, %c0_i32, %c0_i32_0, %c0_i32_1 : i32, i32, i32, i32, i32
  }
  func.func @transform_1(%arg0: i32, %arg1: i32) -> (i32, i32, i32) {
    %c0_i32 = arith.constant 0 : i32
    %c0_i32_0 = arith.constant 0 : i32
    %c0_i32_1 = arith.constant 0 : i32
    %c0_i32_2 = arith.constant 0 : i32
    return %c0_i32, %c0_i32_0, %c0_i32_1 : i32, i32, i32
  }
  func.func @transform_2(%arg0: i32, %arg1: i32) -> (i32, i32) {
    %c0_i32 = arith.constant 0 : i32
    %c0_i32_0 = arith.constant 0 : i32
    %c0_i32_1 = arith.constant 0 : i32
    return %c0_i32, %c0_i32_0 : i32, i32
  }
  func.func @transform_3(%arg0: i32, %arg1: i32) -> (i32, i32, i32, i32) {
    %c0_i32 = arith.constant 0 : i32
    %c0_i32_0 = arith.constant 0 : i32
    %c0_i32_1 = arith.constant 0 : i32
    %c0_i32_2 = arith.constant 0 : i32
    %c0_i32_3 = arith.constant 0 : i32
    return %c0_i32, %c0_i32_0, %c0_i32_1, %c0_i32_2 : i32, i32, i32, i32
  }
  func.func @transform_4(%arg0: i32, %arg1: i32) -> (i32, i32) {
    %c0_i32 = arith.constant 0 : i32
    %c0_i32_0 = arith.constant 0 : i32
    %c0_i32_1 = arith.constant 0 : i32
    return %c0_i32, %c0_i32_0 : i32, i32
  }
  func.func @transform_5(%arg0: i32, %arg1: i32) -> (i32, i32, i32) {
    %c0_i32 = arith.constant 0 : i32
    %c0_i32_0 = arith.constant 0 : i32
    return %arg0, %arg1, %c0_i32 : i32, i32, i32
  }
}

</mosaic_0001>

<llo_original>
// kernel: tpu_custom_call.1
$region0: #{tpu_custom_call.1}
  #allocation0 [shape = 'u32[]', space=smem, size = 0x4, offset = 0x4, fixed_abs, tag = 'smem constant byte address 0x4 - core index']
  #allocation1 [shape = 'u32[144,128]{1,0:T(1,128)}', space=vmem, size = 0x12000, scoped, tag = 'internal scratch']
  #allocation2 [shape = 'f32[10,18,16]{2,1,0:T(8,128)}', space=vmem, size = 0x1e000, scoped, tag = 'scratch operand']
  %s0 = inlined_call_operand.vmem [shape: f32[2,2,12,18,12], index: 0, kind: input, shape index: {}]
  %s1 = inlined_call_operand.vmem [shape: bf16[3,12,16], index: 1, kind: input, shape index: {}]
  %s2 = inlined_call_operand.vmem [shape: f32[1,16], index: 2, kind: input, shape index: {}]
  %s3 = inlined_call_operand.vmem [shape: bf16[3,3,16,4], index: 3, kind: input, shape index: {}]
  %s4 = inlined_call_operand.vmem [shape: f32[1,4], index: 4, kind: input, shape index: {}]
  %s5 = inlined_call_operand.vmem [shape: f32[2,256,4], index: 5, kind: output, shape index: {}]
  %s6 = sld [smem:[#allocation0]]
  $region61: #{tpu_custom_call.1} parent=0
    _
  %s8 = ssub.s32 1, %s6
  %s9 = scalar_select 0, %s8, %s6
  loop: start=0, step=1, limit=6
  $region2: #{tpu_custom_call.1} parent=0 // loop_pre_header
    _
  $region3: #{tpu_custom_call.1} parent=0 // loop_header
    %s11 = sphi 0, %s15
    %p12 = scmp.ge.s32.totalorder %s11, 6
    %s18 = sphi 0, %s30
    %s19 = sphi 0, %s26
    %s20 = sphi 0, %s18
    %s21 = sphi 0, %s19
    %s22 = sphi 0, %s20
    %s23 = sphi 0, %s21
    %s35 = sphi 0, %s37
    %s38 = sphi 0, %s35
    %s39 = sphi 0, %s38
    %s55 = sphi 0, %s39
    %s59 = sphi 0, %s59
    %s61 = sphi 0, %s59
    %s62 = sphi 0, %s61
    %s76 = sphi 0, %s62
    %s80 = sphi 0, %s80
    %s82 = sphi 0, %s80
    %s83 = sphi 0, %s82
    %s97 = sphi 0, %s83
    %s101 = sphi 0, %s101
    %s103 = sphi 0, %s101
    %s104 = sphi 0, %s103
    %s118 = sphi 0, %s104
    %s122 = sphi 0, %s122
    %s124 = sphi 0, %s122
    %s125 = sphi 0, %s124
    %s139 = sphi 0, %s125
    %s147 = sphi 0, %s149
    %s150 = sphi 0, %s147
    %s151 = sphi 0, %s150
    %s167 = sphi 0, %s151
  $region4: #{tpu_custom_call.1} parent=0 // loop_header_branch
    %14 = sbr.rel (%p12) target = $region8
  $region5: #{tpu_custom_call.1} parent=0 // loop_body
    %s16 = ssub.s32 %s11, 1
    %s17 = ssub.s32 %s11, 2
    %s24 = sadd.s32 1, %s19
    %p25 = scmp.ge.s32.totalorder %s24, 2
    %s26 = scalar_select %p25, 0, %s24
    %s27 = sadd.s32 1, %s18
    %s28 = scalar_select %p25, %s27, %s18
    %p29 = scmp.ge.s32.totalorder %s28, 2
    %s30 = scalar_select %p29, 0, %s28
    %s31 = ssub.s32 %s18, %s30
    %s32 = ssub.s32 %s19, %s26
    %s33 = sor.u32 %s31, %s32
    %p34 = scmp.eq.s32.totalorder %s33, 0
    %s36 = sadd.s32 %s35, 1
    %s37 = scalar_select %p34, %s35, %s36
    %p40 = pneg %p34
    %p41 = scmp.eq.s32.totalorder %s11, 3
    %p42 = por %p40, %p41
    %p43 = scmp.ne.s32.totalorder %s35, %s38
    %p44 = scmp.eq.s32.totalorder %s11, 0
    %p45 = por %p43, %p44
    %p46 = scmp.ne.s32.totalorder %s35, %s38
    %p47 = scmp.eq.s32.totalorder %s16, 3
    %p48 = por %p46, %p47
    %p49 = scmp.ne.s32.totalorder %s38, %s39
    %p50 = scmp.eq.s32.totalorder %s16, 0
    %p51 = por %p49, %p50
    %p52 = scmp.ne.s32.totalorder %s38, %s39
    %p53 = scmp.eq.s32.totalorder %s17, 3
    %p54 = por %p52, %p53
    %p56 = scmp.ne.s32.totalorder %s39, %s55
    %p57 = scmp.eq.s32.totalorder %s17, 0
    %p58 = por %p56, %p57
    %s60 = sadd.s32 %s59, 1
    %p63 = scmp.eq.s32.totalorder %s11, 3
    %p64 = scmp.ne.s32.totalorder %s59, %s61
    %p65 = scmp.eq.s32.totalorder %s11, 0
    %p66 = por %p64, %p65
    %p67 = scmp.ne.s32.totalorder %s59, %s61
    %p68 = scmp.eq.s32.totalorder %s16, 3
    %p69 = por %p67, %p68
    %p70 = scmp.ne.s32.totalorder %s61, %s62
    %p71 = scmp.eq.s32.totalorder %s16, 0
    %p72 = por %p70, %p71
    %p73 = scmp.ne.s32.totalorder %s61, %s62
    %p74 = scmp.eq.s32.totalorder %s17, 3
    %p75 = por %p73, %p74
    %p77 = scmp.ne.s32.totalorder %s62, %s76
    %p78 = scmp.eq.s32.totalorder %s17, 0
    %p79 = por %p77, %p78
    %s81 = sadd.s32 %s80, 1
    %p84 = scmp.eq.s32.totalorder %s11, 3
    %p85 = scmp.ne.s32.totalorder %s80, %s82
    %p86 = scmp.eq.s32.totalorder %s11, 0
    %p87 = por %p85, %p86
    %p88 = scmp.ne.s32.totalorder %s80, %s82
    %p89 = scmp.eq.s32.totalorder %s16, 3
    %p90 = por %p88, %p89
    %p91 = scmp.ne.s32.totalorder %s82, %s83
    %p92 = scmp.eq.s32.totalorder %s16, 0
    %p93 = por %p91, %p92
    %p94 = scmp.ne.s32.totalorder %s82, %s83
    %p95 = scmp.eq.s32.totalorder %s17, 3
    %p96 = por %p94, %p95
    %p98 = scmp.ne.s32.totalorder %s83, %s97
    %p99 = scmp.eq.s32.totalorder %s17, 0
    %p100 = por %p98, %p99
    %s102 = sadd.s32 %s101, 1
    %p105 = scmp.eq.s32.totalorder %s11, 3
    %p106 = scmp.ne.s32.totalorder %s101, %s103
    %p107 = scmp.eq.s32.totalorder %s11, 0
    %p108 = por %p106, %p107
    %p109 = scmp.ne.s32.totalorder %s101, %s103
    %p110 = scmp.eq.s32.totalorder %s16, 3
    %p111 = por %p109, %p110
    %p112 = scmp.ne.s32.totalorder %s103, %s104
    %p113 = scmp.eq.s32.totalorder %s16, 0
    %p114 = por %p112, %p113
    %p115 = scmp.ne.s32.totalorder %s103, %s104
    %p116 = scmp.eq.s32.totalorder %s17, 3
    %p117 = por %p115, %p116
    %p119 = scmp.ne.s32.totalorder %s104, %s118
    %p120 = scmp.eq.s32.totalorder %s17, 0
    %p121 = por %p119, %p120
    %s123 = sadd.s32 %s122, 1
    %p126 = scmp.eq.s32.totalorder %s11, 3
    %p127 = scmp.ne.s32.totalorder %s122, %s124
    %p128 = scmp.eq.s32.totalorder %s11, 0
    %p129 = por %p127, %p128
    %p130 = scmp.ne.s32.totalorder %s122, %s124
    %p131 = scmp.eq.s32.totalorder %s16, 3
    %p132 = por %p130, %p131
    %p133 = scmp.ne.s32.totalorder %s124, %s125
    %p134 = scmp.eq.s32.totalorder %s16, 0
    %p135 = por %p133, %p134
    %p136 = scmp.ne.s32.totalorder %s124, %s125
    %p137 = scmp.eq.s32.totalorder %s17, 3
    %p138 = por %p136, %p137
    %p140 = scmp.ne.s32.totalorder %s125, %s139
    %p141 = scmp.eq.s32.totalorder %s17, 0
    %p142 = por %p140, %p141
    %s143 = ssub.s32 %s18, %s30
    %s144 = ssub.s32 %s19, %s26
    %s145 = sor.u32 %s143, %s144
    %p146 = scmp.eq.s32.totalorder %s145, 0
    %s148 = sadd.s32 %s147, 1
    %s149 = scalar_select %p146, %s147, %s148
    %p152 = pneg %p146
    %p153 = scmp.eq.s32.totalorder %s11, 3
    %p154 = por %p152, %p153
    %p155 = scmp.ne.s32.totalorder %s147, %s150
    %p156 = scmp.eq.s32.totalorder %s11, 0
    %p157 = por %p155, %p156
    %p158 = scmp.ne.s32.totalorder %s147, %s150
    %p159 = scmp.eq.s32.totalorder %s16, 3
    %p160 = por %p158, %p159
    %p161 = scmp.ne.s32.totalorder %s150, %s151
    %p162 = scmp.eq.s32.totalorder %s16, 0
    %p163 = por %p161, %p162
    %p164 = scmp.ne.s32.totalorder %s150, %s151
    %p165 = scmp.eq.s32.totalorder %s17, 3
    %p166 = por %p164, %p165
    %p168 = scmp.ne.s32.totalorder %s151, %s167
    %p169 = scmp.eq.s32.totalorder %s17, 0
    %p170 = por %p168, %p169
    %p171 = scmp.le.s32.totalorder 1, %s11
    %p172 = scmp.lt.s32.totalorder %s11, 5
    %p173 = pnand %p171, %p172
    %p174 = pneg %p173
    // Predicated region
    $region9: #{tpu_custom_call.1} parent=5 // pred_check
      _
    $region10: #{tpu_custom_call.1} parent=5 // pred_check_branch
      %176 = sbr.rel (%p173) target = $region12
    $region11: #{tpu_custom_call.1} parent=5 // pred_region
      %s177 = ssub.s32 %s11, 1
      // Predicated region
      $region13: #{tpu_custom_call.1} parent=11 // pred_check
        %p178 = pneg %p72
      $region14: #{tpu_custom_call.1} parent=11 // pred_check_branch
        %180 = sbr.rel (%p178) target = $region16
      $region15: #{tpu_custom_call.1} parent=11 // pred_region
        _
      $region16: #{tpu_custom_call.1} parent=11 // pred_fallthru
        _
      // Predicated region
      $region17: #{tpu_custom_call.1} parent=11 // pred_check
        %p181 = pneg %p93
      $region18: #{tpu_custom_call.1} parent=11 // pred_check_branch
        %183 = sbr.rel (%p181) target = $region20
      $region19: #{tpu_custom_call.1} parent=11 // pred_region
        _
      $region20: #{tpu_custom_call.1} parent=11 // pred_fallthru
        _
      // Predicated region
      $region21: #{tpu_custom_call.1} parent=11 // pred_check
        %p184 = pneg %p114
      $region22: #{tpu_custom_call.1} parent=11 // pred_check_branch
        %186 = sbr.rel (%p184) target = $region24
      $region23: #{tpu_custom_call.1} parent=11 // pred_region
        _
      $region24: #{tpu_custom_call.1} parent=11 // pred_fallthru
        _
      // Predicated region
      $region25: #{tpu_custom_call.1} parent=11 // pred_check
        %p187 = pneg %p135
      $region26: #{tpu_custom_call.1} parent=11 // pred_check_branch
        %189 = sbr.rel (%p187) target = $region28
      $region27: #{tpu_custom_call.1} parent=11 // pred_region
        _
      $region28: #{tpu_custom_call.1} parent=11 // pred_fallthru
        _
    $region12: #{tpu_custom_call.1} parent=5 // pred_fallthru
      _
    %p190 = scmp.lt.s32.totalorder %s11, 4
    // Predicated region
    $region29: #{tpu_custom_call.1} parent=5 // pred_check
      %p191 = pneg %p190
    $region30: #{tpu_custom_call.1} parent=5 // pred_check_branch
      %193 = sbr.rel (%p191) target = $region32
    $region31: #{tpu_custom_call.1} parent=5 // pred_region
      // Predicated region
      $region33: #{tpu_custom_call.1} parent=31 // pred_check
        %p194 = pneg %p45
      $region34: #{tpu_custom_call.1} parent=31 // pred_check_branch
        %196 = sbr.rel (%p194) target = $region36
      $region35: #{tpu_custom_call.1} parent=31 // pred_region
        %p197 = scmp.lt.s32.totalorder %s18, 1
        %s198 = scalar_select %p197, %s18, 1
        %p199 = scmp.lt.s32.totalorder %s19, 1
        %s200 = scalar_select %p199, %s19, 1
        %s201 = smul.addr %s200, 36
        %s202 = smul.addr %s198, 72
        %s203 = sadd.s32 %s201, %s202
        %s204 = smul.addr %s203, 8
        %s205 = scalar_lea.vmem %s0, %s204
      $region36: #{tpu_custom_call.1} parent=31 // pred_fallthru
        _
    $region32: #{tpu_custom_call.1} parent=5 // pred_fallthru
      _
    %p206 = scmp.le.s32.totalorder 1, %s11
    %p207 = scmp.lt.s32.totalorder %s11, 5
    %p208 = pnand %p206, %p207
    %p209 = pneg %p208
    // Predicated region
    $region37: #{tpu_custom_call.1} parent=5 // pred_check
      _
    $region38: #{tpu_custom_call.1} parent=5 // pred_check_branch
      %211 = sbr.rel (%p208) target = $region40
    $region39: #{tpu_custom_call.1} parent=5 // pred_region
      %s212 = ssub.s32 %s11, 1
      %p213 = scmp.lt.s32.totalorder %s20, 1
      %s214 = scalar_select %p213, %s20, 1
      %p215 = scmp.lt.s32.totalorder %s21, 1
      %s216 = scalar_select %p215, %s21, 1
      %s217 = smul.addr %s216, 36
      %s218 = smul.addr %s214, 72
      %s219 = sadd.s32 %s217, %s218
      %s220 = smul.addr %s219, 8
      %s221 = scalar_lea.vmem %s0, %s220
      %p222 = pneg %p51
      %p223 = pneg %p48
      %p224 = pneg %p72
      %p225 = pneg %p69
      %p226 = pneg %p93
      %p227 = pneg %p90
      %p228 = pneg %p114
      %p229 = pneg %p111
      %p230 = pneg %p135
      %p231 = pneg %p132
      %p232 = pneg %p163
      %p233 = pneg %p160
      %s234 = smul.u32 16, %s21
      %p235 = scmp.lt.s32.totalorder %s20, 1
      %s236 = scalar_select %p235, %s20, 1
      %p237 = scmp.lt.s32.totalorder %s234, 31
      %s238 = scalar_select %p237, %s234, 31
      %s239 = smul.addr %s236, 32
      %s240 = sadd.s32 %s238, %s239
      %s241 = smul.addr %s240, 8
      %s242 = scalar_lea.vmem %s5, %s241
      %p243 = scmp.lt.s32.totalorder %s20, 1
      %s244 = scalar_select %p243, %s20, 1
      %p245 = scmp.lt.s32.totalorder %s21, 1
      %s246 = scalar_select %p245, %s21, 1
      %s247 = smul.addr %s246, 36
      %s248 = smul.addr %s244, 72
      %s249 = sadd.s32 %s247, %s248
      %s250 = smul.addr %s249, 8
      %s251 = scalar_lea.vmem %s0, %s250
      %s252 = smul.u32 16, %s21
      %p253 = scmp.lt.s32.totalorder %s20, 1
      %s254 = scalar_select %p253, %s20, 1
      %p255 = scmp.lt.s32.totalorder %s252, 31
      %s256 = scalar_select %p255, %s252, 31
      %s257 = smul.addr %s254, 32
      %s258 = sadd.s32 %s256, %s257
      %s259 = smul.addr %s258, 8
      %s260 = scalar_lea.vmem %s5, %s259
      %s261 = smul.u32 16, %s21
      %v263 = vld [vmem:[%s251] sm:$0xff]
      %v264 = vld [vmem:[%s251 + $0x8] sm:$0xff]
      %v265 = vld [vmem:[%s251 + $0x10] sm:$0x3]
      %v266 = vld [vmem:[%s251 + $0x18] sm:$0xff]
      %v267 = vld [vmem:[%s251 + $0x20] sm:$0xff]
      %v268 = vld [vmem:[%s251 + $0x28] sm:$0x3]
      %v269 = vld [vmem:[%s251 + $0x30] sm:$0xff]
      %v270 = vld [vmem:[%s251 + $0x38] sm:$0xff]
      %v271 = vld [vmem:[%s251 + $0x40] sm:$0x3]
      %v272 = vld [vmem:[%s251 + $0x48] sm:$0xff]
      %v273 = vld [vmem:[%s251 + $0x50] sm:$0xff]
      %v274 = vld [vmem:[%s251 + $0x58] sm:$0x3]
      %v275 = vld [vmem:[%s251 + $0x60] sm:$0xff]
      %v276 = vld [vmem:[%s251 + $0x68] sm:$0xff]
      %v277 = vld [vmem:[%s251 + $0x70] sm:$0x3]
      %v278 = vld [vmem:[%s251 + $0x78] sm:$0xff]
      %v279 = vld [vmem:[%s251 + $0x80] sm:$0xff]
      %v280 = vld [vmem:[%s251 + $0x88] sm:$0x3]
      %v281 = vld [vmem:[%s251 + $0x90] sm:$0xff]
      %v282 = vld [vmem:[%s251 + $0x98] sm:$0xff]
      %v283 = vld [vmem:[%s251 + $0xa0] sm:$0x3]
      %v284 = vld [vmem:[%s251 + $0xa8] sm:$0xff]
      %v285 = vld [vmem:[%s251 + $0xb0] sm:$0xff]
      %v286 = vld [vmem:[%s251 + $0xb8] sm:$0x3]
      %v287 = vld [vmem:[%s251 + $0xc0] sm:$0xff]
      %v288 = vld [vmem:[%s251 + $0xc8] sm:$0xff]
      %v289 = vld [vmem:[%s251 + $0xd0] sm:$0x3]
      %v290 = vld [vmem:[%s251 + $0xd8] sm:$0xff]
      %v291 = vld [vmem:[%s251 + $0xe0] sm:$0xff]
      %v292 = vld [vmem:[%s251 + $0xe8] sm:$0x3]
      %v293 = vld [vmem:[%s251 + $0xf0] sm:$0xff]
      %v294 = vld [vmem:[%s251 + $0xf8] sm:$0xff]
      %v295 = vld [vmem:[%s251 + $0x100] sm:$0x3]
      %v296 = vld [vmem:[%s251 + $0x108] sm:$0xff]
      %v297 = vld [vmem:[%s251 + $0x110] sm:$0xff]
      %v298 = vld [vmem:[%s251 + $0x118] sm:$0x3]
      %v329 = vcombine.high %v263, %v263
      %v331 = vunpack.c.l.s4 1983009808
      %v332 = vunpack.c.0.s8 %v331
      %v333 = vlaneseq
      %v334 = vshrl.u32 %v333, 7
      %v335 = vsub.s32 %v332, %v334
      %v336 = vrot.slane %v263, %v335
      %v338 = vunpack.c.l.s4 1983009808
      %v339 = vunpack.c.0.s8 %v338
      %v340 = vlaneseq
      %v341 = vshrl.u32 %v340, 7
      %v342 = vsub.s32 %v339, %v341
      %v343 = vrot.slane %v329, %v342
      %v344 = vcombine.high %v336, %v336
      %v345 = vcombine.high %v343, %v343
      %v346 = vcombine.high %v264, %v264
      %v348 = vunpack.c.l.s4 1983009808
      %v349 = vunpack.c.0.s8 %v348
      %v350 = vlaneseq
      %v351 = vshrl.u32 %v350, 7
      %v352 = vsub.s32 %v349, %v351
      %v353 = vrot.slane %v264, %v352
      %v355 = vunpack.c.l.s4 1983009808
      %v356 = vunpack.c.0.s8 %v355
      %v357 = vlaneseq
      %v358 = vshrl.u32 %v357, 7
      %v359 = vsub.s32 %v356, %v358
      %v360 = vrot.slane %v346, %v359
      %v361 = vcombine.high %v353, %v353
      %v362 = vcombine.high %v360, %v360
      %v364 = vunpack.c.l.s4 1983009808
      %v365 = vunpack.c.0.s8 %v364
      %v366 = vlaneseq
      %v367 = vshrl.u32 %v366, 7
      %v368 = vsub.s32 %v365, %v367
      %v369 = vrot.slane %v265, %v368
      %v370 = vcombine.high %v266, %v266
      %v372 = vunpack.c.l.s4 1983009808
      %v373 = vunpack.c.0.s8 %v372
      %v374 = vlaneseq
      %v375 = vshrl.u32 %v374, 7
      %v376 = vsub.s32 %v373, %v375
      %v377 = vrot.slane %v266, %v376
      %v379 = vunpack.c.l.s4 1983009808
      %v380 = vunpack.c.0.s8 %v379
      %v381 = vlaneseq
      %v382 = vshrl.u32 %v381, 7
      %v383 = vsub.s32 %v380, %v382
      %v384 = vrot.slane %v370, %v383
      %v385 = vcombine.high %v377, %v377
      %v386 = vcombine.high %v384, %v384
      %v387 = vcombine.high %v267, %v267
      %v389 = vunpack.c.l.s4 1983009808
      %v390 = vunpack.c.0.s8 %v389
      %v391 = vlaneseq
      %v392 = vshrl.u32 %v391, 7
      %v393 = vsub.s32 %v390, %v392
      %v394 = vrot.slane %v267, %v393
      %v396 = vunpack.c.l.s4 1983009808
      %v397 = vunpack.c.0.s8 %v396
      %v398 = vlaneseq
      %v399 = vshrl.u32 %v398, 7
      %v400 = vsub.s32 %v397, %v399
      %v401 = vrot.slane %v387, %v400
      %v402 = vcombine.high %v394, %v394
      %v403 = vcombine.high %v401, %v401
      %v405 = vunpack.c.l.s4 1983009808
      %v406 = vunpack.c.0.s8 %v405
      %v407 = vlaneseq
      %v408 = vshrl.u32 %v407, 7
      %v409 = vsub.s32 %v406, %v408
      %v410 = vrot.slane %v268, %v409
      %v411 = vcombine.high %v269, %v269
      %v413 = vunpack.c.l.s4 1983009808
      %v414 = vunpack.c.0.s8 %v413
      %v415 = vlaneseq
      %v416 = vshrl.u32 %v415, 7
      %v417 = vsub.s32 %v414, %v416
      %v418 = vrot.slane %v269, %v417
      %v420 = vunpack.c.l.s4 1983009808
      %v421 = vunpack.c.0.s8 %v420
      %v422 = vlaneseq
      %v423 = vshrl.u32 %v422, 7
      %v424 = vsub.s32 %v421, %v423
      %v425 = vrot.slane %v411, %v424
      %v426 = vcombine.high %v418, %v418
      %v427 = vcombine.high %v425, %v425
      %v428 = vcombine.high %v270, %v270
      %v430 = vunpack.c.l.s4 1983009808
      %v431 = vunpack.c.0.s8 %v430
      %v432 = vlaneseq
      %v433 = vshrl.u32 %v432, 7
      %v434 = vsub.s32 %v431, %v433
      %v435 = vrot.slane %v270, %v434
      %v437 = vunpack.c.l.s4 1983009808
      %v438 = vunpack.c.0.s8 %v437
      %v439 = vlaneseq
      %v440 = vshrl.u32 %v439, 7
      %v441 = vsub.s32 %v438, %v440
      %v442 = vrot.slane %v428, %v441
      %v443 = vcombine.high %v435, %v435
      %v444 = vcombine.high %v442, %v442
      %v446 = vunpack.c.l.s4 1983009808
      %v447 = vunpack.c.0.s8 %v446
      %v448 = vlaneseq
      %v449 = vshrl.u32 %v448, 7
      %v450 = vsub.s32 %v447, %v449
      %v451 = vrot.slane %v271, %v450
      %v452 = vcombine.high %v272, %v272
      %v454 = vunpack.c.l.s4 1983009808
      %v455 = vunpack.c.0.s8 %v454
      %v456 = vlaneseq
      %v457 = vshrl.u32 %v456, 7
      %v458 = vsub.s32 %v455, %v457
      %v459 = vrot.slane %v272, %v458
      %v461 = vunpack.c.l.s4 1983009808
      %v462 = vunpack.c.0.s8 %v461
      %v463 = vlaneseq
      %v464 = vshrl.u32 %v463, 7
      %v465 = vsub.s32 %v462, %v464
      %v466 = vrot.slane %v452, %v465
      %v467 = vcombine.high %v459, %v459
      %v468 = vcombine.high %v466, %v466
      %v469 = vcombine.high %v273, %v273
      %v471 = vunpack.c.l.s4 1983009808
      %v472 = vunpack.c.0.s8 %v471
      %v473 = vlaneseq
      %v474 = vshrl.u32 %v473, 7
      %v475 = vsub.s32 %v472, %v474
      %v476 = vrot.slane %v273, %v475
      %v478 = vunpack.c.l.s4 1983009808
      %v479 = vunpack.c.0.s8 %v478
      %v480 = vlaneseq
      %v481 = vshrl.u32 %v480, 7
      %v482 = vsub.s32 %v479, %v481
      %v483 = vrot.slane %v469, %v482
      %v484 = vcombine.high %v476, %v476
      %v485 = vcombine.high %v483, %v483
      %v487 = vunpack.c.l.s4 1983009808
      %v488 = vunpack.c.0.s8 %v487
      %v489 = vlaneseq
      %v490 = vshrl.u32 %v489, 7
      %v491 = vsub.s32 %v488, %v490
      %v492 = vrot.slane %v274, %v491
      %v493 = vcombine.high %v275, %v275
      %v495 = vunpack.c.l.s4 1983009808
      %v496 = vunpack.c.0.s8 %v495
      %v497 = vlaneseq
      %v498 = vshrl.u32 %v497, 7
      %v499 = vsub.s32 %v496, %v498
      %v500 = vrot.slane %v275, %v499
      %v502 = vunpack.c.l.s4 1983009808
      %v503 = vunpack.c.0.s8 %v502
      %v504 = vlaneseq
      %v505 = vshrl.u32 %v504, 7
      %v506 = vsub.s32 %v503, %v505
      %v507 = vrot.slane %v493, %v506
      %v508 = vcombine.high %v500, %v500
      %v509 = vcombine.high %v507, %v507
      %v510 = vcombine.high %v276, %v276
      %v512 = vunpack.c.l.s4 1983009808
      %v513 = vunpack.c.0.s8 %v512
      %v514 = vlaneseq
      %v515 = vshrl.u32 %v514, 7
      %v516 = vsub.s32 %v513, %v515
      %v517 = vrot.slane %v276, %v516
      %v519 = vunpack.c.l.s4 1983009808
      %v520 = vunpack.c.0.s8 %v519
      %v521 = vlaneseq
      %v522 = vshrl.u32 %v521, 7
      %v523 = vsub.s32 %v520, %v522
      %v524 = vrot.slane %v510, %v523
      %v525 = vcombine.high %v517, %v517
      %v526 = vcombine.high %v524, %v524
      %v528 = vunpack.c.l.s4 1983009808
      %v529 = vunpack.c.0.s8 %v528
      %v530 = vlaneseq
      %v531 = vshrl.u32 %v530, 7
      %v532 = vsub.s32 %v529, %v531
      %v533 = vrot.slane %v277, %v532
      %v534 = vcombine.high %v278, %v278
      %v536 = vunpack.c.l.s4 1983009808
      %v537 = vunpack.c.0.s8 %v536
      %v538 = vlaneseq
      %v539 = vshrl.u32 %v538, 7
      %v540 = vsub.s32 %v537, %v539
      %v541 = vrot.slane %v278, %v540
      %v543 = vunpack.c.l.s4 1983009808
      %v544 = vunpack.c.0.s8 %v543
      %v545 = vlaneseq
      %v546 = vshrl.u32 %v545, 7
      %v547 = vsub.s32 %v544, %v546
      %v548 = vrot.slane %v534, %v547
      %v549 = vcombine.high %v541, %v541
      %v550 = vcombine.high %v548, %v548
      %v551 = vcombine.high %v279, %v279
      %v553 = vunpack.c.l.s4 1983009808
      %v554 = vunpack.c.0.s8 %v553
      %v555 = vlaneseq
      %v556 = vshrl.u32 %v555, 7
      %v557 = vsub.s32 %v554, %v556
      %v558 = vrot.slane %v279, %v557
      %v560 = vunpack.c.l.s4 1983009808
      %v561 = vunpack.c.0.s8 %v560
      %v562 = vlaneseq
      %v563 = vshrl.u32 %v562, 7
      %v564 = vsub.s32 %v561, %v563
      %v565 = vrot.slane %v551, %v564
      %v566 = vcombine.high %v558, %v558
      %v567 = vcombine.high %v565, %v565
      %v569 = vunpack.c.l.s4 1983009808
      %v570 = vunpack.c.0.s8 %v569
      %v571 = vlaneseq
      %v572 = vshrl.u32 %v571, 7
      %v573 = vsub.s32 %v570, %v572
      %v574 = vrot.slane %v280, %v573
      %v575 = vcombine.high %v281, %v281
      %v577 = vunpack.c.l.s4 1983009808
      %v578 = vunpack.c.0.s8 %v577
      %v579 = vlaneseq
      %v580 = vshrl.u32 %v579, 7
      %v581 = vsub.s32 %v578, %v580
      %v582 = vrot.slane %v281, %v581
      %v584 = vunpack.c.l.s4 1983009808
      %v585 = vunpack.c.0.s8 %v584
      %v586 = vlaneseq
      %v587 = vshrl.u32 %v586, 7
      %v588 = vsub.s32 %v585, %v587
      %v589 = vrot.slane %v575, %v588
      %v590 = vcombine.high %v582, %v582
      %v591 = vcombine.high %v589, %v589
      %v592 = vcombine.high %v282, %v282
      %v594 = vunpack.c.l.s4 1983009808
      %v595 = vunpack.c.0.s8 %v594
      %v596 = vlaneseq
      %v597 = vshrl.u32 %v596, 7
      %v598 = vsub.s32 %v595, %v597
      %v599 = vrot.slane %v282, %v598
      %v601 = vunpack.c.l.s4 1983009808
      %v602 = vunpack.c.0.s8 %v601
      %v603 = vlaneseq
      %v604 = vshrl.u32 %v603, 7
      %v605 = vsub.s32 %v602, %v604
      %v606 = vrot.slane %v592, %v605
      %v607 = vcombine.high %v599, %v599
      %v608 = vcombine.high %v606, %v606
      %v610 = vunpack.c.l.s4 1983009808
      %v611 = vunpack.c.0.s8 %v610
      %v612 = vlaneseq
      %v613 = vshrl.u32 %v612, 7
      %v614 = vsub.s32 %v611, %v613
      %v615 = vrot.slane %v283, %v614
      %v616 = vcombine.high %v284, %v284
      %v618 = vunpack.c.l.s4 1983009808
      %v619 = vunpack.c.0.s8 %v618
      %v620 = vlaneseq
      %v621 = vshrl.u32 %v620, 7
      %v622 = vsub.s32 %v619, %v621
      %v623 = vrot.slane %v284, %v622
      %v625 = vunpack.c.l.s4 1983009808
      %v626 = vunpack.c.0.s8 %v625
      %v627 = vlaneseq
      %v628 = vshrl.u32 %v627, 7
      %v629 = vsub.s32 %v626, %v628
      %v630 = vrot.slane %v616, %v629
      %v631 = vcombine.high %v623, %v623
      %v632 = vcombine.high %v630, %v630
      %v633 = vcombine.high %v285, %v285
      %v635 = vunpack.c.l.s4 1983009808
      %v636 = vunpack.c.0.s8 %v635
      %v637 = vlaneseq
      %v638 = vshrl.u32 %v637, 7
      %v639 = vsub.s32 %v636, %v638
      %v640 = vrot.slane %v285, %v639
      %v642 = vunpack.c.l.s4 1983009808
      %v643 = vunpack.c.0.s8 %v642
      %v644 = vlaneseq
      %v645 = vshrl.u32 %v644, 7
      %v646 = vsub.s32 %v643, %v645
      %v647 = vrot.slane %v633, %v646
      %v648 = vcombine.high %v640, %v640
      %v649 = vcombine.high %v647, %v647
      %v651 = vunpack.c.l.s4 1983009808
      %v652 = vunpack.c.0.s8 %v651
      %v653 = vlaneseq
      %v654 = vshrl.u32 %v653, 7
      %v655 = vsub.s32 %v652, %v654
      %v656 = vrot.slane %v286, %v655
      %v657 = vcombine.high %v287, %v287
      %v659 = vunpack.c.l.s4 1983009808
      %v660 = vunpack.c.0.s8 %v659
      %v661 = vlaneseq
      %v662 = vshrl.u32 %v661, 7
      %v663 = vsub.s32 %v660, %v662
      %v664 = vrot.slane %v287, %v663
      %v666 = vunpack.c.l.s4 1983009808
      %v667 = vunpack.c.0.s8 %v666
      %v668 = vlaneseq
      %v669 = vshrl.u32 %v668, 7
      %v670 = vsub.s32 %v667, %v669
      %v671 = vrot.slane %v657, %v670
      %v672 = vcombine.high %v664, %v664
      %v673 = vcombine.high %v671, %v671
      %v674 = vcombine.high %v288, %v288
      %v676 = vunpack.c.l.s4 1983009808
      %v677 = vunpack.c.0.s8 %v676
      %v678 = vlaneseq
      %v679 = vshrl.u32 %v678, 7
      %v680 = vsub.s32 %v677, %v679
      %v681 = vrot.slane %v288, %v680
      %v683 = vunpack.c.l.s4 1983009808
      %v684 = vunpack.c.0.s8 %v683
      %v685 = vlaneseq
      %v686 = vshrl.u32 %v685, 7
      %v687 = vsub.s32 %v684, %v686
      %v688 = vrot.slane %v674, %v687
      %v689 = vcombine.high %v681, %v681
      %v690 = vcombine.high %v688, %v688
      %v692 = vunpack.c.l.s4 1983009808
      %v693 = vunpack.c.0.s8 %v692
      %v694 = vlaneseq
      %v695 = vshrl.u32 %v694, 7
      %v696 = vsub.s32 %v693, %v695
      %v697 = vrot.slane %v289, %v696
      %v698 = vcombine.high %v290, %v290
      %v700 = vunpack.c.l.s4 1983009808
      %v701 = vunpack.c.0.s8 %v700
      %v702 = vlaneseq
      %v703 = vshrl.u32 %v702, 7
      %v704 = vsub.s32 %v701, %v703
      %v705 = vrot.slane %v290, %v704
      %v707 = vunpack.c.l.s4 1983009808
      %v708 = vunpack.c.0.s8 %v707
      %v709 = vlaneseq
      %v710 = vshrl.u32 %v709, 7
      %v711 = vsub.s32 %v708, %v710
      %v712 = vrot.slane %v698, %v711
      %v713 = vcombine.high %v705, %v705
      %v714 = vcombine.high %v712, %v712
      %v715 = vcombine.high %v291, %v291
      %v717 = vunpack.c.l.s4 1983009808
      %v718 = vunpack.c.0.s8 %v717
      %v719 = vlaneseq
      %v720 = vshrl.u32 %v719, 7
      %v721 = vsub.s32 %v718, %v720
      %v722 = vrot.slane %v291, %v721
      %v724 = vunpack.c.l.s4 1983009808
      %v725 = vunpack.c.0.s8 %v724
      %v726 = vlaneseq
      %v727 = vshrl.u32 %v726, 7
      %v728 = vsub.s32 %v725, %v727
      %v729 = vrot.slane %v715, %v728
      %v730 = vcombine.high %v722, %v722
      %v731 = vcombine.high %v729, %v729
      %v733 = vunpack.c.l.s4 1983009808
      %v734 = vunpack.c.0.s8 %v733
      %v735 = vlaneseq
      %v736 = vshrl.u32 %v735, 7
      %v737 = vsub.s32 %v734, %v736
      %v738 = vrot.slane %v292, %v737
      %v739 = vcombine.low %v336, %v344
      %v740 = vcombine.low %v343, %v345
      %v742 = vunpack.c.l.s4 1983009808
      %v743 = vunpack.c.0.s8 %v742
      %v744 = vlaneseq
      %v745 = vshrl.u32 %v744, 7
      %v746 = vsub.s32 %v743, %v745
      %v747 = vrot.slane %v739, %v746
      %v749 = vunpack.c.l.s4 1983009808
      %v750 = vunpack.c.0.s8 %v749
      %v751 = vlaneseq
      %v752 = vshrl.u32 %v751, 7
      %v753 = vsub.s32 %v750, %v752
      %v754 = vrot.slane %v740, %v753
      %v755 = vcombine.low %v747, %v754
      %v756 = vcombine.low %v353, %v361
      %v757 = vcombine.low %v360, %v362
      %v759 = vunpack.c.l.s4 1983009808
      %v760 = vunpack.c.0.s8 %v759
      %v761 = vlaneseq
      %v762 = vshrl.u32 %v761, 7
      %v763 = vsub.s32 %v760, %v762
      %v764 = vrot.slane %v756, %v763
      %v766 = vunpack.c.l.s4 1983009808
      %v767 = vunpack.c.0.s8 %v766
      %v768 = vlaneseq
      %v769 = vshrl.u32 %v768, 7
      %v770 = vsub.s32 %v767, %v769
      %v771 = vrot.slane %v757, %v770
      %v772 = vcombine.low %v764, %v771
      %v773 = vcombine.low %v369, %v377
      %v774 = vcombine.low %v385, %v384
      %v776 = vunpack.c.l.s4 1983009808
      %v777 = vunpack.c.0.s8 %v776
      %v778 = vlaneseq
      %v779 = vshrl.u32 %v778, 7
      %v780 = vsub.s32 %v777, %v779
      %v781 = vrot.slane %v773, %v780
      %v783 = vunpack.c.l.s4 1983009808
      %v784 = vunpack.c.0.s8 %v783
      %v785 = vlaneseq
      %v786 = vshrl.u32 %v785, 7
      %v787 = vsub.s32 %v784, %v786
      %v788 = vrot.slane %v774, %v787
      %v789 = vcombine.low %v781, %v788
      %v790 = vcombine.low %v386, %v394
      %v791 = vcombine.low %v402, %v401
      %v793 = vunpack.c.l.s4 1983009808
      %v794 = vunpack.c.0.s8 %v793
      %v795 = vlaneseq
      %v796 = vshrl.u32 %v795, 7
      %v797 = vsub.s32 %v794, %v796
      %v798 = vrot.slane %v790, %v797
      %v800 = vunpack.c.l.s4 1983009808
      %v801 = vunpack.c.0.s8 %v800
      %v802 = vlaneseq
      %v803 = vshrl.u32 %v802, 7
      %v804 = vsub.s32 %v801, %v803
      %v805 = vrot.slane %v791, %v804
      %v806 = vcombine.low %v798, %v805
      %v807 = vcombine.low %v403, %v410
      %v808 = vcombine.low %v418, %v426
      %v810 = vunpack.c.l.s4 1983009808
      %v811 = vunpack.c.0.s8 %v810
      %v812 = vlaneseq
      %v813 = vshrl.u32 %v812, 7
      %v814 = vsub.s32 %v811, %v813
      %v815 = vrot.slane %v807, %v814
      %v817 = vunpack.c.l.s4 1983009808
      %v818 = vunpack.c.0.s8 %v817
      %v819 = vlaneseq
      %v820 = vshrl.u32 %v819, 7
      %v821 = vsub.s32 %v818, %v820
      %v822 = vrot.slane %v808, %v821
      %v823 = vcombine.low %v815, %v822
      %v824 = vcombine.low %v425, %v427
      %v825 = vcombine.low %v435, %v443
      %v827 = vunpack.c.l.s4 1983009808
      %v828 = vunpack.c.0.s8 %v827
      %v829 = vlaneseq
      %v830 = vshrl.u32 %v829, 7
      %v831 = vsub.s32 %v828, %v830
      %v832 = vrot.slane %v824, %v831
      %v834 = vunpack.c.l.s4 1983009808
      %v835 = vunpack.c.0.s8 %v834
      %v836 = vlaneseq
      %v837 = vshrl.u32 %v836, 7
      %v838 = vsub.s32 %v835, %v837
      %v839 = vrot.slane %v825, %v838
      %v840 = vcombine.low %v832, %v839
      %v841 = vcombine.low %v442, %v444
      %v842 = vcombine.low %v451, %v459
      %v844 = vunpack.c.l.s4 1983009808
      %v845 = vunpack.c.0.s8 %v844
      %v846 = vlaneseq
      %v847 = vshrl.u32 %v846, 7
      %v848 = vsub.s32 %v845, %v847
      %v849 = vrot.slane %v841, %v848
      %v851 = vunpack.c.l.s4 1983009808
      %v852 = vunpack.c.0.s8 %v851
      %v853 = vlaneseq
      %v854 = vshrl.u32 %v853, 7
      %v855 = vsub.s32 %v852, %v854
      %v856 = vrot.slane %v842, %v855
      %v857 = vcombine.low %v849, %v856
      %v858 = vcombine.low %v467, %v466
      %v859 = vcombine.low %v468, %v476
      %v861 = vunpack.c.l.s4 1983009808
      %v862 = vunpack.c.0.s8 %v861
      %v863 = vlaneseq
      %v864 = vshrl.u32 %v863, 7
      %v865 = vsub.s32 %v862, %v864
      %v866 = vrot.slane %v858, %v865
      %v868 = vunpack.c.l.s4 1983009808
      %v869 = vunpack.c.0.s8 %v868
      %v870 = vlaneseq
      %v871 = vshrl.u32 %v870, 7
      %v872 = vsub.s32 %v869, %v871
      %v873 = vrot.slane %v859, %v872
      %v874 = vcombine.low %v866, %v873
      %v875 = vcombine.low %v484, %v483
      %v876 = vcombine.low %v485, %v492
      %v878 = vunpack.c.l.s4 1983009808
      %v879 = vunpack.c.0.s8 %v878
      %v880 = vlaneseq
      %v881 = vshrl.u32 %v880, 7
      %v882 = vsub.s32 %v879, %v881
      %v883 = vrot.slane %v875, %v882
      %v885 = vunpack.c.l.s4 1983009808
      %v886 = vunpack.c.0.s8 %v885
      %v887 = vlaneseq
      %v888 = vshrl.u32 %v887, 7
      %v889 = vsub.s32 %v886, %v888
      %v890 = vrot.slane %v876, %v889
      %v891 = vcombine.low %v883, %v890
      %v892 = vcombine.low %v500, %v508
      %v893 = vcombine.low %v507, %v509
      %v895 = vunpack.c.l.s4 1983009808
      %v896 = vunpack.c.0.s8 %v895
      %v897 = vlaneseq
      %v898 = vshrl.u32 %v897, 7
      %v899 = vsub.s32 %v896, %v898
      %v900 = vrot.slane %v892, %v899
      %v902 = vunpack.c.l.s4 1983009808
      %v903 = vunpack.c.0.s8 %v902
      %v904 = vlaneseq
      %v905 = vshrl.u32 %v904, 7
      %v906 = vsub.s32 %v903, %v905
      %v907 = vrot.slane %v893, %v906
      %v908 = vcombine.low %v900, %v907
      %v909 = vcombine.low %v517, %v525
      %v910 = vcombine.low %v524, %v526
      %v912 = vunpack.c.l.s4 1983009808
      %v913 = vunpack.c.0.s8 %v912
      %v914 = vlaneseq
      %v915 = vshrl.u32 %v914, 7
      %v916 = vsub.s32 %v913, %v915
      %v917 = vrot.slane %v909, %v916
      %v919 = vunpack.c.l.s4 1983009808
      %v920 = vunpack.c.0.s8 %v919
      %v921 = vlaneseq
      %v922 = vshrl.u32 %v921, 7
      %v923 = vsub.s32 %v920, %v922
      %v924 = vrot.slane %v910, %v923
      %v925 = vcombine.low %v917, %v924
      %v926 = vcombine.low %v533, %v541
      %v927 = vcombine.low %v549, %v548
      %v929 = vunpack.c.l.s4 1983009808
      %v930 = vunpack.c.0.s8 %v929
      %v931 = vlaneseq
      %v932 = vshrl.u32 %v931, 7
      %v933 = vsub.s32 %v930, %v932
      %v934 = vrot.slane %v926, %v933
      %v936 = vunpack.c.l.s4 1983009808
      %v937 = vunpack.c.0.s8 %v936
      %v938 = vlaneseq
      %v939 = vshrl.u32 %v938, 7
      %v940 = vsub.s32 %v937, %v939
      %v941 = vrot.slane %v927, %v940
      %v942 = vcombine.low %v934, %v941
      %v943 = vcombine.low %v550, %v558
      %v944 = vcombine.low %v566, %v565
      %v946 = vunpack.c.l.s4 1983009808
      %v947 = vunpack.c.0.s8 %v946
      %v948 = vlaneseq
      %v949 = vshrl.u32 %v948, 7
      %v950 = vsub.s32 %v947, %v949
      %v951 = vrot.slane %v943, %v950
      %v953 = vunpack.c.l.s4 1983009808
      %v954 = vunpack.c.0.s8 %v953
      %v955 = vlaneseq
      %v956 = vshrl.u32 %v955, 7
      %v957 = vsub.s32 %v954, %v956
      %v958 = vrot.slane %v944, %v957
      %v959 = vcombine.low %v951, %v958
      %v960 = vcombine.low %v567, %v574
      %v961 = vcombine.low %v582, %v590
      %v963 = vunpack.c.l.s4 1983009808
      %v964 = vunpack.c.0.s8 %v963
      %v965 = vlaneseq
      %v966 = vshrl.u32 %v965, 7
      %v967 = vsub.s32 %v964, %v966
      %v968 = vrot.slane %v960, %v967
      %v970 = vunpack.c.l.s4 1983009808
      %v971 = vunpack.c.0.s8 %v970
      %v972 = vlaneseq
      %v973 = vshrl.u32 %v972, 7
      %v974 = vsub.s32 %v971, %v973
      %v975 = vrot.slane %v961, %v974
      %v976 = vcombine.low %v968, %v975
      %v977 = vcombine.low %v589, %v591
      %v978 = vcombine.low %v599, %v607
      %v980 = vunpack.c.l.s4 1983009808
      %v981 = vunpack.c.0.s8 %v980
      %v982 = vlaneseq
      %v983 = vshrl.u32 %v982, 7
      %v984 = vsub.s32 %v981, %v983
      %v985 = vrot.slane %v977, %v984
      %v987 = vunpack.c.l.s4 1983009808
      %v988 = vunpack.c.0.s8 %v987
      %v989 = vlaneseq
      %v990 = vshrl.u32 %v989, 7
      %v991 = vsub.s32 %v988, %v990
      %v992 = vrot.slane %v978, %v991
      %v993 = vcombine.low %v985, %v992
      %v994 = vcombine.low %v606, %v608
      %v995 = vcombine.low %v615, %v623
      %v997 = vunpack.c.l.s4 1983009808
      %v998 = vunpack.c.0.s8 %v997
      %v999 = vlaneseq
      %v1000 = vshrl.u32 %v999, 7
      %v1001 = vsub.s32 %v998, %v1000
      %v1002 = vrot.slane %v994, %v1001
      %v1004 = vunpack.c.l.s4 1983009808
      %v1005 = vunpack.c.0.s8 %v1004
      %v1006 = vlaneseq
      %v1007 = vshrl.u32 %v1006, 7
      %v1008 = vsub.s32 %v1005, %v1007
      %v1009 = vrot.slane %v995, %v1008
      %v1010 = vcombine.low %v1002, %v1009
      %v1011 = vcombine.low %v631, %v630
      %v1012 = vcombine.low %v632, %v640
      %v1014 = vunpack.c.l.s4 1983009808
      %v1015 = vunpack.c.0.s8 %v1014
      %v1016 = vlaneseq
      %v1017 = vshrl.u32 %v1016, 7
      %v1018 = vsub.s32 %v1015, %v1017
      %v1019 = vrot.slane %v1011, %v1018
      %v1021 = vunpack.c.l.s4 1983009808
      %v1022 = vunpack.c.0.s8 %v1021
      %v1023 = vlaneseq
      %v1024 = vshrl.u32 %v1023, 7
      %v1025 = vsub.s32 %v1022, %v1024
      %v1026 = vrot.slane %v1012, %v1025
      %v1027 = vcombine.low %v1019, %v1026
      %v1028 = vcombine.low %v648, %v647
      %v1029 = vcombine.low %v649, %v656
      %v1031 = vunpack.c.l.s4 1983009808
      %v1032 = vunpack.c.0.s8 %v1031
      %v1033 = vlaneseq
      %v1034 = vshrl.u32 %v1033, 7
      %v1035 = vsub.s32 %v1032, %v1034
      %v1036 = vrot.slane %v1028, %v1035
      %v1038 = vunpack.c.l.s4 1983009808
      %v1039 = vunpack.c.0.s8 %v1038
      %v1040 = vlaneseq
      %v1041 = vshrl.u32 %v1040, 7
      %v1042 = vsub.s32 %v1039, %v1041
      %v1043 = vrot.slane %v1029, %v1042
      %v1044 = vcombine.low %v1036, %v1043
      %v1045 = vcombine.low %v664, %v672
      %v1046 = vcombine.low %v671, %v673
      %v1048 = vunpack.c.l.s4 1983009808
      %v1049 = vunpack.c.0.s8 %v1048
      %v1050 = vlaneseq
      %v1051 = vshrl.u32 %v1050, 7
      %v1052 = vsub.s32 %v1049, %v1051
      %v1053 = vrot.slane %v1045, %v1052
      %v1055 = vunpack.c.l.s4 1983009808
      %v1056 = vunpack.c.0.s8 %v1055
      %v1057 = vlaneseq
      %v1058 = vshrl.u32 %v1057, 7
      %v1059 = vsub.s32 %v1056, %v1058
      %v1060 = vrot.slane %v1046, %v1059
      %v1061 = vcombine.low %v1053, %v1060
      %v1062 = vcombine.low %v681, %v689
      %v1063 = vcombine.low %v688, %v690
      %v1065 = vunpack.c.l.s4 1983009808
      %v1066 = vunpack.c.0.s8 %v1065
      %v1067 = vlaneseq
      %v1068 = vshrl.u32 %v1067, 7
      %v1069 = vsub.s32 %v1066, %v1068
      %v1070 = vrot.slane %v1062, %v1069
      %v1072 = vunpack.c.l.s4 1983009808
      %v1073 = vunpack.c.0.s8 %v1072
      %v1074 = vlaneseq
      %v1075 = vshrl.u32 %v1074, 7
      %v1076 = vsub.s32 %v1073, %v1075
      %v1077 = vrot.slane %v1063, %v1076
      %v1078 = vcombine.low %v1070, %v1077
      %v1079 = vcombine.low %v697, %v705
      %v1080 = vcombine.low %v713, %v712
      %v1082 = vunpack.c.l.s4 1983009808
      %v1083 = vunpack.c.0.s8 %v1082
      %v1084 = vlaneseq
      %v1085 = vshrl.u32 %v1084, 7
      %v1086 = vsub.s32 %v1083, %v1085
      %v1087 = vrot.slane %v1079, %v1086
      %v1089 = vunpack.c.l.s4 1983009808
      %v1090 = vunpack.c.0.s8 %v1089
      %v1091 = vlaneseq
      %v1092 = vshrl.u32 %v1091, 7
      %v1093 = vsub.s32 %v1090, %v1092
      %v1094 = vrot.slane %v1080, %v1093
      %v1095 = vcombine.low %v1087, %v1094
      %v1096 = vcombine.low %v714, %v722
      %v1097 = vcombine.low %v730, %v729
      %v1099 = vunpack.c.l.s4 1983009808
      %v1100 = vunpack.c.0.s8 %v1099
      %v1101 = vlaneseq
      %v1102 = vshrl.u32 %v1101, 7
      %v1103 = vsub.s32 %v1100, %v1102
      %v1104 = vrot.slane %v1096, %v1103
      %v1106 = vunpack.c.l.s4 1983009808
      %v1107 = vunpack.c.0.s8 %v1106
      %v1108 = vlaneseq
      %v1109 = vshrl.u32 %v1108, 7
      %v1110 = vsub.s32 %v1107, %v1109
      %v1111 = vrot.slane %v1097, %v1110
      %v1112 = vcombine.low %v1104, %v1111
      %v1113 = vcombine.low %v731, %v738
      %v1115 = vunpack.c.l.s4 1983009808
      %v1116 = vunpack.c.0.s8 %v1115
      %v1117 = vlaneseq
      %v1118 = vshrl.u32 %v1117, 7
      %v1119 = vsub.s32 %v1116, %v1118
      %v1120 = vrot.slane %v1113, %v1119
      %v1144 = vpack.c.bf16 %v772, %v755
      %v1145 = vpack.c.bf16 %v806, %v789
      %v1146 = vpack.c.bf16 %v840, %v823
      %v1147 = vpack.c.bf16 %v874, %v857
      %v1148 = vpack.c.bf16 %v908, %v891
      %v1149 = vpack.c.bf16 %v942, %v925
      %v1150 = vpack.c.bf16 %v976, %v959
      %v1151 = vpack.c.bf16 %v1010, %v993
      %v1152 = vpack.c.bf16 %v1044, %v1027
      %v1153 = vpack.c.bf16 %v1078, %v1061
      %v1154 = vpack.c.bf16 %v1112, %v1095
      %v1155 = vpack.c.bf16 %v1120, %v1120
      %v1156 = vld [vmem:[%s1] sm:$0xf]
      %v1157 = vld [vmem:[%s1 + $0x4] sm:$0x3]
      %v1161 = vcombine.high %v293, %v293
      %v1163 = vunpack.c.l.s4 1983009808
      %v1164 = vunpack.c.0.s8 %v1163
      %v1165 = vlaneseq
      %v1166 = vshrl.u32 %v1165, 7
      %v1167 = vsub.s32 %v1164, %v1166
      %v1168 = vrot.slane %v293, %v1167
      %v1170 = vunpack.c.l.s4 1983009808
      %v1171 = vunpack.c.0.s8 %v1170
      %v1172 = vlaneseq
      %v1173 = vshrl.u32 %v1172, 7
      %v1174 = vsub.s32 %v1171, %v1173
      %v1175 = vrot.slane %v1161, %v1174
      %v1176 = vcombine.high %v1168, %v1168
      %v1177 = vcombine.high %v1175, %v1175
      %v1178 = vcombine.high %v294, %v294
      %v1180 = vunpack.c.l.s4 1983009808
      %v1181 = vunpack.c.0.s8 %v1180
      %v1182 = vlaneseq
      %v1183 = vshrl.u32 %v1182, 7
      %v1184 = vsub.s32 %v1181, %v1183
      %v1185 = vrot.slane %v294, %v1184
      %v1187 = vunpack.c.l.s4 1983009808
      %v1188 = vunpack.c.0.s8 %v1187
      %v1189 = vlaneseq
      %v1190 = vshrl.u32 %v1189, 7
      %v1191 = vsub.s32 %v1188, %v1190
      %v1192 = vrot.slane %v1178, %v1191
      %v1193 = vcombine.high %v1185, %v1185
      %v1194 = vcombine.high %v1192, %v1192
      %v1196 = vunpack.c.l.s4 1983009808
      %v1197 = vunpack.c.0.s8 %v1196
      %v1198 = vlaneseq
      %v1199 = vshrl.u32 %v1198, 7
      %v1200 = vsub.s32 %v1197, %v1199
      %v1201 = vrot.slane %v295, %v1200
      %v1202 = vcombine.low %v377, %v385
      %v1203 = vcombine.low %v384, %v386
      %v1205 = vunpack.c.l.s4 1983009808
      %v1206 = vunpack.c.0.s8 %v1205
      %v1207 = vlaneseq
      %v1208 = vshrl.u32 %v1207, 7
      %v1209 = vsub.s32 %v1206, %v1208
      %v1210 = vrot.slane %v1202, %v1209
      %v1212 = vunpack.c.l.s4 1983009808
      %v1213 = vunpack.c.0.s8 %v1212
      %v1214 = vlaneseq
      %v1215 = vshrl.u32 %v1214, 7
      %v1216 = vsub.s32 %v1213, %v1215
      %v1217 = vrot.slane %v1203, %v1216
      %v1218 = vcombine.low %v1210, %v1217
      %v1219 = vcombine.low %v394, %v402
      %v1220 = vcombine.low %v401, %v403
      %v1222 = vunpack.c.l.s4 1983009808
      %v1223 = vunpack.c.0.s8 %v1222
      %v1224 = vlaneseq
      %v1225 = vshrl.u32 %v1224, 7
      %v1226 = vsub.s32 %v1223, %v1225
      %v1227 = vrot.slane %v1219, %v1226
      %v1229 = vunpack.c.l.s4 1983009808
      %v1230 = vunpack.c.0.s8 %v1229
      %v1231 = vlaneseq
      %v1232 = vshrl.u32 %v1231, 7
      %v1233 = vsub.s32 %v1230, %v1232
      %v1234 = vrot.slane %v1220, %v1233
      %v1235 = vcombine.low %v1227, %v1234
      %v1236 = vcombine.low %v410, %v418
      %v1237 = vcombine.low %v426, %v425
      %v1239 = vunpack.c.l.s4 1983009808
      %v1240 = vunpack.c.0.s8 %v1239
      %v1241 = vlaneseq
      %v1242 = vshrl.u32 %v1241, 7
      %v1243 = vsub.s32 %v1240, %v1242
      %v1244 = vrot.slane %v1236, %v1243
      %v1246 = vunpack.c.l.s4 1983009808
      %v1247 = vunpack.c.0.s8 %v1246
      %v1248 = vlaneseq
      %v1249 = vshrl.u32 %v1248, 7
      %v1250 = vsub.s32 %v1247, %v1249
      %v1251 = vrot.slane %v1237, %v1250
      %v1252 = vcombine.low %v1244, %v1251
      %v1253 = vcombine.low %v427, %v435
      %v1254 = vcombine.low %v443, %v442
      %v1256 = vunpack.c.l.s4 1983009808
      %v1257 = vunpack.c.0.s8 %v1256
      %v1258 = vlaneseq
      %v1259 = vshrl.u32 %v1258, 7
      %v1260 = vsub.s32 %v1257, %v1259
      %v1261 = vrot.slane %v1253, %v1260
      %v1263 = vunpack.c.l.s4 1983009808
      %v1264 = vunpack.c.0.s8 %v1263
      %v1265 = vlaneseq
      %v1266 = vshrl.u32 %v1265, 7
      %v1267 = vsub.s32 %v1264, %v1266
      %v1268 = vrot.slane %v1254, %v1267
      %v1269 = vcombine.low %v1261, %v1268
      %v1270 = vcombine.low %v444, %v451
      %v1271 = vcombine.low %v459, %v467
      %v1273 = vunpack.c.l.s4 1983009808
      %v1274 = vunpack.c.0.s8 %v1273
      %v1275 = vlaneseq
      %v1276 = vshrl.u32 %v1275, 7
      %v1277 = vsub.s32 %v1274, %v1276
      %v1278 = vrot.slane %v1270, %v1277
      %v1280 = vunpack.c.l.s4 1983009808
      %v1281 = vunpack.c.0.s8 %v1280
      %v1282 = vlaneseq
      %v1283 = vshrl.u32 %v1282, 7
      %v1284 = vsub.s32 %v1281, %v1283
      %v1285 = vrot.slane %v1271, %v1284
      %v1286 = vcombine.low %v1278, %v1285
      %v1287 = vcombine.low %v466, %v468
      %v1288 = vcombine.low %v476, %v484
      %v1290 = vunpack.c.l.s4 1983009808
      %v1291 = vunpack.c.0.s8 %v1290
      %v1292 = vlaneseq
      %v1293 = vshrl.u32 %v1292, 7
      %v1294 = vsub.s32 %v1291, %v1293
      %v1295 = vrot.slane %v1287, %v1294
      %v1297 = vunpack.c.l.s4 1983009808
      %v1298 = vunpack.c.0.s8 %v1297
      %v1299 = vlaneseq
      %v1300 = vshrl.u32 %v1299, 7
      %v1301 = vsub.s32 %v1298, %v1300
      %v1302 = vrot.slane %v1288, %v1301
      %v1303 = vcombine.low %v1295, %v1302
      %v1304 = vcombine.low %v483, %v485
      %v1305 = vcombine.low %v492, %v500
      %v1307 = vunpack.c.l.s4 1983009808
      %v1308 = vunpack.c.0.s8 %v1307
      %v1309 = vlaneseq
      %v1310 = vshrl.u32 %v1309, 7
      %v1311 = vsub.s32 %v1308, %v1310
      %v1312 = vrot.slane %v1304, %v1311
      %v1314 = vunpack.c.l.s4 1983009808
      %v1315 = vunpack.c.0.s8 %v1314
      %v1316 = vlaneseq
      %v1317 = vshrl.u32 %v1316, 7
      %v1318 = vsub.s32 %v1315, %v1317
      %v1319 = vrot.slane %v1305, %v1318
      %v1320 = vcombine.low %v1312, %v1319
      %v1321 = vcombine.low %v508, %v507
      %v1322 = vcombine.low %v509, %v517
      %v1324 = vunpack.c.l.s4 1983009808
      %v1325 = vunpack.c.0.s8 %v1324
      %v1326 = vlaneseq
      %v1327 = vshrl.u32 %v1326, 7
      %v1328 = vsub.s32 %v1325, %v1327
      %v1329 = vrot.slane %v1321, %v1328
      %v1331 = vunpack.c.l.s4 1983009808
      %v1332 = vunpack.c.0.s8 %v1331
      %v1333 = vlaneseq
      %v1334 = vshrl.u32 %v1333, 7
      %v1335 = vsub.s32 %v1332, %v1334
      %v1336 = vrot.slane %v1322, %v1335
      %v1337 = vcombine.low %v1329, %v1336
      %v1338 = vcombine.low %v525, %v524
      %v1339 = vcombine.low %v526, %v533
      %v1341 = vunpack.c.l.s4 1983009808
      %v1342 = vunpack.c.0.s8 %v1341
      %v1343 = vlaneseq
      %v1344 = vshrl.u32 %v1343, 7
      %v1345 = vsub.s32 %v1342, %v1344
      %v1346 = vrot.slane %v1338, %v1345
      %v1348 = vunpack.c.l.s4 1983009808
      %v1349 = vunpack.c.0.s8 %v1348
      %v1350 = vlaneseq
      %v1351 = vshrl.u32 %v1350, 7
      %v1352 = vsub.s32 %v1349, %v1351
      %v1353 = vrot.slane %v1339, %v1352
      %v1354 = vcombine.low %v1346, %v1353
      %v1355 = vcombine.low %v541, %v549
      %v1356 = vcombine.low %v548, %v550
      %v1358 = vunpack.c.l.s4 1983009808
      %v1359 = vunpack.c.0.s8 %v1358
      %v1360 = vlaneseq
      %v1361 = vshrl.u32 %v1360, 7
      %v1362 = vsub.s32 %v1359, %v1361
      %v1363 = vrot.slane %v1355, %v1362
      %v1365 = vunpack.c.l.s4 1983009808
      %v1366 = vunpack.c.0.s8 %v1365
      %v1367 = vlaneseq
      %v1368 = vshrl.u32 %v1367, 7
      %v1369 = vsub.s32 %v1366, %v1368
      %v1370 = vrot.slane %v1356, %v1369
      %v1371 = vcombine.low %v1363, %v1370
      %v1372 = vcombine.low %v558, %v566
      %v1373 = vcombine.low %v565, %v567
      %v1375 = vunpack.c.l.s4 1983009808
      %v1376 = vunpack.c.0.s8 %v1375
      %v1377 = vlaneseq
      %v1378 = vshrl.u32 %v1377, 7
      %v1379 = vsub.s32 %v1376, %v1378
      %v1380 = vrot.slane %v1372, %v1379
      %v1382 = vunpack.c.l.s4 1983009808
      %v1383 = vunpack.c.0.s8 %v1382
      %v1384 = vlaneseq
      %v1385 = vshrl.u32 %v1384, 7
      %v1386 = vsub.s32 %v1383, %v1385
      %v1387 = vrot.slane %v1373, %v1386
      %v1388 = vcombine.low %v1380, %v1387
      %v1389 = vcombine.low %v574, %v582
      %v1390 = vcombine.low %v590, %v589
      %v1392 = vunpack.c.l.s4 1983009808
      %v1393 = vunpack.c.0.s8 %v1392
      %v1394 = vlaneseq
      %v1395 = vshrl.u32 %v1394, 7
      %v1396 = vsub.s32 %v1393, %v1395
      %v1397 = vrot.slane %v1389, %v1396
      %v1399 = vunpack.c.l.s4 1983009808
      %v1400 = vunpack.c.0.s8 %v1399
      %v1401 = vlaneseq
      %v1402 = vshrl.u32 %v1401, 7
      %v1403 = vsub.s32 %v1400, %v1402
      %v1404 = vrot.slane %v1390, %v1403
      %v1405 = vcombine.low %v1397, %v1404
      %v1406 = vcombine.low %v591, %v599
      %v1407 = vcombine.low %v607, %v606
      %v1409 = vunpack.c.l.s4 1983009808
      %v1410 = vunpack.c.0.s8 %v1409
      %v1411 = vlaneseq
      %v1412 = vshrl.u32 %v1411, 7
      %v1413 = vsub.s32 %v1410, %v1412
      %v1414 = vrot.slane %v1406, %v1413
      %v1416 = vunpack.c.l.s4 1983009808
      %v1417 = vunpack.c.0.s8 %v1416
      %v1418 = vlaneseq
      %v1419 = vshrl.u32 %v1418, 7
      %v1420 = vsub.s32 %v1417, %v1419
      %v1421 = vrot.slane %v1407, %v1420
      %v1422 = vcombine.low %v1414, %v1421
      %v1423 = vcombine.low %v608, %v615
      %v1424 = vcombine.low %v623, %v631
      %v1426 = vunpack.c.l.s4 1983009808
      %v1427 = vunpack.c.0.s8 %v1426
      %v1428 = vlaneseq
      %v1429 = vshrl.u32 %v1428, 7
      %v1430 = vsub.s32 %v1427, %v1429
      %v1431 = vrot.slane %v1423, %v1430
      %v1433 = vunpack.c.l.s4 1983009808
      %v1434 = vunpack.c.0.s8 %v1433
      %v1435 = vlaneseq
      %v1436 = vshrl.u32 %v1435, 7
      %v1437 = vsub.s32 %v1434, %v1436
      %v1438 = vrot.slane %v1424, %v1437
      %v1439 = vcombine.low %v1431, %v1438
      %v1440 = vcombine.low %v630, %v632
      %v1441 = vcombine.low %v640, %v648
      %v1443 = vunpack.c.l.s4 1983009808
      %v1444 = vunpack.c.0.s8 %v1443
      %v1445 = vlaneseq
      %v1446 = vshrl.u32 %v1445, 7
      %v1447 = vsub.s32 %v1444, %v1446
      %v1448 = vrot.slane %v1440, %v1447
      %v1450 = vunpack.c.l.s4 1983009808
      %v1451 = vunpack.c.0.s8 %v1450
      %v1452 = vlaneseq
      %v1453 = vshrl.u32 %v1452, 7
      %v1454 = vsub.s32 %v1451, %v1453
      %v1455 = vrot.slane %v1441, %v1454
      %v1456 = vcombine.low %v1448, %v1455
      %v1457 = vcombine.low %v647, %v649
      %v1458 = vcombine.low %v656, %v664
      %v1460 = vunpack.c.l.s4 1983009808
      %v1461 = vunpack.c.0.s8 %v1460
      %v1462 = vlaneseq
      %v1463 = vshrl.u32 %v1462, 7
      %v1464 = vsub.s32 %v1461, %v1463
      %v1465 = vrot.slane %v1457, %v1464
      %v1467 = vunpack.c.l.s4 1983009808
      %v1468 = vunpack.c.0.s8 %v1467
      %v1469 = vlaneseq
      %v1470 = vshrl.u32 %v1469, 7
      %v1471 = vsub.s32 %v1468, %v1470
      %v1472 = vrot.slane %v1458, %v1471
      %v1473 = vcombine.low %v1465, %v1472
      %v1474 = vcombine.low %v672, %v671
      %v1475 = vcombine.low %v673, %v681
      %v1477 = vunpack.c.l.s4 1983009808
      %v1478 = vunpack.c.0.s8 %v1477
      %v1479 = vlaneseq
      %v1480 = vshrl.u32 %v1479, 7
      %v1481 = vsub.s32 %v1478, %v1480
      %v1482 = vrot.slane %v1474, %v1481
      %v1484 = vunpack.c.l.s4 1983009808
      %v1485 = vunpack.c.0.s8 %v1484
      %v1486 = vlaneseq
      %v1487 = vshrl.u32 %v1486, 7
      %v1488 = vsub.s32 %v1485, %v1487
      %v1489 = vrot.slane %v1475, %v1488
      %v1490 = vcombine.low %v1482, %v1489
      %v1491 = vcombine.low %v689, %v688
      %v1492 = vcombine.low %v690, %v697
      %v1494 = vunpack.c.l.s4 1983009808
      %v1495 = vunpack.c.0.s8 %v1494
      %v1496 = vlaneseq
      %v1497 = vshrl.u32 %v1496, 7
      %v1498 = vsub.s32 %v1495, %v1497
      %v1499 = vrot.slane %v1491, %v1498
      %v1501 = vunpack.c.l.s4 1983009808
      %v1502 = vunpack.c.0.s8 %v1501
      %v1503 = vlaneseq
      %v1504 = vshrl.u32 %v1503, 7
      %v1505 = vsub.s32 %v1502, %v1504
      %v1506 = vrot.slane %v1492, %v1505
      %v1507 = vcombine.low %v1499, %v1506
      %v1508 = vcombine.low %v705, %v713
      %v1509 = vcombine.low %v712, %v714
      %v1511 = vunpack.c.l.s4 1983009808
      %v1512 = vunpack.c.0.s8 %v1511
      %v1513 = vlaneseq
      %v1514 = vshrl.u32 %v1513, 7
      %v1515 = vsub.s32 %v1512, %v1514
      %v1516 = vrot.slane %v1508, %v1515
      %v1518 = vunpack.c.l.s4 1983009808
      %v1519 = vunpack.c.0.s8 %v1518
      %v1520 = vlaneseq
      %v1521 = vshrl.u32 %v1520, 7
      %v1522 = vsub.s32 %v1519, %v1521
      %v1523 = vrot.slane %v1509, %v1522
      %v1524 = vcombine.low %v1516, %v1523
      %v1525 = vcombine.low %v722, %v730
      %v1526 = vcombine.low %v729, %v731
      %v1528 = vunpack.c.l.s4 1983009808
      %v1529 = vunpack.c.0.s8 %v1528
      %v1530 = vlaneseq
      %v1531 = vshrl.u32 %v1530, 7
      %v1532 = vsub.s32 %v1529, %v1531
      %v1533 = vrot.slane %v1525, %v1532
      %v1535 = vunpack.c.l.s4 1983009808
      %v1536 = vunpack.c.0.s8 %v1535
      %v1537 = vlaneseq
      %v1538 = vshrl.u32 %v1537, 7
      %v1539 = vsub.s32 %v1536, %v1538
      %v1540 = vrot.slane %v1526, %v1539
      %v1541 = vcombine.low %v1533, %v1540
      %v1542 = vcombine.low %v738, %v1168
      %v1543 = vcombine.low %v1176, %v1175
      %v1545 = vunpack.c.l.s4 1983009808
      %v1546 = vunpack.c.0.s8 %v1545
      %v1547 = vlaneseq
      %v1548 = vshrl.u32 %v1547, 7
      %v1549 = vsub.s32 %v1546, %v1548
      %v1550 = vrot.slane %v1542, %v1549
      %v1552 = vunpack.c.l.s4 1983009808
      %v1553 = vunpack.c.0.s8 %v1552
      %v1554 = vlaneseq
      %v1555 = vshrl.u32 %v1554, 7
      %v1556 = vsub.s32 %v1553, %v1555
      %v1557 = vrot.slane %v1543, %v1556
      %v1558 = vcombine.low %v1550, %v1557
      %v1559 = vcombine.low %v1177, %v1185
      %v1560 = vcombine.low %v1193, %v1192
      %v1562 = vunpack.c.l.s4 1983009808
      %v1563 = vunpack.c.0.s8 %v1562
      %v1564 = vlaneseq
      %v1565 = vshrl.u32 %v1564, 7
      %v1566 = vsub.s32 %v1563, %v1565
      %v1567 = vrot.slane %v1559, %v1566
      %v1569 = vunpack.c.l.s4 1983009808
      %v1570 = vunpack.c.0.s8 %v1569
      %v1571 = vlaneseq
      %v1572 = vshrl.u32 %v1571, 7
      %v1573 = vsub.s32 %v1570, %v1572
      %v1574 = vrot.slane %v1560, %v1573
      %v1575 = vcombine.low %v1567, %v1574
      %v1576 = vcombine.low %v1194, %v1201
      %v1578 = vunpack.c.l.s4 1983009808
      %v1579 = vunpack.c.0.s8 %v1578
      %v1580 = vlaneseq
      %v1581 = vshrl.u32 %v1580, 7
      %v1582 = vsub.s32 %v1579, %v1581
      %v1583 = vrot.slane %v1576, %v1582
      %v1607 = vpack.c.bf16 %v1235, %v1218
      %v1608 = vpack.c.bf16 %v1269, %v1252
      %v1609 = vpack.c.bf16 %v1303, %v1286
      %v1610 = vpack.c.bf16 %v1337, %v1320
      %v1611 = vpack.c.bf16 %v1371, %v1354
      %v1612 = vpack.c.bf16 %v1405, %v1388
      %v1613 = vpack.c.bf16 %v1439, %v1422
      %v1614 = vpack.c.bf16 %v1473, %v1456
      %v1615 = vpack.c.bf16 %v1507, %v1490
      %v1616 = vpack.c.bf16 %v1541, %v1524
      %v1617 = vpack.c.bf16 %v1575, %v1558
      %v1618 = vpack.c.bf16 %v1583, %v1583
      %s1619 = scalar_lea.vmem %s1, 8
      %v1620 = vld [vmem:[%s1619] sm:$0xf]
      %v1621 = vld [vmem:[%s1619 + $0x4] sm:$0x3]
      %v1624 = vunpack.c.l.b16 %v1620
      %v1625 = vunpack.c.l.b16 %v1621
      %v1626 = vpack.c.b16 %v1625, %v1624
      %vm1627 = vcmask 97280
      %v1629 = vsel %vm1627, %v1607, 0
      %v1632 = vsel %vm1627, %v1608, 0
      %v1635 = vsel %vm1627, %v1609, 0
      %v1638 = vsel %vm1627, %v1610, 0
      %v1641 = vsel %vm1627, %v1611, 0
      %v1644 = vsel %vm1627, %v1612, 0
      %v1647 = vsel %vm1627, %v1613, 0
      %v1650 = vsel %vm1627, %v1614, 0
      %v1653 = vsel %vm1627, %v1615, 0
      %v1656 = vsel %vm1627, %v1616, 0
      %v1659 = vsel %vm1627, %v1617, 0
      %v1662 = vsel %vm1627, %v1618, 0
      %vm1664 = vcmask 1045504
      %v1666 = vsel %vm1664, %v1626, 0
      %1668 = vmatprep.subr.bf16.mxu0 0
      %1669 = vmatpush1.bf16.msra.mxu0 %v1666
      %1670 = vmatprep.subr.bf16.mxu0 0
      %1671 = vmatpush1.bf16.msra.mxu0 0
      %1672 = vmatprep.subr.bf16.mxu0 0
      %1673 = vmatpush1.bf16.msra.mxu0 0
      %1674 = vmatprep.subr.bf16.mxu0 0
      %1675 = vmatpush1.bf16.msra.mxu0 0
      %1676 = vmatprep.subr.bf16.mxu0 0
      %1677 = vmatpush1.bf16.msra.mxu0 0
      %1678 = vmatprep.subr.bf16.mxu0 0
      %1679 = vmatpush1.bf16.msra.mxu0 0
      %1680 = vmatprep.subr.bf16.mxu0 0
      %1681 = vmatpush1.bf16.msra.mxu0 0
      %1682 = vmatprep.subr.bf16.mxu0 0
      %1683 = vmatpush1.bf16.msra.mxu0 0
      %1684 = vmatprep.subr.bf16.mxu0 0
      %1685 = vmatpush1.bf16.msra.mxu0 0
      %1686 = vmatprep.subr.bf16.mxu0 0
      %1687 = vmatpush1.bf16.msra.mxu0 0
      %1688 = vmatprep.subr.bf16.mxu0 0
      %1689 = vmatpush1.bf16.msra.mxu0 0
      %1690 = vmatprep.subr.bf16.mxu0 0
      %1691 = vmatpush1.bf16.msra.mxu0 0
      %1692 = vmatprep.subr.bf16.mxu0 0
      %1693 = vmatpush1.bf16.msra.mxu0 0
      %1694 = vmatprep.subr.bf16.mxu0 0
      %1695 = vmatpush1.bf16.msra.mxu0 0
      %1696 = vmatprep.subr.bf16.mxu0 0
      %1697 = vmatpush1.bf16.msra.mxu0 0
      %1698 = vmatprep.subr.bf16.mxu0 0
      %1699 = vmatpush1.bf16.msra.mxu0 0
      %1700 = vmatprep.mubr.bf16.mxu0 0
      %1701 = vmatmul.mubr.bf16.gmra.mrb[0].mxu0 %v1629
      %v1702 = vpop.f32.mrb[0].mxu0
      %v1703 = vadd.f32 0.0, %v1702
      %v1704 = vpop.f32.mrb[0].mxu0
      %v1705 = vpop.f32.mrb[0].mxu0
      %v1706 = vadd.f32 0.0, %v1705
      %v1707 = vpop.f32.mrb[0].mxu0
      %1708 = vmatprep.mubr.bf16.mxu0 0
      %1709 = vmatmul.mubr.bf16.gmra.mrb[0].mxu0 %v1632
      %v1710 = vpop.f32.mrb[0].mxu0
      %v1711 = vadd.f32 0.0, %v1710
      %v1712 = vpop.f32.mrb[0].mxu0
      %v1713 = vpop.f32.mrb[0].mxu0
      %v1714 = vadd.f32 0.0, %v1713
      %v1715 = vpop.f32.mrb[0].mxu0
      %1716 = vmatprep.mubr.bf16.mxu0 0
      %1717 = vmatmul.mubr.bf16.gmra.mrb[0].mxu0 %v1635
      %v1718 = vpop.f32.mrb[0].mxu0
      %v1719 = vadd.f32 0.0, %v1718
      %v1720 = vpop.f32.mrb[0].mxu0
      %v1721 = vpop.f32.mrb[0].mxu0
      %v1722 = vadd.f32 0.0, %v1721
      %v1723 = vpop.f32.mrb[0].mxu0
      %1724 = vmatprep.mubr.bf16.mxu0 0
      %1725 = vmatmul.mubr.bf16.gmra.mrb[0].mxu0 %v1638
      %v1726 = vpop.f32.mrb[0].mxu0
      %v1727 = vadd.f32 0.0, %v1726
      %v1728 = vpop.f32.mrb[0].mxu0
      %v1729 = vpop.f32.mrb[0].mxu0
      %v1730 = vadd.f32 0.0, %v1729
      %v1731 = vpop.f32.mrb[0].mxu0
      %1732 = vmatprep.mubr.bf16.mxu0 0
      %1733 = vmatmul.mubr.bf16.gmra.mrb[0].mxu0 %v1641
      %v1734 = vpop.f32.mrb[0].mxu0
      %v1735 = vadd.f32 0.0, %v1734
      %v1736 = vpop.f32.mrb[0].mxu0
      %v1737 = vpop.f32.mrb[0].mxu0
      %v1738 = vadd.f32 0.0, %v1737
      %v1739 = vpop.f32.mrb[0].mxu0
      %1740 = vmatprep.mubr.bf16.mxu0 0
      %1741 = vmatmul.mubr.bf16.gmra.mrb[0].mxu0 %v1644
      %v1742 = vpop.f32.mrb[0].mxu0
      %v1743 = vadd.f32 0.0, %v1742
      %v1744 = vpop.f32.mrb[0].mxu0
      %v1745 = vpop.f32.mrb[0].mxu0
      %v1746 = vadd.f32 0.0, %v1745
      %v1747 = vpop.f32.mrb[0].mxu0
      %1748 = vmatprep.mubr.bf16.mxu0 0
      %1749 = vmatmul.mubr.bf16.gmra.mrb[0].mxu0 %v1647
      %v1750 = vpop.f32.mrb[0].mxu0
      %v1751 = vadd.f32 0.0, %v1750
      %v1752 = vpop.f32.mrb[0].mxu0
      %v1753 = vpop.f32.mrb[0].mxu0
      %v1754 = vadd.f32 0.0, %v1753
      %v1755 = vpop.f32.mrb[0].mxu0
      %1756 = vmatprep.mubr.bf16.mxu0 0
      %1757 = vmatmul.mubr.bf16.gmra.mrb[0].mxu0 %v1650
      %v1758 = vpop.f32.mrb[0].mxu0
      %v1759 = vadd.f32 0.0, %v1758
      %v1760 = vpop.f32.mrb[0].mxu0
      %v1761 = vpop.f32.mrb[0].mxu0
      %v1762 = vadd.f32 0.0, %v1761
      %v1763 = vpop.f32.mrb[0].mxu0
      %1764 = vmatprep.mubr.bf16.mxu0 0
      %1765 = vmatmul.mubr.bf16.gmra.mrb[0].mxu0 %v1653
      %v1766 = vpop.f32.mrb[0].mxu0
      %v1767 = vadd.f32 0.0, %v1766
      %v1768 = vpop.f32.mrb[0].mxu0
      %v1769 = vpop.f32.mrb[0].mxu0
      %v1770 = vadd.f32 0.0, %v1769
      %v1771 = vpop.f32.mrb[0].mxu0
      %1772 = vmatprep.mubr.bf16.mxu0 0
      %1773 = vmatmul.mubr.bf16.gmra.mrb[0].mxu0 %v1656
      %v1774 = vpop.f32.mrb[0].mxu0
      %v1775 = vadd.f32 0.0, %v1774
      %v1776 = vpop.f32.mrb[0].mxu0
      %v1777 = vpop.f32.mrb[0].mxu0
      %v1778 = vadd.f32 0.0, %v1777
      %v1779 = vpop.f32.mrb[0].mxu0
      %1780 = vmatprep.mubr.bf16.mxu0 0
      %1781 = vmatmul.mubr.bf16.gmra.mrb[0].mxu0 %v1659
      %v1782 = vpop.f32.mrb[0].mxu0
      %v1783 = vadd.f32 0.0, %v1782
      %v1784 = vpop.f32.mrb[0].mxu0
      %v1785 = vpop.f32.mrb[0].mxu0
      %v1786 = vadd.f32 0.0, %v1785
      %v1787 = vpop.f32.mrb[0].mxu0
      %1788 = vmatprep.mubr.bf16.mxu0 0
      %1789 = vmatmul.mubr.bf16.gmra.mrb[0].mxu0 %v1662
      %v1790 = vpop.f32.mrb[0].mxu0
      %v1791 = vadd.f32 0.0, %v1790
      %v1792 = vpop.f32.mrb[0].mxu0
      %v1793 = vpop.f32.mrb[0].mxu0
      %v1794 = vpop.f32.mrb[0].mxu0
      %1795 = vdwg.mxu0
      %v1798 = vunpack.c.l.b16 %v1156
      %v1799 = vunpack.c.l.b16 %v1157
      %v1800 = vpack.c.b16 %v1799, %v1798
      %v1802 = vsel %vm1627, %v1144, 0
      %v1805 = vsel %vm1627, %v1145, 0
      %v1808 = vsel %vm1627, %v1146, 0
      %v1811 = vsel %vm1627, %v1147, 0
      %v1814 = vsel %vm1627, %v1148, 0
      %v1817 = vsel %vm1627, %v1149, 0
      %v1820 = vsel %vm1627, %v1150, 0
      %v1823 = vsel %vm1627, %v1151, 0
      %v1826 = vsel %vm1627, %v1152, 0
      %v1829 = vsel %vm1627, %v1153, 0
      %v1832 = vsel %vm1627, %v1154, 0
      %v1835 = vsel %vm1627, %v1155, 0
      %v1838 = vsel %vm1664, %v1800, 0
      %1840 = vmatprep.subr.bf16.mxu0 0
      %1841 = vmatpush1.bf16.msra.mxu0 %v1838
      %1842 = vmatprep.subr.bf16.mxu0 0
      %1843 = vmatpush1.bf16.msra.mxu0 0
      %1844 = vmatprep.subr.bf16.mxu0 0
      %1845 = vmatpush1.bf16.msra.mxu0 0
      %1846 = vmatprep.subr.bf16.mxu0 0
      %1847 = vmatpush1.bf16.msra.mxu0 0
      %1848 = vmatprep.subr.bf16.mxu0 0
      %1849 = vmatpush1.bf16.msra.mxu0 0
      %1850 = vmatprep.subr.bf16.mxu0 0
      %1851 = vmatpush1.bf16.msra.mxu0 0
      %1852 = vmatprep.subr.bf16.mxu0 0
      %1853 = vmatpush1.bf16.msra.mxu0 0
      %1854 = vmatprep.subr.bf16.mxu0 0
      %1855 = vmatpush1.bf16.msra.mxu0 0
      %1856 = vmatprep.subr.bf16.mxu0 0
      %1857 = vmatpush1.bf16.msra.mxu0 0
      %1858 = vmatprep.subr.bf16.mxu0 0
      %1859 = vmatpush1.bf16.msra.mxu0 0
      %1860 = vmatprep.subr.bf16.mxu0 0
      %1861 = vmatpush1.bf16.msra.mxu0 0
      %1862 = vmatprep.subr.bf16.mxu0 0
      %1863 = vmatpush1.bf16.msra.mxu0 0
      %1864 = vmatprep.subr.bf16.mxu0 0
      %1865 = vmatpush1.bf16.msra.mxu0 0
      %1866 = vmatprep.subr.bf16.mxu0 0
      %1867 = vmatpush1.bf16.msra.mxu0 0
      %1868 = vmatprep.subr.bf16.mxu0 0
      %1869 = vmatpush1.bf16.msra.mxu0 0
      %1870 = vmatprep.subr.bf16.mxu0 0
      %1871 = vmatpush1.bf16.msra.mxu0 0
      %1872 = vmatprep.mubr.bf16.mxu0 0
      %1873 = vmatmul.mubr.bf16.gmra.mrb[0].mxu0 %v1802
      %v1874 = vpop.f32.mrb[0].mxu0
      %v1875 = vadd.f32 %v1703, %v1874
      %v1876 = vpop.f32.mrb[0].mxu0
      %v1877 = vpop.f32.mrb[0].mxu0
      %v1878 = vadd.f32 %v1706, %v1877
      %v1879 = vpop.f32.mrb[0].mxu0
      %1880 = vmatprep.mubr.bf16.mxu0 0
      %1881 = vmatmul.mubr.bf16.gmra.mrb[0].mxu0 %v1805
      %v1882 = vpop.f32.mrb[0].mxu0
      %v1883 = vadd.f32 %v1711, %v1882
      %v1884 = vpop.f32.mrb[0].mxu0
      %v1885 = vpop.f32.mrb[0].mxu0
      %v1886 = vadd.f32 %v1714, %v1885
      %v1887 = vpop.f32.mrb[0].mxu0
      %1888 = vmatprep.mubr.bf16.mxu0 0
      %1889 = vmatmul.mubr.bf16.gmra.mrb[0].mxu0 %v1808
      %v1890 = vpop.f32.mrb[0].mxu0
      %v1891 = vadd.f32 %v1719, %v1890
      %v1892 = vpop.f32.mrb[0].mxu0
      %v1893 = vpop.f32.mrb[0].mxu0
      %v1894 = vadd.f32 %v1722, %v1893
      %v1895 = vpop.f32.mrb[0].mxu0
      %1896 = vmatprep.mubr.bf16.mxu0 0
      %1897 = vmatmul.mubr.bf16.gmra.mrb[0].mxu0 %v1811
      %v1898 = vpop.f32.mrb[0].mxu0
      %v1899 = vadd.f32 %v1727, %v1898
      %v1900 = vpop.f32.mrb[0].mxu0
      %v1901 = vpop.f32.mrb[0].mxu0
      %v1902 = vadd.f32 %v1730, %v1901
      %v1903 = vpop.f32.mrb[0].mxu0
      %1904 = vmatprep.mubr.bf16.mxu0 0
      %1905 = vmatmul.mubr.bf16.gmra.mrb[0].mxu0 %v1814
      %v1906 = vpop.f32.mrb[0].mxu0
      %v1907 = vadd.f32 %v1735, %v1906
      %v1908 = vpop.f32.mrb[0].mxu0
      %v1909 = vpop.f32.mrb[0].mxu0
      %v1910 = vadd.f32 %v1738, %v1909
      %v1911 = vpop.f32.mrb[0].mxu0
      %1912 = vmatprep.mubr.bf16.mxu0 0
      %1913 = vmatmul.mubr.bf16.gmra.mrb[0].mxu0 %v1817
      %v1914 = vpop.f32.mrb[0].mxu0
      %v1915 = vadd.f32 %v1743, %v1914
      %v1916 = vpop.f32.mrb[0].mxu0
      %v1917 = vpop.f32.mrb[0].mxu0
      %v1918 = vadd.f32 %v1746, %v1917
      %v1919 = vpop.f32.mrb[0].mxu0
      %1920 = vmatprep.mubr.bf16.mxu0 0
      %1921 = vmatmul.mubr.bf16.gmra.mrb[0].mxu0 %v1820
      %v1922 = vpop.f32.mrb[0].mxu0
      %v1923 = vadd.f32 %v1751, %v1922
      %v1924 = vpop.f32.mrb[0].mxu0
      %v1925 = vpop.f32.mrb[0].mxu0
      %v1926 = vadd.f32 %v1754, %v1925
      %v1927 = vpop.f32.mrb[0].mxu0
      %1928 = vmatprep.mubr.bf16.mxu0 0
      %1929 = vmatmul.mubr.bf16.gmra.mrb[0].mxu0 %v1823
      %v1930 = vpop.f32.mrb[0].mxu0
      %v1931 = vadd.f32 %v1759, %v1930
      %v1932 = vpop.f32.mrb[0].mxu0
      %v1933 = vpop.f32.mrb[0].mxu0
      %v1934 = vadd.f32 %v1762, %v1933
      %v1935 = vpop.f32.mrb[0].mxu0
      %1936 = vmatprep.mubr.bf16.mxu0 0
      %1937 = vmatmul.mubr.bf16.gmra.mrb[0].mxu0 %v1826
      %v1938 = vpop.f32.mrb[0].mxu0
      %v1939 = vadd.f32 %v1767, %v1938
      %v1940 = vpop.f32.mrb[0].mxu0
      %v1941 = vpop.f32.mrb[0].mxu0
      %v1942 = vadd.f32 %v1770, %v1941
      %v1943 = vpop.f32.mrb[0].mxu0
      %1944 = vmatprep.mubr.bf16.mxu0 0
      %1945 = vmatmul.mubr.bf16.gmra.mrb[0].mxu0 %v1829
      %v1946 = vpop.f32.mrb[0].mxu0
      %v1947 = vadd.f32 %v1775, %v1946
      %v1948 = vpop.f32.mrb[0].mxu0
      %v1949 = vpop.f32.mrb[0].mxu0
      %v1950 = vadd.f32 %v1778, %v1949
      %v1951 = vpop.f32.mrb[0].mxu0
      %1952 = vmatprep.mubr.bf16.mxu0 0
      %1953 = vmatmul.mubr.bf16.gmra.mrb[0].mxu0 %v1832
      %v1954 = vpop.f32.mrb[0].mxu0
      %v1955 = vadd.f32 %v1783, %v1954
      %v1956 = vpop.f32.mrb[0].mxu0
      %v1957 = vpop.f32.mrb[0].mxu0
      %v1958 = vadd.f32 %v1786, %v1957
      %v1959 = vpop.f32.mrb[0].mxu0
      %1960 = vmatprep.mubr.bf16.mxu0 0
      %1961 = vmatmul.mubr.bf16.gmra.mrb[0].mxu0 %v1835
      %v1962 = vpop.f32.mrb[0].mxu0
      %v1963 = vadd.f32 %v1791, %v1962
      %v1964 = vpop.f32.mrb[0].mxu0
      %v1965 = vpop.f32.mrb[0].mxu0
      %v1966 = vpop.f32.mrb[0].mxu0
      %1967 = vdwg.mxu0
      %v1971 = vcombine.high %v296, %v296
      %v1973 = vunpack.c.l.s4 1983009808
      %v1974 = vunpack.c.0.s8 %v1973
      %v1975 = vlaneseq
      %v1976 = vshrl.u32 %v1975, 7
      %v1977 = vsub.s32 %v1974, %v1976
      %v1978 = vrot.slane %v296, %v1977
      %v1980 = vunpack.c.l.s4 1983009808
      %v1981 = vunpack.c.0.s8 %v1980
      %v1982 = vlaneseq
      %v1983 = vshrl.u32 %v1982, 7
      %v1984 = vsub.s32 %v1981, %v1983
      %v1985 = vrot.slane %v1971, %v1984
      %v1986 = vcombine.high %v1978, %v1978
      %v1987 = vcombine.high %v1985, %v1985
      %v1988 = vcombine.high %v297, %v297
      %v1990 = vunpack.c.l.s4 1983009808
      %v1991 = vunpack.c.0.s8 %v1990
      %v1992 = vlaneseq
      %v1993 = vshrl.u32 %v1992, 7
      %v1994 = vsub.s32 %v1991, %v1993
      %v1995 = vrot.slane %v297, %v1994
      %v1997 = vunpack.c.l.s4 1983009808
      %v1998 = vunpack.c.0.s8 %v1997
      %v1999 = vlaneseq
      %v2000 = vshrl.u32 %v1999, 7
      %v2001 = vsub.s32 %v1998, %v2000
      %v2002 = vrot.slane %v1988, %v2001
      %v2003 = vcombine.high %v1995, %v1995
      %v2004 = vcombine.high %v2002, %v2002
      %v2006 = vunpack.c.l.s4 1983009808
      %v2007 = vunpack.c.0.s8 %v2006
      %v2008 = vlaneseq
      %v2009 = vshrl.u32 %v2008, 7
      %v2010 = vsub.s32 %v2007, %v2009
      %v2011 = vrot.slane %v298, %v2010
      %v2012 = vcombine.low %v822, %v832
      %v2013 = vcombine.low %v839, %v849
      %v2014 = vcombine.low %v856, %v866
      %v2015 = vcombine.low %v873, %v883
      %v2016 = vcombine.low %v890, %v900
      %v2017 = vcombine.low %v907, %v917
      %v2018 = vcombine.low %v924, %v934
      %v2019 = vcombine.low %v941, %v951
      %v2020 = vcombine.low %v958, %v968
      %v2021 = vcombine.low %v975, %v985
      %v2022 = vcombine.low %v992, %v1002
      %v2023 = vcombine.low %v1009, %v1019
      %v2024 = vcombine.low %v1026, %v1036
      %v2025 = vcombine.low %v1043, %v1053
      %v2026 = vcombine.low %v1060, %v1070
      %v2027 = vcombine.low %v1077, %v1087
      %v2028 = vcombine.low %v1094, %v1104
      %v2029 = vcombine.low %v1111, %v1120
      %v2030 = vcombine.low %v1168, %v1176
      %v2031 = vcombine.low %v1175, %v1177
      %v2033 = vunpack.c.l.s4 1983009808
      %v2034 = vunpack.c.0.s8 %v2033
      %v2035 = vlaneseq
      %v2036 = vshrl.u32 %v2035, 7
      %v2037 = vsub.s32 %v2034, %v2036
      %v2038 = vrot.slane %v2030, %v2037
      %v2040 = vunpack.c.l.s4 1983009808
      %v2041 = vunpack.c.0.s8 %v2040
      %v2042 = vlaneseq
      %v2043 = vshrl.u32 %v2042, 7
      %v2044 = vsub.s32 %v2041, %v2043
      %v2045 = vrot.slane %v2031, %v2044
      %v2046 = vcombine.low %v2038, %v2045
      %v2047 = vcombine.low %v1185, %v1193
      %v2048 = vcombine.low %v1192, %v1194
      %v2050 = vunpack.c.l.s4 1983009808
      %v2051 = vunpack.c.0.s8 %v2050
      %v2052 = vlaneseq
      %v2053 = vshrl.u32 %v2052, 7
      %v2054 = vsub.s32 %v2051, %v2053
      %v2055 = vrot.slane %v2047, %v2054
      %v2057 = vunpack.c.l.s4 1983009808
      %v2058 = vunpack.c.0.s8 %v2057
      %v2059 = vlaneseq
      %v2060 = vshrl.u32 %v2059, 7
      %v2061 = vsub.s32 %v2058, %v2060
      %v2062 = vrot.slane %v2048, %v2061
      %v2063 = vcombine.low %v2055, %v2062
      %v2064 = vcombine.low %v1201, %v1978
      %v2065 = vcombine.low %v1986, %v1985
      %v2067 = vunpack.c.l.s4 1983009808
      %v2068 = vunpack.c.0.s8 %v2067
      %v2069 = vlaneseq
      %v2070 = vshrl.u32 %v2069, 7
      %v2071 = vsub.s32 %v2068, %v2070
      %v2072 = vrot.slane %v2064, %v2071
      %v2074 = vunpack.c.l.s4 1983009808
      %v2075 = vunpack.c.0.s8 %v2074
      %v2076 = vlaneseq
      %v2077 = vshrl.u32 %v2076, 7
      %v2078 = vsub.s32 %v2075, %v2077
      %v2079 = vrot.slane %v2065, %v2078
      %v2080 = vcombine.low %v2072, %v2079
      %v2081 = vcombine.low %v1987, %v1995
      %v2082 = vcombine.low %v2003, %v2002
      %v2084 = vunpack.c.l.s4 1983009808
      %v2085 = vunpack.c.0.s8 %v2084
      %v2086 = vlaneseq
      %v2087 = vshrl.u32 %v2086, 7
      %v2088 = vsub.s32 %v2085, %v2087
      %v2089 = vrot.slane %v2081, %v2088
      %v2091 = vunpack.c.l.s4 1983009808
      %v2092 = vunpack.c.0.s8 %v2091
      %v2093 = vlaneseq
      %v2094 = vshrl.u32 %v2093, 7
      %v2095 = vsub.s32 %v2092, %v2094
      %v2096 = vrot.slane %v2082, %v2095
      %v2097 = vcombine.low %v2089, %v2096
      %v2098 = vcombine.low %v2004, %v2011
      %v2100 = vunpack.c.l.s4 1983009808
      %v2101 = vunpack.c.0.s8 %v2100
      %v2102 = vlaneseq
      %v2103 = vshrl.u32 %v2102, 7
      %v2104 = vsub.s32 %v2101, %v2103
      %v2105 = vrot.slane %v2098, %v2104
      %v2129 = vpack.c.bf16 %v2013, %v2012
      %v2130 = vpack.c.bf16 %v2015, %v2014
      %v2131 = vpack.c.bf16 %v2017, %v2016
      %v2132 = vpack.c.bf16 %v2019, %v2018
      %v2133 = vpack.c.bf16 %v2021, %v2020
      %v2134 = vpack.c.bf16 %v2023, %v2022
      %v2135 = vpack.c.bf16 %v2025, %v2024
      %v2136 = vpack.c.bf16 %v2027, %v2026
      %v2137 = vpack.c.bf16 %v2029, %v2028
      %v2138 = vpack.c.bf16 %v2063, %v2046
      %v2139 = vpack.c.bf16 %v2097, %v2080
      %v2140 = vpack.c.bf16 %v2105, %v2105
      %s2141 = scalar_lea.vmem %s1, 16
      %v2142 = vld [vmem:[%s2141] sm:$0xf]
      %v2143 = vld [vmem:[%s2141 + $0x4] sm:$0x3]
      %v2146 = vunpack.c.l.b16 %v2142
      %v2147 = vunpack.c.l.b16 %v2143
      %v2148 = vpack.c.b16 %v2147, %v2146
      %v2150 = vsel %vm1627, %v2129, 0
      %v2153 = vsel %vm1627, %v2130, 0
      %v2156 = vsel %vm1627, %v2131, 0
      %v2159 = vsel %vm1627, %v2132, 0
      %v2162 = vsel %vm1627, %v2133, 0
      %v2165 = vsel %vm1627, %v2134, 0
      %v2168 = vsel %vm1627, %v2135, 0
      %v2171 = vsel %vm1627, %v2136, 0
      %v2174 = vsel %vm1627, %v2137, 0
      %v2177 = vsel %vm1627, %v2138, 0
      %v2180 = vsel %vm1627, %v2139, 0
      %v2183 = vsel %vm1627, %v2140, 0
      %v2186 = vsel %vm1664, %v2148, 0
      %2188 = vmatprep.subr.bf16.mxu0 0
      %2189 = vmatpush1.bf16.msra.mxu0 %v2186
      %2190 = vmatprep.subr.bf16.mxu0 0
      %2191 = vmatpush1.bf16.msra.mxu0 0
      %2192 = vmatprep.subr.bf16.mxu0 0
      %2193 = vmatpush1.bf16.msra.mxu0 0
      %2194 = vmatprep.subr.bf16.mxu0 0
      %2195 = vmatpush1.bf16.msra.mxu0 0
      %2196 = vmatprep.subr.bf16.mxu0 0
      %2197 = vmatpush1.bf16.msra.mxu0 0
      %2198 = vmatprep.subr.bf16.mxu0 0
      %2199 = vmatpush1.bf16.msra.mxu0 0
      %2200 = vmatprep.subr.bf16.mxu0 0
      %2201 = vmatpush1.bf16.msra.mxu0 0
      %2202 = vmatprep.subr.bf16.mxu0 0
      %2203 = vmatpush1.bf16.msra.mxu0 0
      %2204 = vmatprep.subr.bf16.mxu0 0
      %2205 = vmatpush1.bf16.msra.mxu0 0
      %2206 = vmatprep.subr.bf16.mxu0 0
      %2207 = vmatpush1.bf16.msra.mxu0 0
      %2208 = vmatprep.subr.bf16.mxu0 0
      %2209 = vmatpush1.bf16.msra.mxu0 0
      %2210 = vmatprep.subr.bf16.mxu0 0
      %2211 = vmatpush1.bf16.msra.mxu0 0
      %2212 = vmatprep.subr.bf16.mxu0 0
      %2213 = vmatpush1.bf16.msra.mxu0 0
      %2214 = vmatprep.subr.bf16.mxu0 0
      %2215 = vmatpush1.bf16.msra.mxu0 0
      %2216 = vmatprep.subr.bf16.mxu0 0
      %2217 = vmatpush1.bf16.msra.mxu0 0
      %2218 = vmatprep.subr.bf16.mxu0 0
      %2219 = vmatpush1.bf16.msra.mxu0 0
      %2220 = vmatprep.mubr.bf16.mxu0 0
      %2221 = vmatmul.mubr.bf16.gmra.mrb[0].mxu0 %v2150
      %v2222 = vpop.f32.mrb[0].mxu0
      %v2223 = vadd.f32 0.0, %v2222
      %v2224 = vpop.f32.mrb[0].mxu0
      %v2225 = vpop.f32.mrb[0].mxu0
      %v2226 = vadd.f32 0.0, %v2225
      %v2227 = vpop.f32.mrb[0].mxu0
      %2228 = vmatprep.mubr.bf16.mxu0 0
      %2229 = vmatmul.mubr.bf16.gmra.mrb[0].mxu0 %v2153
      %v2230 = vpop.f32.mrb[0].mxu0
      %v2231 = vadd.f32 0.0, %v2230
      %v2232 = vpop.f32.mrb[0].mxu0
      %v2233 = vpop.f32.mrb[0].mxu0
      %v2234 = vadd.f32 0.0, %v2233
      %v2235 = vpop.f32.mrb[0].mxu0
      %2236 = vmatprep.mubr.bf16.mxu0 0
      %2237 = vmatmul.mubr.bf16.gmra.mrb[0].mxu0 %v2156
      %v2238 = vpop.f32.mrb[0].mxu0
      %v2239 = vadd.f32 0.0, %v2238
      %v2240 = vpop.f32.mrb[0].mxu0
      %v2241 = vpop.f32.mrb[0].mxu0
      %v2242 = vadd.f32 0.0, %v2241
      %v2243 = vpop.f32.mrb[0].mxu0
      %2244 = vmatprep.mubr.bf16.mxu0 0
      %2245 = vmatmul.mubr.bf16.gmra.mrb[0].mxu0 %v2159
      %v2246 = vpop.f32.mrb[0].mxu0
      %v2247 = vadd.f32 0.0, %v2246
      %v2248 = vpop.f32.mrb[0].mxu0
      %v2249 = vpop.f32.mrb[0].mxu0
      %v2250 = vadd.f32 0.0, %v2249
      %v2251 = vpop.f32.mrb[0].mxu0
      %2252 = vmatprep.mubr.bf16.mxu0 0
      %2253 = vmatmul.mubr.bf16.gmra.mrb[0].mxu0 %v2162
      %v2254 = vpop.f32.mrb[0].mxu0
      %v2255 = vadd.f32 0.0, %v2254
      %v2256 = vpop.f32.mrb[0].mxu0
      %v2257 = vpop.f32.mrb[0].mxu0
      %v2258 = vadd.f32 0.0, %v2257
      %v2259 = vpop.f32.mrb[0].mxu0
      %2260 = vmatprep.mubr.bf16.mxu0 0
      %2261 = vmatmul.mubr.bf16.gmra.mrb[0].mxu0 %v2165
      %v2262 = vpop.f32.mrb[0].mxu0
      %v2263 = vadd.f32 0.0, %v2262
      %v2264 = vpop.f32.mrb[0].mxu0
      %v2265 = vpop.f32.mrb[0].mxu0
      %v2266 = vadd.f32 0.0, %v2265
      %v2267 = vpop.f32.mrb[0].mxu0
      %2268 = vmatprep.mubr.bf16.mxu0 0
      %2269 = vmatmul.mubr.bf16.gmra.mrb[0].mxu0 %v2168
      %v2270 = vpop.f32.mrb[0].mxu0
      %v2271 = vadd.f32 0.0, %v2270
      %v2272 = vpop.f32.mrb[0].mxu0
      %v2273 = vpop.f32.mrb[0].mxu0
      %v2274 = vadd.f32 0.0, %v2273
      %v2275 = vpop.f32.mrb[0].mxu0
      %2276 = vmatprep.mubr.bf16.mxu0 0
      %2277 = vmatmul.mubr.bf16.gmra.mrb[0].mxu0 %v2171
      %v2278 = vpop.f32.mrb[0].mxu0
      %v2279 = vadd.f32 0.0, %v2278
      %v2280 = vpop.f32.mrb[0].mxu0
      %v2281 = vpop.f32.mrb[0].mxu0
      %v2282 = vadd.f32 0.0, %v2281
      %v2283 = vpop.f32.mrb[0].mxu0
      %2284 = vmatprep.mubr.bf16.mxu0 0
      %2285 = vmatmul.mubr.bf16.gmra.mrb[0].mxu0 %v2174
      %v2286 = vpop.f32.mrb[0].mxu0
      %v2287 = vadd.f32 0.0, %v2286
      %v2288 = vpop.f32.mrb[0].mxu0
      %v2289 = vpop.f32.mrb[0].mxu0
      %v2290 = vadd.f32 0.0, %v2289
      %v2291 = vpop.f32.mrb[0].mxu0
      %2292 = vmatprep.mubr.bf16.mxu0 0
      %2293 = vmatmul.mubr.bf16.gmra.mrb[0].mxu0 %v2177
      %v2294 = vpop.f32.mrb[0].mxu0
      %v2295 = vadd.f32 0.0, %v2294
      %v2296 = vpop.f32.mrb[0].mxu0
      %v2297 = vpop.f32.mrb[0].mxu0
      %v2298 = vadd.f32 0.0, %v2297
      %v2299 = vpop.f32.mrb[0].mxu0
      %2300 = vmatprep.mubr.bf16.mxu0 0
      %2301 = vmatmul.mubr.bf16.gmra.mrb[0].mxu0 %v2180
      %v2302 = vpop.f32.mrb[0].mxu0
      %v2303 = vadd.f32 0.0, %v2302
      %v2304 = vpop.f32.mrb[0].mxu0
      %v2305 = vpop.f32.mrb[0].mxu0
      %v2306 = vadd.f32 0.0, %v2305
      %v2307 = vpop.f32.mrb[0].mxu0
      %2308 = vmatprep.mubr.bf16.mxu0 0
      %2309 = vmatmul.mubr.bf16.gmra.mrb[0].mxu0 %v2183
      %v2310 = vpop.f32.mrb[0].mxu0
      %v2311 = vadd.f32 0.0, %v2310
      %v2312 = vpop.f32.mrb[0].mxu0
      %v2313 = vpop.f32.mrb[0].mxu0
      %v2314 = vpop.f32.mrb[0].mxu0
      %2315 = vdwg.mxu0
      %v2316 = vadd.f32 %v1875, %v2223
      %v2317 = vadd.f32 %v1878, %v2226
      %v2318 = vadd.f32 %v1883, %v2231
      %v2319 = vadd.f32 %v1886, %v2234
      %v2320 = vadd.f32 %v1891, %v2239
      %v2321 = vadd.f32 %v1894, %v2242
      %v2322 = vadd.f32 %v1899, %v2247
      %v2323 = vadd.f32 %v1902, %v2250
      %v2324 = vadd.f32 %v1907, %v2255
      %v2325 = vadd.f32 %v1910, %v2258
      %v2326 = vadd.f32 %v1915, %v2263
      %v2327 = vadd.f32 %v1918, %v2266
      %v2328 = vadd.f32 %v1923, %v2271
      %v2329 = vadd.f32 %v1926, %v2274
      %v2330 = vadd.f32 %v1931, %v2279
      %v2331 = vadd.f32 %v1934, %v2282
      %v2332 = vadd.f32 %v1939, %v2287
      %v2333 = vadd.f32 %v1942, %v2290
      %v2334 = vadd.f32 %v1947, %v2295
      %v2335 = vadd.f32 %v1950, %v2298
      %v2336 = vadd.f32 %v1955, %v2303
      %v2337 = vadd.f32 %v1958, %v2306
      %v2338 = vadd.f32 %v1963, %v2311
      %v2339 = vld [vmem:[%s2] sm:$0x1]
      %v2341 = vlaneseq
      %v2342 = vshrl.u32 %v2341, 7
      %v2343 = vsub.s32 0, %v2342
      %v2344 = vrot.slane %v2339, %v2343
      %v2346 = vadd.f32 %v2316, %v2344
      %v2347 = vadd.f32 %v2317, %v2344
      %v2348 = vadd.f32 %v2318, %v2344
      %v2349 = vadd.f32 %v2319, %v2344
      %v2350 = vadd.f32 %v2320, %v2344
      %v2351 = vadd.f32 %v2321, %v2344
      %v2352 = vadd.f32 %v2322, %v2344
      %v2353 = vadd.f32 %v2323, %v2344
      %v2354 = vadd.f32 %v2324, %v2344
      %v2355 = vadd.f32 %v2325, %v2344
      %v2356 = vadd.f32 %v2326, %v2344
      %v2357 = vadd.f32 %v2327, %v2344
      %v2358 = vadd.f32 %v2328, %v2344
      %v2359 = vadd.f32 %v2329, %v2344
      %v2360 = vadd.f32 %v2330, %v2344
      %v2361 = vadd.f32 %v2331, %v2344
      %v2362 = vadd.f32 %v2332, %v2344
      %v2363 = vadd.f32 %v2333, %v2344
      %v2364 = vadd.f32 %v2334, %v2344
      %v2365 = vadd.f32 %v2335, %v2344
      %v2366 = vadd.f32 %v2336, %v2344
      %v2367 = vadd.f32 %v2337, %v2344
      %v2368 = vadd.f32 %v2338, %v2344
      %v2369 = vmax.f32 %v2346, 0.0
      %v2370 = vmax.f32 %v2347, 0.0
      %v2371 = vmax.f32 %v2348, 0.0
      %v2372 = vmax.f32 %v2349, 0.0
      %v2373 = vmax.f32 %v2350, 0.0
      %v2374 = vmax.f32 %v2351, 0.0
      %v2375 = vmax.f32 %v2352, 0.0
      %v2376 = vmax.f32 %v2353, 0.0
      %v2377 = vmax.f32 %v2354, 0.0
      %v2378 = vmax.f32 %v2355, 0.0
      %v2379 = vmax.f32 %v2356, 0.0
      %v2380 = vmax.f32 %v2357, 0.0
      %v2381 = vmax.f32 %v2358, 0.0
      %v2382 = vmax.f32 %v2359, 0.0
      %v2383 = vmax.f32 %v2360, 0.0
      %v2384 = vmax.f32 %v2361, 0.0
      %v2385 = vmax.f32 %v2362, 0.0
      %v2386 = vmax.f32 %v2363, 0.0
      %v2387 = vmax.f32 %v2364, 0.0
      %v2388 = vmax.f32 %v2365, 0.0
      %v2389 = vmax.f32 %v2366, 0.0
      %v2390 = vmax.f32 %v2367, 0.0
      %v2391 = vmax.f32 %v2368, 0.0
      %v2415 = vcombine.high %v2369, %v2369
      %v2417 = vunpack.c.l.s4 1983009808
      %v2418 = vunpack.c.0.s8 %v2417
      %v2419 = vlaneseq
      %v2420 = vshrl.u32 %v2419, 7
      %v2421 = vsub.s32 %v2418, %v2420
      %v2422 = vrot.slane %v2369, %v2421
      %v2424 = vunpack.c.l.s4 1983009808
      %v2425 = vunpack.c.0.s8 %v2424
      %v2426 = vlaneseq
      %v2427 = vshrl.u32 %v2426, 7
      %v2428 = vsub.s32 %v2425, %v2427
      %v2429 = vrot.slane %v2415, %v2428
      %v2430 = vcombine.high %v2422, %v2422
      %v2431 = vcombine.high %v2429, %v2429
      %v2432 = vcombine.high %v2370, %v2370
      %v2434 = vunpack.c.l.s4 1983009808
      %v2435 = vunpack.c.0.s8 %v2434
      %v2436 = vlaneseq
      %v2437 = vshrl.u32 %v2436, 7
      %v2438 = vsub.s32 %v2435, %v2437
      %v2439 = vrot.slane %v2370, %v2438
      %v2441 = vunpack.c.l.s4 1983009808
      %v2442 = vunpack.c.0.s8 %v2441
      %v2443 = vlaneseq
      %v2444 = vshrl.u32 %v2443, 7
      %v2445 = vsub.s32 %v2442, %v2444
      %v2446 = vrot.slane %v2432, %v2445
      %v2447 = vcombine.high %v2439, %v2439
      %v2448 = vcombine.high %v2446, %v2446
      %v2449 = vcombine.high %v2371, %v2371
      %v2451 = vunpack.c.l.s4 1983009808
      %v2452 = vunpack.c.0.s8 %v2451
      %v2453 = vlaneseq
      %v2454 = vshrl.u32 %v2453, 7
      %v2455 = vsub.s32 %v2452, %v2454
      %v2456 = vrot.slane %v2371, %v2455
      %v2458 = vunpack.c.l.s4 1983009808
      %v2459 = vunpack.c.0.s8 %v2458
      %v2460 = vlaneseq
      %v2461 = vshrl.u32 %v2460, 7
      %v2462 = vsub.s32 %v2459, %v2461
      %v2463 = vrot.slane %v2449, %v2462
      %v2464 = vcombine.high %v2456, %v2456
      %v2465 = vcombine.high %v2463, %v2463
      %v2466 = vcombine.high %v2372, %v2372
      %v2468 = vunpack.c.l.s4 1983009808
      %v2469 = vunpack.c.0.s8 %v2468
      %v2470 = vlaneseq
      %v2471 = vshrl.u32 %v2470, 7
      %v2472 = vsub.s32 %v2469, %v2471
      %v2473 = vrot.slane %v2372, %v2472
      %v2475 = vunpack.c.l.s4 1983009808
      %v2476 = vunpack.c.0.s8 %v2475
      %v2477 = vlaneseq
      %v2478 = vshrl.u32 %v2477, 7
      %v2479 = vsub.s32 %v2476, %v2478
      %v2480 = vrot.slane %v2466, %v2479
      %v2481 = vcombine.high %v2473, %v2473
      %v2482 = vcombine.high %v2480, %v2480
      %v2483 = vcombine.high %v2373, %v2373
      %v2485 = vunpack.c.l.s4 1983009808
      %v2486 = vunpack.c.0.s8 %v2485
      %v2487 = vlaneseq
      %v2488 = vshrl.u32 %v2487, 7
      %v2489 = vsub.s32 %v2486, %v2488
      %v2490 = vrot.slane %v2373, %v2489
      %v2492 = vunpack.c.l.s4 1983009808
      %v2493 = vunpack.c.0.s8 %v2492
      %v2494 = vlaneseq
      %v2495 = vshrl.u32 %v2494, 7
      %v2496 = vsub.s32 %v2493, %v2495
      %v2497 = vrot.slane %v2483, %v2496
      %v2498 = vcombine.high %v2490, %v2490
      %v2499 = vcombine.high %v2497, %v2497
      %v2500 = vcombine.high %v2374, %v2374
      %v2502 = vunpack.c.l.s4 1983009808
      %v2503 = vunpack.c.0.s8 %v2502
      %v2504 = vlaneseq
      %v2505 = vshrl.u32 %v2504, 7
      %v2506 = vsub.s32 %v2503, %v2505
      %v2507 = vrot.slane %v2374, %v2506
      %v2509 = vunpack.c.l.s4 1983009808
      %v2510 = vunpack.c.0.s8 %v2509
      %v2511 = vlaneseq
      %v2512 = vshrl.u32 %v2511, 7
      %v2513 = vsub.s32 %v2510, %v2512
      %v2514 = vrot.slane %v2500, %v2513
      %v2515 = vcombine.high %v2507, %v2507
      %v2516 = vcombine.high %v2514, %v2514
      %v2517 = vcombine.high %v2375, %v2375
      %v2519 = vunpack.c.l.s4 1983009808
      %v2520 = vunpack.c.0.s8 %v2519
      %v2521 = vlaneseq
      %v2522 = vshrl.u32 %v2521, 7
      %v2523 = vsub.s32 %v2520, %v2522
      %v2524 = vrot.slane %v2375, %v2523
      %v2526 = vunpack.c.l.s4 1983009808
      %v2527 = vunpack.c.0.s8 %v2526
      %v2528 = vlaneseq
      %v2529 = vshrl.u32 %v2528, 7
      %v2530 = vsub.s32 %v2527, %v2529
      %v2531 = vrot.slane %v2517, %v2530
      %v2532 = vcombine.high %v2524, %v2524
      %v2533 = vcombine.high %v2531, %v2531
      %v2534 = vcombine.high %v2376, %v2376
      %v2536 = vunpack.c.l.s4 1983009808
      %v2537 = vunpack.c.0.s8 %v2536
      %v2538 = vlaneseq
      %v2539 = vshrl.u32 %v2538, 7
      %v2540 = vsub.s32 %v2537, %v2539
      %v2541 = vrot.slane %v2376, %v2540
      %v2543 = vunpack.c.l.s4 1983009808
      %v2544 = vunpack.c.0.s8 %v2543
      %v2545 = vlaneseq
      %v2546 = vshrl.u32 %v2545, 7
      %v2547 = vsub.s32 %v2544, %v2546
      %v2548 = vrot.slane %v2534, %v2547
      %v2549 = vcombine.high %v2541, %v2541
      %v2550 = vcombine.high %v2548, %v2548
      %v2551 = vcombine.high %v2377, %v2377
      %v2553 = vunpack.c.l.s4 1983009808
      %v2554 = vunpack.c.0.s8 %v2553
      %v2555 = vlaneseq
      %v2556 = vshrl.u32 %v2555, 7
      %v2557 = vsub.s32 %v2554, %v2556
      %v2558 = vrot.slane %v2377, %v2557
      %v2560 = vunpack.c.l.s4 1983009808
      %v2561 = vunpack.c.0.s8 %v2560
      %v2562 = vlaneseq
      %v2563 = vshrl.u32 %v2562, 7
      %v2564 = vsub.s32 %v2561, %v2563
      %v2565 = vrot.slane %v2551, %v2564
      %v2566 = vcombine.high %v2558, %v2558
      %v2567 = vcombine.high %v2565, %v2565
      %v2568 = vcombine.high %v2378, %v2378
      %v2570 = vunpack.c.l.s4 1983009808
      %v2571 = vunpack.c.0.s8 %v2570
      %v2572 = vlaneseq
      %v2573 = vshrl.u32 %v2572, 7
      %v2574 = vsub.s32 %v2571, %v2573
      %v2575 = vrot.slane %v2378, %v2574
      %v2577 = vunpack.c.l.s4 1983009808
      %v2578 = vunpack.c.0.s8 %v2577
      %v2579 = vlaneseq
      %v2580 = vshrl.u32 %v2579, 7
      %v2581 = vsub.s32 %v2578, %v2580
      %v2582 = vrot.slane %v2568, %v2581
      %v2583 = vcombine.high %v2575, %v2575
      %v2584 = vcombine.high %v2582, %v2582
      %v2585 = vcombine.high %v2379, %v2379
      %v2587 = vunpack.c.l.s4 1983009808
      %v2588 = vunpack.c.0.s8 %v2587
      %v2589 = vlaneseq
      %v2590 = vshrl.u32 %v2589, 7
      %v2591 = vsub.s32 %v2588, %v2590
      %v2592 = vrot.slane %v2379, %v2591
      %v2594 = vunpack.c.l.s4 1983009808
      %v2595 = vunpack.c.0.s8 %v2594
      %v2596 = vlaneseq
      %v2597 = vshrl.u32 %v2596, 7
      %v2598 = vsub.s32 %v2595, %v2597
      %v2599 = vrot.slane %v2585, %v2598
      %v2600 = vcombine.high %v2592, %v2592
      %v2601 = vcombine.high %v2599, %v2599
      %v2602 = vcombine.high %v2380, %v2380
      %v2604 = vunpack.c.l.s4 1983009808
      %v2605 = vunpack.c.0.s8 %v2604
      %v2606 = vlaneseq
      %v2607 = vshrl.u32 %v2606, 7
      %v2608 = vsub.s32 %v2605, %v2607
      %v2609 = vrot.slane %v2380, %v2608
      %v2611 = vunpack.c.l.s4 1983009808
      %v2612 = vunpack.c.0.s8 %v2611
      %v2613 = vlaneseq
      %v2614 = vshrl.u32 %v2613, 7
      %v2615 = vsub.s32 %v2612, %v2614
      %v2616 = vrot.slane %v2602, %v2615
      %v2617 = vcombine.high %v2609, %v2609
      %v2618 = vcombine.high %v2616, %v2616
      %v2619 = vcombine.high %v2381, %v2381
      %v2621 = vunpack.c.l.s4 1983009808
      %v2622 = vunpack.c.0.s8 %v2621
      %v2623 = vlaneseq
      %v2624 = vshrl.u32 %v2623, 7
      %v2625 = vsub.s32 %v2622, %v2624
      %v2626 = vrot.slane %v2381, %v2625
      %v2628 = vunpack.c.l.s4 1983009808
      %v2629 = vunpack.c.0.s8 %v2628
      %v2630 = vlaneseq
      %v2631 = vshrl.u32 %v2630, 7
      %v2632 = vsub.s32 %v2629, %v2631
      %v2633 = vrot.slane %v2619, %v2632
      %v2634 = vcombine.high %v2626, %v2626
      %v2635 = vcombine.high %v2633, %v2633
      %v2636 = vcombine.high %v2382, %v2382
      %v2638 = vunpack.c.l.s4 1983009808
      %v2639 = vunpack.c.0.s8 %v2638
      %v2640 = vlaneseq
      %v2641 = vshrl.u32 %v2640, 7
      %v2642 = vsub.s32 %v2639, %v2641
      %v2643 = vrot.slane %v2382, %v2642
      %v2645 = vunpack.c.l.s4 1983009808
      %v2646 = vunpack.c.0.s8 %v2645
      %v2647 = vlaneseq
      %v2648 = vshrl.u32 %v2647, 7
      %v2649 = vsub.s32 %v2646, %v2648
      %v2650 = vrot.slane %v2636, %v2649
      %v2651 = vcombine.high %v2643, %v2643
      %v2652 = vcombine.high %v2650, %v2650
      %v2653 = vcombine.high %v2383, %v2383
      %v2655 = vunpack.c.l.s4 1983009808
      %v2656 = vunpack.c.0.s8 %v2655
      %v2657 = vlaneseq
      %v2658 = vshrl.u32 %v2657, 7
      %v2659 = vsub.s32 %v2656, %v2658
      %v2660 = vrot.slane %v2383, %v2659
      %v2662 = vunpack.c.l.s4 1983009808
      %v2663 = vunpack.c.0.s8 %v2662
      %v2664 = vlaneseq
      %v2665 = vshrl.u32 %v2664, 7
      %v2666 = vsub.s32 %v2663, %v2665
      %v2667 = vrot.slane %v2653, %v2666
      %v2668 = vcombine.high %v2660, %v2660
      %v2669 = vcombine.high %v2667, %v2667
      %v2670 = vcombine.high %v2384, %v2384
      %v2672 = vunpack.c.l.s4 1983009808
      %v2673 = vunpack.c.0.s8 %v2672
      %v2674 = vlaneseq
      %v2675 = vshrl.u32 %v2674, 7
      %v2676 = vsub.s32 %v2673, %v2675
      %v2677 = vrot.slane %v2384, %v2676
      %v2679 = vunpack.c.l.s4 1983009808
      %v2680 = vunpack.c.0.s8 %v2679
      %v2681 = vlaneseq
      %v2682 = vshrl.u32 %v2681, 7
      %v2683 = vsub.s32 %v2680, %v2682
      %v2684 = vrot.slane %v2670, %v2683
      %v2685 = vcombine.high %v2677, %v2677
      %v2686 = vcombine.high %v2684, %v2684
      %v2687 = vcombine.high %v2385, %v2385
      %v2689 = vunpack.c.l.s4 1983009808
      %v2690 = vunpack.c.0.s8 %v2689
      %v2691 = vlaneseq
      %v2692 = vshrl.u32 %v2691, 7
      %v2693 = vsub.s32 %v2690, %v2692
      %v2694 = vrot.slane %v2385, %v2693
      %v2696 = vunpack.c.l.s4 1983009808
      %v2697 = vunpack.c.0.s8 %v2696
      %v2698 = vlaneseq
      %v2699 = vshrl.u32 %v2698, 7
      %v2700 = vsub.s32 %v2697, %v2699
      %v2701 = vrot.slane %v2687, %v2700
      %v2702 = vcombine.high %v2694, %v2694
      %v2703 = vcombine.high %v2701, %v2701
      %v2704 = vcombine.high %v2386, %v2386
      %v2706 = vunpack.c.l.s4 1983009808
      %v2707 = vunpack.c.0.s8 %v2706
      %v2708 = vlaneseq
      %v2709 = vshrl.u32 %v2708, 7
      %v2710 = vsub.s32 %v2707, %v2709
      %v2711 = vrot.slane %v2386, %v2710
      %v2713 = vunpack.c.l.s4 1983009808
      %v2714 = vunpack.c.0.s8 %v2713
      %v2715 = vlaneseq
      %v2716 = vshrl.u32 %v2715, 7
      %v2717 = vsub.s32 %v2714, %v2716
      %v2718 = vrot.slane %v2704, %v2717
      %v2719 = vcombine.high %v2711, %v2711
      %v2720 = vcombine.high %v2718, %v2718
      %v2721 = vcombine.high %v2387, %v2387
      %v2723 = vunpack.c.l.s4 1983009808
      %v2724 = vunpack.c.0.s8 %v2723
      %v2725 = vlaneseq
      %v2726 = vshrl.u32 %v2725, 7
      %v2727 = vsub.s32 %v2724, %v2726
      %v2728 = vrot.slane %v2387, %v2727
      %v2730 = vunpack.c.l.s4 1983009808
      %v2731 = vunpack.c.0.s8 %v2730
      %v2732 = vlaneseq
      %v2733 = vshrl.u32 %v2732, 7
      %v2734 = vsub.s32 %v2731, %v2733
      %v2735 = vrot.slane %v2721, %v2734
      %v2736 = vcombine.high %v2728, %v2728
      %v2737 = vcombine.high %v2735, %v2735
      %v2738 = vcombine.high %v2388, %v2388
      %v2740 = vunpack.c.l.s4 1983009808
      %v2741 = vunpack.c.0.s8 %v2740
      %v2742 = vlaneseq
      %v2743 = vshrl.u32 %v2742, 7
      %v2744 = vsub.s32 %v2741, %v2743
      %v2745 = vrot.slane %v2388, %v2744
      %v2747 = vunpack.c.l.s4 1983009808
      %v2748 = vunpack.c.0.s8 %v2747
      %v2749 = vlaneseq
      %v2750 = vshrl.u32 %v2749, 7
      %v2751 = vsub.s32 %v2748, %v2750
      %v2752 = vrot.slane %v2738, %v2751
      %v2753 = vcombine.high %v2745, %v2745
      %v2754 = vcombine.high %v2752, %v2752
      %v2755 = vcombine.high %v2389, %v2389
      %v2757 = vunpack.c.l.s4 1983009808
      %v2758 = vunpack.c.0.s8 %v2757
      %v2759 = vlaneseq
      %v2760 = vshrl.u32 %v2759, 7
      %v2761 = vsub.s32 %v2758, %v2760
      %v2762 = vrot.slane %v2389, %v2761
      %v2764 = vunpack.c.l.s4 1983009808
      %v2765 = vunpack.c.0.s8 %v2764
      %v2766 = vlaneseq
      %v2767 = vshrl.u32 %v2766, 7
      %v2768 = vsub.s32 %v2765, %v2767
      %v2769 = vrot.slane %v2755, %v2768
      %v2770 = vcombine.high %v2762, %v2762
      %v2771 = vcombine.high %v2769, %v2769
      %v2772 = vcombine.high %v2390, %v2390
      %v2774 = vunpack.c.l.s4 1983009808
      %v2775 = vunpack.c.0.s8 %v2774
      %v2776 = vlaneseq
      %v2777 = vshrl.u32 %v2776, 7
      %v2778 = vsub.s32 %v2775, %v2777
      %v2779 = vrot.slane %v2390, %v2778
      %v2781 = vunpack.c.l.s4 1983009808
      %v2782 = vunpack.c.0.s8 %v2781
      %v2783 = vlaneseq
      %v2784 = vshrl.u32 %v2783, 7
      %v2785 = vsub.s32 %v2782, %v2784
      %v2786 = vrot.slane %v2772, %v2785
      %v2787 = vcombine.high %v2779, %v2779
      %v2788 = vcombine.high %v2786, %v2786
      %v2790 = vunpack.c.l.s4 1983009808
      %v2791 = vunpack.c.0.s8 %v2790
      %v2792 = vlaneseq
      %v2793 = vshrl.u32 %v2792, 7
      %v2794 = vsub.s32 %v2791, %v2793
      %v2795 = vrot.slane %v2391, %v2794
      %v2796 = vcombine.high %v2795, %v2795
      %v2797 = vcombine.low %v2422, %v2430
      %v2798 = vcombine.low %v2429, %v2431
      %v2800 = vunpack.c.l.s4 1983009808
      %v2801 = vunpack.c.0.s8 %v2800
      %v2802 = vlaneseq
      %v2803 = vshrl.u32 %v2802, 7
      %v2804 = vsub.s32 %v2801, %v2803
      %v2805 = vrot.slane %v2797, %v2804
      %v2807 = vunpack.c.l.s4 1983009808
      %v2808 = vunpack.c.0.s8 %v2807
      %v2809 = vlaneseq
      %v2810 = vshrl.u32 %v2809, 7
      %v2811 = vsub.s32 %v2808, %v2810
      %v2812 = vrot.slane %v2798, %v2811
      %v2813 = vcombine.low %v2805, %v2812
      %v2814 = vcombine.low %v2439, %v2447
      %v2815 = vcombine.low %v2446, %v2448
      %v2817 = vunpack.c.l.s4 1983009808
      %v2818 = vunpack.c.0.s8 %v2817
      %v2819 = vlaneseq
      %v2820 = vshrl.u32 %v2819, 7
      %v2821 = vsub.s32 %v2818, %v2820
      %v2822 = vrot.slane %v2814, %v2821
      %v2824 = vunpack.c.l.s4 1983009808
      %v2825 = vunpack.c.0.s8 %v2824
      %v2826 = vlaneseq
      %v2827 = vshrl.u32 %v2826, 7
      %v2828 = vsub.s32 %v2825, %v2827
      %v2829 = vrot.slane %v2815, %v2828
      %v2830 = vcombine.low %v2822, %v2829
      %v2832 = vunpack.c.l.s4 1983009808
      %v2833 = vunpack.c.0.s8 %v2832
      %v2834 = vlaneseq
      %v2835 = vshrl.u32 %v2834, 7
      %v2836 = vsub.s32 %v2833, %v2835
      %v2837 = vrot.slane %v2456, %v2836
      %v2838 = vcombine.low %v2464, %v2463
      %v2839 = vcombine.low %v2465, %v2473
      %v2841 = vunpack.c.l.s4 1983009808
      %v2842 = vunpack.c.0.s8 %v2841
      %v2843 = vlaneseq
      %v2844 = vshrl.u32 %v2843, 7
      %v2845 = vsub.s32 %v2842, %v2844
      %v2846 = vrot.slane %v2838, %v2845
      %v2848 = vunpack.c.l.s4 1983009808
      %v2849 = vunpack.c.0.s8 %v2848
      %v2850 = vlaneseq
      %v2851 = vshrl.u32 %v2850, 7
      %v2852 = vsub.s32 %v2849, %v2851
      %v2853 = vrot.slane %v2839, %v2852
      %v2854 = vcombine.low %v2846, %v2853
      %v2855 = vcombine.low %v2481, %v2480
      %v2856 = vcombine.low %v2482, %v2490
      %v2858 = vunpack.c.l.s4 1983009808
      %v2859 = vunpack.c.0.s8 %v2858
      %v2860 = vlaneseq
      %v2861 = vshrl.u32 %v2860, 7
      %v2862 = vsub.s32 %v2859, %v2861
      %v2863 = vrot.slane %v2855, %v2862
      %v2865 = vunpack.c.l.s4 1983009808
      %v2866 = vunpack.c.0.s8 %v2865
      %v2867 = vlaneseq
      %v2868 = vshrl.u32 %v2867, 7
      %v2869 = vsub.s32 %v2866, %v2868
      %v2870 = vrot.slane %v2856, %v2869
      %v2871 = vcombine.low %v2863, %v2870
      %v2873 = vunpack.c.l.s4 1983009808
      %v2874 = vunpack.c.0.s8 %v2873
      %v2875 = vlaneseq
      %v2876 = vshrl.u32 %v2875, 7
      %v2877 = vsub.s32 %v2874, %v2876
      %v2878 = vrot.slane %v2498, %v2877
      %v2879 = vcombine.low %v2497, %v2499
      %v2880 = vcombine.low %v2507, %v2515
      %v2882 = vunpack.c.l.s4 1983009808
      %v2883 = vunpack.c.0.s8 %v2882
      %v2884 = vlaneseq
      %v2885 = vshrl.u32 %v2884, 7
      %v2886 = vsub.s32 %v2883, %v2885
      %v2887 = vrot.slane %v2879, %v2886
      %v2889 = vunpack.c.l.s4 1983009808
      %v2890 = vunpack.c.0.s8 %v2889
      %v2891 = vlaneseq
      %v2892 = vshrl.u32 %v2891, 7
      %v2893 = vsub.s32 %v2890, %v2892
      %v2894 = vrot.slane %v2880, %v2893
      %v2895 = vcombine.low %v2887, %v2894
      %v2896 = vcombine.low %v2514, %v2516
      %v2897 = vcombine.low %v2524, %v2532
      %v2899 = vunpack.c.l.s4 1983009808
      %v2900 = vunpack.c.0.s8 %v2899
      %v2901 = vlaneseq
      %v2902 = vshrl.u32 %v2901, 7
      %v2903 = vsub.s32 %v2900, %v2902
      %v2904 = vrot.slane %v2896, %v2903
      %v2906 = vunpack.c.l.s4 1983009808
      %v2907 = vunpack.c.0.s8 %v2906
      %v2908 = vlaneseq
      %v2909 = vshrl.u32 %v2908, 7
      %v2910 = vsub.s32 %v2907, %v2909
      %v2911 = vrot.slane %v2897, %v2910
      %v2912 = vcombine.low %v2904, %v2911
      %v2914 = vunpack.c.l.s4 1983009808
      %v2915 = vunpack.c.0.s8 %v2914
      %v2916 = vlaneseq
      %v2917 = vshrl.u32 %v2916, 7
      %v2918 = vsub.s32 %v2915, %v2917
      %v2919 = vrot.slane %v2531, %v2918
      %v2920 = vcombine.low %v2533, %v2541
      %v2921 = vcombine.low %v2549, %v2548
      %v2923 = vunpack.c.l.s4 1983009808
      %v2924 = vunpack.c.0.s8 %v2923
      %v2925 = vlaneseq
      %v2926 = vshrl.u32 %v2925, 7
      %v2927 = vsub.s32 %v2924, %v2926
      %v2928 = vrot.slane %v2920, %v2927
      %v2930 = vunpack.c.l.s4 1983009808
      %v2931 = vunpack.c.0.s8 %v2930
      %v2932 = vlaneseq
      %v2933 = vshrl.u32 %v2932, 7
      %v2934 = vsub.s32 %v2931, %v2933
      %v2935 = vrot.slane %v2921, %v2934
      %v2936 = vcombine.low %v2928, %v2935
      %v2937 = vcombine.low %v2550, %v2558
      %v2938 = vcombine.low %v2566, %v2565
      %v2940 = vunpack.c.l.s4 1983009808
      %v2941 = vunpack.c.0.s8 %v2940
      %v2942 = vlaneseq
      %v2943 = vshrl.u32 %v2942, 7
      %v2944 = vsub.s32 %v2941, %v2943
      %v2945 = vrot.slane %v2937, %v2944
      %v2947 = vunpack.c.l.s4 1983009808
      %v2948 = vunpack.c.0.s8 %v2947
      %v2949 = vlaneseq
      %v2950 = vshrl.u32 %v2949, 7
      %v2951 = vsub.s32 %v2948, %v2950
      %v2952 = vrot.slane %v2938, %v2951
      %v2953 = vcombine.low %v2945, %v2952
      %v2955 = vunpack.c.l.s4 1983009808
      %v2956 = vunpack.c.0.s8 %v2955
      %v2957 = vlaneseq
      %v2958 = vshrl.u32 %v2957, 7
      %v2959 = vsub.s32 %v2956, %v2958
      %v2960 = vrot.slane %v2567, %v2959
      %v2961 = vcombine.low %v2575, %v2583
      %v2962 = vcombine.low %v2582, %v2584
      %v2964 = vunpack.c.l.s4 1983009808
      %v2965 = vunpack.c.0.s8 %v2964
      %v2966 = vlaneseq
      %v2967 = vshrl.u32 %v2966, 7
      %v2968 = vsub.s32 %v2965, %v2967
      %v2969 = vrot.slane %v2961, %v2968
      %v2971 = vunpack.c.l.s4 1983009808
      %v2972 = vunpack.c.0.s8 %v2971
      %v2973 = vlaneseq
      %v2974 = vshrl.u32 %v2973, 7
      %v2975 = vsub.s32 %v2972, %v2974
      %v2976 = vrot.slane %v2962, %v2975
      %v2977 = vcombine.low %v2969, %v2976
      %v2978 = vcombine.low %v2592, %v2600
      %v2979 = vcombine.low %v2599, %v2601
      %v2981 = vunpack.c.l.s4 1983009808
      %v2982 = vunpack.c.0.s8 %v2981
      %v2983 = vlaneseq
      %v2984 = vshrl.u32 %v2983, 7
      %v2985 = vsub.s32 %v2982, %v2984
      %v2986 = vrot.slane %v2978, %v2985
      %v2988 = vunpack.c.l.s4 1983009808
      %v2989 = vunpack.c.0.s8 %v2988
      %v2990 = vlaneseq
      %v2991 = vshrl.u32 %v2990, 7
      %v2992 = vsub.s32 %v2989, %v2991
      %v2993 = vrot.slane %v2979, %v2992
      %v2994 = vcombine.low %v2986, %v2993
      %v2996 = vunpack.c.l.s4 1983009808
      %v2997 = vunpack.c.0.s8 %v2996
      %v2998 = vlaneseq
      %v2999 = vshrl.u32 %v2998, 7
      %v3000 = vsub.s32 %v2997, %v2999
      %v3001 = vrot.slane %v2609, %v3000
      %v3002 = vcombine.low %v2617, %v2616
      %v3003 = vcombine.low %v2618, %v2626
      %v3005 = vunpack.c.l.s4 1983009808
      %v3006 = vunpack.c.0.s8 %v3005
      %v3007 = vlaneseq
      %v3008 = vshrl.u32 %v3007, 7
      %v3009 = vsub.s32 %v3006, %v3008
      %v3010 = vrot.slane %v3002, %v3009
      %v3012 = vunpack.c.l.s4 1983009808
      %v3013 = vunpack.c.0.s8 %v3012
      %v3014 = vlaneseq
      %v3015 = vshrl.u32 %v3014, 7
      %v3016 = vsub.s32 %v3013, %v3015
      %v3017 = vrot.slane %v3003, %v3016
      %v3018 = vcombine.low %v3010, %v3017
      %v3019 = vcombine.low %v2634, %v2633
      %v3020 = vcombine.low %v2635, %v2643
      %v3022 = vunpack.c.l.s4 1983009808
      %v3023 = vunpack.c.0.s8 %v3022
      %v3024 = vlaneseq
      %v3025 = vshrl.u32 %v3024, 7
      %v3026 = vsub.s32 %v3023, %v3025
      %v3027 = vrot.slane %v3019, %v3026
      %v3029 = vunpack.c.l.s4 1983009808
      %v3030 = vunpack.c.0.s8 %v3029
      %v3031 = vlaneseq
      %v3032 = vshrl.u32 %v3031, 7
      %v3033 = vsub.s32 %v3030, %v3032
      %v3034 = vrot.slane %v3020, %v3033
      %v3035 = vcombine.low %v3027, %v3034
      %v3037 = vunpack.c.l.s4 1983009808
      %v3038 = vunpack.c.0.s8 %v3037
      %v3039 = vlaneseq
      %v3040 = vshrl.u32 %v3039, 7
      %v3041 = vsub.s32 %v3038, %v3040
      %v3042 = vrot.slane %v2651, %v3041
      %v3043 = vcombine.low %v2650, %v2652
      %v3044 = vcombine.low %v2660, %v2668
      %v3046 = vunpack.c.l.s4 1983009808
      %v3047 = vunpack.c.0.s8 %v3046
      %v3048 = vlaneseq
      %v3049 = vshrl.u32 %v3048, 7
      %v3050 = vsub.s32 %v3047, %v3049
      %v3051 = vrot.slane %v3043, %v3050
      %v3053 = vunpack.c.l.s4 1983009808
      %v3054 = vunpack.c.0.s8 %v3053
      %v3055 = vlaneseq
      %v3056 = vshrl.u32 %v3055, 7
      %v3057 = vsub.s32 %v3054, %v3056
      %v3058 = vrot.slane %v3044, %v3057
      %v3059 = vcombine.low %v3051, %v3058
      %v3060 = vcombine.low %v2667, %v2669
      %v3061 = vcombine.low %v2677, %v2685
      %v3063 = vunpack.c.l.s4 1983009808
      %v3064 = vunpack.c.0.s8 %v3063
      %v3065 = vlaneseq
      %v3066 = vshrl.u32 %v3065, 7
      %v3067 = vsub.s32 %v3064, %v3066
      %v3068 = vrot.slane %v3060, %v3067
      %v3070 = vunpack.c.l.s4 1983009808
      %v3071 = vunpack.c.0.s8 %v3070
      %v3072 = vlaneseq
      %v3073 = vshrl.u32 %v3072, 7
      %v3074 = vsub.s32 %v3071, %v3073
      %v3075 = vrot.slane %v3061, %v3074
      %v3076 = vcombine.low %v3068, %v3075
      %v3078 = vunpack.c.l.s4 1983009808
      %v3079 = vunpack.c.0.s8 %v3078
      %v3080 = vlaneseq
      %v3081 = vshrl.u32 %v3080, 7
      %v3082 = vsub.s32 %v3079, %v3081
      %v3083 = vrot.slane %v2684, %v3082
      %v3084 = vcombine.low %v2686, %v2694
      %v3085 = vcombine.low %v2702, %v2701
      %v3087 = vunpack.c.l.s4 1983009808
      %v3088 = vunpack.c.0.s8 %v3087
      %v3089 = vlaneseq
      %v3090 = vshrl.u32 %v3089, 7
      %v3091 = vsub.s32 %v3088, %v3090
      %v3092 = vrot.slane %v3084, %v3091
      %v3094 = vunpack.c.l.s4 1983009808
      %v3095 = vunpack.c.0.s8 %v3094
      %v3096 = vlaneseq
      %v3097 = vshrl.u32 %v3096, 7
      %v3098 = vsub.s32 %v3095, %v3097
      %v3099 = vrot.slane %v3085, %v3098
      %v3100 = vcombine.low %v3092, %v3099
      %v3101 = vcombine.low %v2703, %v2711
      %v3102 = vcombine.low %v2719, %v2718
      %v3104 = vunpack.c.l.s4 1983009808
      %v3105 = vunpack.c.0.s8 %v3104
      %v3106 = vlaneseq
      %v3107 = vshrl.u32 %v3106, 7
      %v3108 = vsub.s32 %v3105, %v3107
      %v3109 = vrot.slane %v3101, %v3108
      %v3111 = vunpack.c.l.s4 1983009808
      %v3112 = vunpack.c.0.s8 %v3111
      %v3113 = vlaneseq
      %v3114 = vshrl.u32 %v3113, 7
      %v3115 = vsub.s32 %v3112, %v3114
      %v3116 = vrot.slane %v3102, %v3115
      %v3117 = vcombine.low %v3109, %v3116
      %v3119 = vunpack.c.l.s4 1983009808
      %v3120 = vunpack.c.0.s8 %v3119
      %v3121 = vlaneseq
      %v3122 = vshrl.u32 %v3121, 7
      %v3123 = vsub.s32 %v3120, %v3122
      %v3124 = vrot.slane %v2720, %v3123
      %v3125 = vcombine.low %v2728, %v2736
      %v3126 = vcombine.low %v2735, %v2737
      %v3128 = vunpack.c.l.s4 1983009808
      %v3129 = vunpack.c.0.s8 %v3128
      %v3130 = vlaneseq
      %v3131 = vshrl.u32 %v3130, 7
      %v3132 = vsub.s32 %v3129, %v3131
      %v3133 = vrot.slane %v3125, %v3132
      %v3135 = vunpack.c.l.s4 1983009808
      %v3136 = vunpack.c.0.s8 %v3135
      %v3137 = vlaneseq
      %v3138 = vshrl.u32 %v3137, 7
      %v3139 = vsub.s32 %v3136, %v3138
      %v3140 = vrot.slane %v3126, %v3139
      %v3141 = vcombine.low %v3133, %v3140
      %v3142 = vcombine.low %v2745, %v2753
      %v3143 = vcombine.low %v2752, %v2754
      %v3145 = vunpack.c.l.s4 1983009808
      %v3146 = vunpack.c.0.s8 %v3145
      %v3147 = vlaneseq
      %v3148 = vshrl.u32 %v3147, 7
      %v3149 = vsub.s32 %v3146, %v3148
      %v3150 = vrot.slane %v3142, %v3149
      %v3152 = vunpack.c.l.s4 1983009808
      %v3153 = vunpack.c.0.s8 %v3152
      %v3154 = vlaneseq
      %v3155 = vshrl.u32 %v3154, 7
      %v3156 = vsub.s32 %v3153, %v3155
      %v3157 = vrot.slane %v3143, %v3156
      %v3158 = vcombine.low %v3150, %v3157
      %v3160 = vunpack.c.l.s4 1983009808
      %v3161 = vunpack.c.0.s8 %v3160
      %v3162 = vlaneseq
      %v3163 = vshrl.u32 %v3162, 7
      %v3164 = vsub.s32 %v3161, %v3163
      %v3165 = vrot.slane %v2762, %v3164
      %v3166 = vcombine.low %v2770, %v2769
      %v3167 = vcombine.low %v2771, %v2779
      %v3169 = vunpack.c.l.s4 1983009808
      %v3170 = vunpack.c.0.s8 %v3169
      %v3171 = vlaneseq
      %v3172 = vshrl.u32 %v3171, 7
      %v3173 = vsub.s32 %v3170, %v3172
      %v3174 = vrot.slane %v3166, %v3173
      %v3176 = vunpack.c.l.s4 1983009808
      %v3177 = vunpack.c.0.s8 %v3176
      %v3178 = vlaneseq
      %v3179 = vshrl.u32 %v3178, 7
      %v3180 = vsub.s32 %v3177, %v3179
      %v3181 = vrot.slane %v3167, %v3180
      %v3182 = vcombine.low %v3174, %v3181
      %v3183 = vcombine.low %v2787, %v2786
      %v3184 = vcombine.low %v2788, %v2795
      %v3186 = vunpack.c.l.s4 1983009808
      %v3187 = vunpack.c.0.s8 %v3186
      %v3188 = vlaneseq
      %v3189 = vshrl.u32 %v3188, 7
      %v3190 = vsub.s32 %v3187, %v3189
      %v3191 = vrot.slane %v3183, %v3190
      %v3193 = vunpack.c.l.s4 1983009808
      %v3194 = vunpack.c.0.s8 %v3193
      %v3195 = vlaneseq
      %v3196 = vshrl.u32 %v3195, 7
      %v3197 = vsub.s32 %v3194, %v3196
      %v3198 = vrot.slane %v3184, %v3197
      %v3199 = vcombine.low %v3191, %v3198
      %v3201 = vunpack.c.l.s4 1983009808
      %v3202 = vunpack.c.0.s8 %v3201
      %v3203 = vlaneseq
      %v3204 = vshrl.u32 %v3203, 7
      %v3205 = vsub.s32 %v3202, %v3204
      %v3206 = vrot.slane %v2796, %v3205
      %vm3237 = vcmask 130048
      %3238 = vst.msk [vmem:[#allocation2] sm:$0xff] %vm3237, %v2813
      %3239 = vst.msk [vmem:[#allocation2 + $0x8] sm:$0xff] %vm3237, %v2830
      %vm3240 = vcmask 123904
      %3241 = vst.msk [vmem:[#allocation2 + $0x10] sm:$0x3] %vm3240, %v2837
      %3242 = vst.msk [vmem:[#allocation2 + $0x18] sm:$0xff] %vm3237, %v2854
      %3243 = vst.msk [vmem:[#allocation2 + $0x20] sm:$0xff] %vm3237, %v2871
      %3244 = vst.msk [vmem:[#allocation2 + $0x28] sm:$0x3] %vm3240, %v2878
      %3245 = vst.msk [vmem:[#allocation2 + $0x30] sm:$0xff] %vm3237, %v2895
      %3246 = vst.msk [vmem:[#allocation2 + $0x38] sm:$0xff] %vm3237, %v2912
      %3247 = vst.msk [vmem:[#allocation2 + $0x40] sm:$0x3] %vm3240, %v2919
      %3248 = vst.msk [vmem:[#allocation2 + $0x48] sm:$0xff] %vm3237, %v2936
      %3249 = vst.msk [vmem:[#allocation2 + $0x50] sm:$0xff] %vm3237, %v2953
      %3250 = vst.msk [vmem:[#allocation2 + $0x58] sm:$0x3] %vm3240, %v2960
      %3251 = vst.msk [vmem:[#allocation2 + $0x60] sm:$0xff] %vm3237, %v2977
      %3252 = vst.msk [vmem:[#allocation2 + $0x68] sm:$0xff] %vm3237, %v2994
      %3253 = vst.msk [vmem:[#allocation2 + $0x70] sm:$0x3] %vm3240, %v3001
      %3254 = vst.msk [vmem:[#allocation2 + $0x78] sm:$0xff] %vm3237, %v3018
      %3255 = vst.msk [vmem:[#allocation2 + $0x80] sm:$0xff] %vm3237, %v3035
      %3256 = vst.msk [vmem:[#allocation2 + $0x88] sm:$0x3] %vm3240, %v3042
      %3257 = vst.msk [vmem:[#allocation2 + $0x90] sm:$0xff] %vm3237, %v3059
      %3258 = vst.msk [vmem:[#allocation2 + $0x98] sm:$0xff] %vm3237, %v3076
      %3259 = vst.msk [vmem:[#allocation2 + $0xa0] sm:$0x3] %vm3240, %v3083
      %3260 = vst.msk [vmem:[#allocation2 + $0xa8] sm:$0xff] %vm3237, %v3100
      %3261 = vst.msk [vmem:[#allocation2 + $0xb0] sm:$0xff] %vm3237, %v3117
      %3262 = vst.msk [vmem:[#allocation2 + $0xb8] sm:$0x3] %vm3240, %v3124
      %3263 = vst.msk [vmem:[#allocation2 + $0xc0] sm:$0xff] %vm3237, %v3141
      %3264 = vst.msk [vmem:[#allocation2 + $0xc8] sm:$0xff] %vm3237, %v3158
      %3265 = vst.msk [vmem:[#allocation2 + $0xd0] sm:$0x3] %vm3240, %v3165
      %3266 = vst.msk [vmem:[#allocation2 + $0xd8] sm:$0xff] %vm3237, %v3182
      %3267 = vst.msk [vmem:[#allocation2 + $0xe0] sm:$0xff] %vm3237, %v3199
      %3268 = vst.msk [vmem:[#allocation2 + $0xe8] sm:$0x3] %vm3240, %v3206
      %vm3269 = vcmask 122880
      %3270 = vst.msk [vmem:[#allocation2] sm:$0x1] %vm3269, 0.0
      %3271 = vst.msk [vmem:[#allocation2 + $0x18] sm:$0x1] %vm3269, 0.0
      %3272 = vst.msk [vmem:[#allocation2 + $0x30] sm:$0x1] %vm3269, 0.0
      %3273 = vst.msk [vmem:[#allocation2 + $0x48] sm:$0x1] %vm3269, 0.0
      %3274 = vst.msk [vmem:[#allocation2 + $0x60] sm:$0x1] %vm3269, 0.0
      %3275 = vst.msk [vmem:[#allocation2 + $0x78] sm:$0x1] %vm3269, 0.0
      %3276 = vst.msk [vmem:[#allocation2 + $0x90] sm:$0x1] %vm3269, 0.0
      %3277 = vst.msk [vmem:[#allocation2 + $0xa8] sm:$0x1] %vm3269, 0.0
      %3278 = vst.msk [vmem:[#allocation2 + $0xc0] sm:$0x1] %vm3269, 0.0
      %3279 = vst.msk [vmem:[#allocation2 + $0xd8] sm:$0x1] %vm3269, 0.0
      %3280 = vst.msk [vmem:[#allocation2 + $0x11] sm:$0x1] %vm3269, 0.0
      %3281 = vst.msk [vmem:[#allocation2 + $0x29] sm:$0x1] %vm3269, 0.0
      %3282 = vst.msk [vmem:[#allocation2 + $0x41] sm:$0x1] %vm3269, 0.0
      %3283 = vst.msk [vmem:[#allocation2 + $0x59] sm:$0x1] %vm3269, 0.0
      %3284 = vst.msk [vmem:[#allocation2 + $0x71] sm:$0x1] %vm3269, 0.0
      %3285 = vst.msk [vmem:[#allocation2 + $0x89] sm:$0x1] %vm3269, 0.0
      %3286 = vst.msk [vmem:[#allocation2 + $0xa1] sm:$0x1] %vm3269, 0.0
      %3287 = vst.msk [vmem:[#allocation2 + $0xb9] sm:$0x1] %vm3269, 0.0
      %3288 = vst.msk [vmem:[#allocation2 + $0xd1] sm:$0x1] %vm3269, 0.0
      %3289 = vst.msk [vmem:[#allocation2 + $0xe9] sm:$0x1] %vm3269, 0.0
      %p3290 = scmp.eq.s32.totalorder %s21, 0
      // Predicated region
      $region41: #{tpu_custom_call.1} parent=39 // pred_check
        %p3291 = pneg %p3290
      $region42: #{tpu_custom_call.1} parent=39 // pred_check_branch
        %3293 = sbr.rel (%p3291) target = $region44
      $region43: #{tpu_custom_call.1} parent=39 // pred_region
        %3294 = vst.msk [vmem:[#allocation2] sm:$0xff] %vm3237, 0.0
        %3295 = vst.msk [vmem:[#allocation2 + $0x8] sm:$0xff] %vm3237, 0.0
        %3296 = vst.msk [vmem:[#allocation2 + $0x10] sm:$0x3] %vm3240, 0.0
      $region44: #{tpu_custom_call.1} parent=39 // pred_fallthru
        _
      %p3297 = scmp.eq.s32.totalorder %s21, 1
      // Predicated region
      $region45: #{tpu_custom_call.1} parent=39 // pred_check
        %p3298 = pneg %p3297
      $region46: #{tpu_custom_call.1} parent=39 // pred_check_branch
        %3300 = sbr.rel (%p3298) target = $region48
      $region47: #{tpu_custom_call.1} parent=39 // pred_region
        %s3301 = scalar_lea.vmem [#allocation2], 216
        %3302 = vst.msk [vmem:[%s3301] sm:$0xff] %vm3237, 0.0
        %3303 = vst.msk [vmem:[%s3301 + $0x8] sm:$0xff] %vm3237, 0.0
        %3304 = vst.msk [vmem:[%s3301 + $0x10] sm:$0x3] %vm3240, 0.0
      $region48: #{tpu_custom_call.1} parent=39 // pred_fallthru
        _
      %v3305 = vld [vmem:[#allocation2] sm:$0xff]
      %v3306 = vld [vmem:[#allocation2 + $0x8] sm:$0xff]
      %v3307 = vld [vmem:[#allocation2 + $0x10] sm:$0x3]
      %v3308 = vld [vmem:[#allocation2 + $0x18] sm:$0xff]
      %v3309 = vld [vmem:[#allocation2 + $0x20] sm:$0xff]
      %v3310 = vld [vmem:[#allocation2 + $0x28] sm:$0x3]
      %v3311 = vld [vmem:[#allocation2 + $0x30] sm:$0xff]
      %v3312 = vld [vmem:[#allocation2 + $0x38] sm:$0xff]
      %v3313 = vld [vmem:[#allocation2 + $0x40] sm:$0x3]
      %v3314 = vld [vmem:[#allocation2 + $0x48] sm:$0xff]
      %v3315 = vld [vmem:[#allocation2 + $0x50] sm:$0xff]
      %v3316 = vld [vmem:[#allocation2 + $0x58] sm:$0x3]
      %v3317 = vld [vmem:[#allocation2 + $0x60] sm:$0xff]
      %v3318 = vld [vmem:[#allocation2 + $0x68] sm:$0xff]
      %v3319 = vld [vmem:[#allocation2 + $0x70] sm:$0x3]
      %v3320 = vld [vmem:[#allocation2 + $0x78] sm:$0xff]
      %v3321 = vld [vmem:[#allocation2 + $0x80] sm:$0xff]
      %v3322 = vld [vmem:[#allocation2 + $0x88] sm:$0x3]
      %v3323 = vld [vmem:[#allocation2 + $0x90] sm:$0xff]
      %v3324 = vld [vmem:[#allocation2 + $0x98] sm:$0xff]
      %v3325 = vld [vmem:[#allocation2 + $0xa0] sm:$0x3]
      %v3326 = vld [vmem:[#allocation2 + $0xa8] sm:$0xff]
      %v3327 = vld [vmem:[#allocation2 + $0xb0] sm:$0xff]
      %v3328 = vld [vmem:[#allocation2 + $0xb8] sm:$0x3]
      %v3329 = vld [vmem:[#allocation2 + $0xc0] sm:$0xff]
      %v3330 = vld [vmem:[#allocation2 + $0xc8] sm:$0xff]
      %v3331 = vld [vmem:[#allocation2 + $0xd0] sm:$0x3]
      %v3332 = vld [vmem:[#allocation2 + $0xd8] sm:$0xff]
      %v3333 = vld [vmem:[#allocation2 + $0xe0] sm:$0xff]
      %v3334 = vld [vmem:[#allocation2 + $0xe8] sm:$0x3]
      %v3335 = vpack.c.bf16 %v3306, %v3305
      %v3336 = vpack.c.bf16 %v3309, %v3308
      %v3337 = vpack.c.bf16 %v3312, %v3311
      %v3338 = vpack.c.bf16 %v3315, %v3314
      %v3339 = vpack.c.bf16 %v3318, %v3317
      %v3340 = vpack.c.bf16 %v3321, %v3320
      %v3341 = vpack.c.bf16 %v3324, %v3323
      %v3342 = vpack.c.bf16 %v3327, %v3326
      %v3343 = vld [vmem:[%s3] sm:$0xf]
      %v3344 = vld [vmem:[%s3 + $0x4] sm:$0xf]
      %vm3369 = vcmask 1046528
      %v3370 = vrot.slane %v3305, 1
      %v3371 = vrot.slane %v3306, 1
      %v3372 = vsel %vm3369, %v3370, %v3371
      %v3373 = vrot.slane %v3307, 1
      %v3374 = vsel %vm3369, %v3371, %v3373
      %v3375 = vrot.slane %v3308, 1
      %v3376 = vrot.slane %v3309, 1
      %v3377 = vsel %vm3369, %v3375, %v3376
      %v3378 = vrot.slane %v3310, 1
      %v3379 = vsel %vm3369, %v3376, %v3378
      %v3380 = vrot.slane %v3311, 1
      %v3381 = vrot.slane %v3312, 1
      %v3382 = vsel %vm3369, %v3380, %v3381
      %v3383 = vrot.slane %v3313, 1
      %v3384 = vsel %vm3369, %v3381, %v3383
      %v3385 = vrot.slane %v3314, 1
      %v3386 = vrot.slane %v3315, 1
      %v3387 = vsel %vm3369, %v3385, %v3386
      %v3388 = vrot.slane %v3316, 1
      %v3389 = vsel %vm3369, %v3386, %v3388
      %v3390 = vrot.slane %v3317, 1
      %v3391 = vrot.slane %v3318, 1
      %v3392 = vsel %vm3369, %v3390, %v3391
      %v3393 = vrot.slane %v3319, 1
      %v3394 = vsel %vm3369, %v3391, %v3393
      %v3395 = vrot.slane %v3320, 1
      %v3396 = vrot.slane %v3321, 1
      %v3397 = vsel %vm3369, %v3395, %v3396
      %v3398 = vrot.slane %v3322, 1
      %v3399 = vsel %vm3369, %v3396, %v3398
      %v3400 = vrot.slane %v3323, 1
      %v3401 = vrot.slane %v3324, 1
      %v3402 = vsel %vm3369, %v3400, %v3401
      %v3403 = vrot.slane %v3325, 1
      %v3404 = vsel %vm3369, %v3401, %v3403
      %v3405 = vrot.slane %v3326, 1
      %v3406 = vrot.slane %v3327, 1
      %v3407 = vsel %vm3369, %v3405, %v3406
      %v3408 = vrot.slane %v3328, 1
      %v3409 = vsel %vm3369, %v3406, %v3408
      %v3426 = vpack.c.bf16 %v3374, %v3372
      %v3427 = vpack.c.bf16 %v3379, %v3377
      %v3428 = vpack.c.bf16 %v3384, %v3382
      %v3429 = vpack.c.bf16 %v3389, %v3387
      %v3430 = vpack.c.bf16 %v3394, %v3392
      %v3431 = vpack.c.bf16 %v3399, %v3397
      %v3432 = vpack.c.bf16 %v3404, %v3402
      %v3433 = vpack.c.bf16 %v3409, %v3407
      %s3434 = scalar_lea.vmem %s3, 8
      %v3435 = vld [vmem:[%s3434] sm:$0xf]
      %v3436 = vld [vmem:[%s3434 + $0x4] sm:$0xf]
      %v3439 = vunpack.c.l.b16 %v3435
      %v3440 = vunpack.c.l.b16 %v3436
      %v3441 = vpack.c.b16 %v3440, %v3439
      %v3444 = vsel %vm3237, %v3426, 0
      %v3447 = vsel %vm3237, %v3427, 0
      %v3450 = vsel %vm3237, %v3428, 0
      %v3453 = vsel %vm3237, %v3429, 0
      %v3456 = vsel %vm3237, %v3430, 0
      %v3459 = vsel %vm3237, %v3431, 0
      %v3462 = vsel %vm3237, %v3432, 0
      %v3465 = vsel %vm3237, %v3433, 0
      %3467 = vmatprep.subr.bf16.mxu0 0
      %3468 = vmatpush1.bf16.msra.mxu0 %v3441
      %3469 = vmatprep.subr.bf16.mxu0 0
      %3470 = vmatpush1.bf16.msra.mxu0 0
      %3471 = vmatprep.subr.bf16.mxu0 0
      %3472 = vmatpush1.bf16.msra.mxu0 0
      %3473 = vmatprep.subr.bf16.mxu0 0
      %3474 = vmatpush1.bf16.msra.mxu0 0
      %3475 = vmatprep.subr.bf16.mxu0 0
      %3476 = vmatpush1.bf16.msra.mxu0 0
      %3477 = vmatprep.subr.bf16.mxu0 0
      %3478 = vmatpush1.bf16.msra.mxu0 0
      %3479 = vmatprep.subr.bf16.mxu0 0
      %3480 = vmatpush1.bf16.msra.mxu0 0
      %3481 = vmatprep.subr.bf16.mxu0 0
      %3482 = vmatpush1.bf16.msra.mxu0 0
      %3483 = vmatprep.subr.bf16.mxu0 0
      %3484 = vmatpush1.bf16.msra.mxu0 0
      %3485 = vmatprep.subr.bf16.mxu0 0
      %3486 = vmatpush1.bf16.msra.mxu0 0
      %3487 = vmatprep.subr.bf16.mxu0 0
      %3488 = vmatpush1.bf16.msra.mxu0 0
      %3489 = vmatprep.subr.bf16.mxu0 0
      %3490 = vmatpush1.bf16.msra.mxu0 0
      %3491 = vmatprep.subr.bf16.mxu0 0
      %3492 = vmatpush1.bf16.msra.mxu0 0
      %3493 = vmatprep.subr.bf16.mxu0 0
      %3494 = vmatpush1.bf16.msra.mxu0 0
      %3495 = vmatprep.subr.bf16.mxu0 0
      %3496 = vmatpush1.bf16.msra.mxu0 0
      %3497 = vmatprep.subr.bf16.mxu0 0
      %3498 = vmatpush1.bf16.msra.mxu0 0
      %3499 = vmatprep.mubr.bf16.mxu0 0
      %3500 = vmatmul.mubr.bf16.gmra.mrb[0].mxu0 %v3444
      %v3501 = vpop.f32.mrb[0].mxu0
      %v3502 = vadd.f32 0.0, %v3501
      %v3503 = vpop.f32.mrb[0].mxu0
      %v3504 = vpop.f32.mrb[0].mxu0
      %v3505 = vadd.f32 0.0, %v3504
      %v3506 = vpop.f32.mrb[0].mxu0
      %3507 = vmatprep.mubr.bf16.mxu0 0
      %3508 = vmatmul.mubr.bf16.gmra.mrb[0].mxu0 %v3447
      %v3509 = vpop.f32.mrb[0].mxu0
      %v3510 = vadd.f32 0.0, %v3509
      %v3511 = vpop.f32.mrb[0].mxu0
      %v3512 = vpop.f32.mrb[0].mxu0
      %v3513 = vadd.f32 0.0, %v3512
      %v3514 = vpop.f32.mrb[0].mxu0
      %3515 = vmatprep.mubr.bf16.mxu0 0
      %3516 = vmatmul.mubr.bf16.gmra.mrb[0].mxu0 %v3450
      %v3517 = vpop.f32.mrb[0].mxu0
      %v3518 = vadd.f32 0.0, %v3517
      %v3519 = vpop.f32.mrb[0].mxu0
      %v3520 = vpop.f32.mrb[0].mxu0
      %v3521 = vadd.f32 0.0, %v3520
      %v3522 = vpop.f32.mrb[0].mxu0
      %3523 = vmatprep.mubr.bf16.mxu0 0
      %3524 = vmatmul.mubr.bf16.gmra.mrb[0].mxu0 %v3453
      %v3525 = vpop.f32.mrb[0].mxu0
      %v3526 = vadd.f32 0.0, %v3525
      %v3527 = vpop.f32.mrb[0].mxu0
      %v3528 = vpop.f32.mrb[0].mxu0
      %v3529 = vadd.f32 0.0, %v3528
      %v3530 = vpop.f32.mrb[0].mxu0
      %3531 = vmatprep.mubr.bf16.mxu0 0
      %3532 = vmatmul.mubr.bf16.gmra.mrb[0].mxu0 %v3456
      %v3533 = vpop.f32.mrb[0].mxu0
      %v3534 = vadd.f32 0.0, %v3533
      %v3535 = vpop.f32.mrb[0].mxu0
      %v3536 = vpop.f32.mrb[0].mxu0
      %v3537 = vadd.f32 0.0, %v3536
      %v3538 = vpop.f32.mrb[0].mxu0
      %3539 = vmatprep.mubr.bf16.mxu0 0
      %3540 = vmatmul.mubr.bf16.gmra.mrb[0].mxu0 %v3459
      %v3541 = vpop.f32.mrb[0].mxu0
      %v3542 = vadd.f32 0.0, %v3541
      %v3543 = vpop.f32.mrb[0].mxu0
      %v3544 = vpop.f32.mrb[0].mxu0
      %v3545 = vadd.f32 0.0, %v3544
      %v3546 = vpop.f32.mrb[0].mxu0
      %3547 = vmatprep.mubr.bf16.mxu0 0
      %3548 = vmatmul.mubr.bf16.gmra.mrb[0].mxu0 %v3462
      %v3549 = vpop.f32.mrb[0].mxu0
      %v3550 = vadd.f32 0.0, %v3549
      %v3551 = vpop.f32.mrb[0].mxu0
      %v3552 = vpop.f32.mrb[0].mxu0
      %v3553 = vadd.f32 0.0, %v3552
      %v3554 = vpop.f32.mrb[0].mxu0
      %3555 = vmatprep.mubr.bf16.mxu0 0
      %3556 = vmatmul.mubr.bf16.gmra.mrb[0].mxu0 %v3465
      %v3557 = vpop.f32.mrb[0].mxu0
      %v3558 = vadd.f32 0.0, %v3557
      %v3559 = vpop.f32.mrb[0].mxu0
      %v3560 = vpop.f32.mrb[0].mxu0
      %v3561 = vadd.f32 0.0, %v3560
      %v3562 = vpop.f32.mrb[0].mxu0
      %3563 = vdwg.mxu0
      %v3566 = vunpack.c.l.b16 %v3343
      %v3567 = vunpack.c.l.b16 %v3344
      %v3568 = vpack.c.b16 %v3567, %v3566
      %v3571 = vsel %vm3237, %v3335, 0
      %v3574 = vsel %vm3237, %v3336, 0
      %v3577 = vsel %vm3237, %v3337, 0
      %v3580 = vsel %vm3237, %v3338, 0
      %v3583 = vsel %vm3237, %v3339, 0
      %v3586 = vsel %vm3237, %v3340, 0
      %v3589 = vsel %vm3237, %v3341, 0
      %v3592 = vsel %vm3237, %v3342, 0
      %3594 = vmatprep.subr.bf16.mxu0 0
      %3595 = vmatpush1.bf16.msra.mxu0 %v3568
      %3596 = vmatprep.subr.bf16.mxu0 0
      %3597 = vmatpush1.bf16.msra.mxu0 0
      %3598 = vmatprep.subr.bf16.mxu0 0
      %3599 = vmatpush1.bf16.msra.mxu0 0
      %3600 = vmatprep.subr.bf16.mxu0 0
      %3601 = vmatpush1.bf16.msra.mxu0 0
      %3602 = vmatprep.subr.bf16.mxu0 0
      %3603 = vmatpush1.bf16.msra.mxu0 0
      %3604 = vmatprep.subr.bf16.mxu0 0
      %3605 = vmatpush1.bf16.msra.mxu0 0
      %3606 = vmatprep.subr.bf16.mxu0 0
      %3607 = vmatpush1.bf16.msra.mxu0 0
      %3608 = vmatprep.subr.bf16.mxu0 0
      %3609 = vmatpush1.bf16.msra.mxu0 0
      %3610 = vmatprep.subr.bf16.mxu0 0
      %3611 = vmatpush1.bf16.msra.mxu0 0
      %3612 = vmatprep.subr.bf16.mxu0 0
      %3613 = vmatpush1.bf16.msra.mxu0 0
      %3614 = vmatprep.subr.bf16.mxu0 0
      %3615 = vmatpush1.bf16.msra.mxu0 0
      %3616 = vmatprep.subr.bf16.mxu0 0
      %3617 = vmatpush1.bf16.msra.mxu0 0
      %3618 = vmatprep.subr.bf16.mxu0 0
      %3619 = vmatpush1.bf16.msra.mxu0 0
      %3620 = vmatprep.subr.bf16.mxu0 0
      %3621 = vmatpush1.bf16.msra.mxu0 0
      %3622 = vmatprep.subr.bf16.mxu0 0
      %3623 = vmatpush1.bf16.msra.mxu0 0
      %3624 = vmatprep.subr.bf16.mxu0 0
      %3625 = vmatpush1.bf16.msra.mxu0 0
      %3626 = vmatprep.mubr.bf16.mxu0 0
      %3627 = vmatmul.mubr.bf16.gmra.mrb[0].mxu0 %v3571
      %v3628 = vpop.f32.mrb[0].mxu0
      %v3629 = vadd.f32 %v3502, %v3628
      %v3630 = vpop.f32.mrb[0].mxu0
      %v3631 = vpop.f32.mrb[0].mxu0
      %v3632 = vadd.f32 %v3505, %v3631
      %v3633 = vpop.f32.mrb[0].mxu0
      %3634 = vmatprep.mubr.bf16.mxu0 0
      %3635 = vmatmul.mubr.bf16.gmra.mrb[0].mxu0 %v3574
      %v3636 = vpop.f32.mrb[0].mxu0
      %v3637 = vadd.f32 %v3510, %v3636
      %v3638 = vpop.f32.mrb[0].mxu0
      %v3639 = vpop.f32.mrb[0].mxu0
      %v3640 = vadd.f32 %v3513, %v3639
      %v3641 = vpop.f32.mrb[0].mxu0
      %3642 = vmatprep.mubr.bf16.mxu0 0
      %3643 = vmatmul.mubr.bf16.gmra.mrb[0].mxu0 %v3577
      %v3644 = vpop.f32.mrb[0].mxu0
      %v3645 = vadd.f32 %v3518, %v3644
      %v3646 = vpop.f32.mrb[0].mxu0
      %v3647 = vpop.f32.mrb[0].mxu0
      %v3648 = vadd.f32 %v3521, %v3647
      %v3649 = vpop.f32.mrb[0].mxu0
      %3650 = vmatprep.mubr.bf16.mxu0 0
      %3651 = vmatmul.mubr.bf16.gmra.mrb[0].mxu0 %v3580
      %v3652 = vpop.f32.mrb[0].mxu0
      %v3653 = vadd.f32 %v3526, %v3652
      %v3654 = vpop.f32.mrb[0].mxu0
      %v3655 = vpop.f32.mrb[0].mxu0
      %v3656 = vadd.f32 %v3529, %v3655
      %v3657 = vpop.f32.mrb[0].mxu0
      %3658 = vmatprep.mubr.bf16.mxu0 0
      %3659 = vmatmul.mubr.bf16.gmra.mrb[0].mxu0 %v3583
      %v3660 = vpop.f32.mrb[0].mxu0
      %v3661 = vadd.f32 %v3534, %v3660
      %v3662 = vpop.f32.mrb[0].mxu0
      %v3663 = vpop.f32.mrb[0].mxu0
      %v3664 = vadd.f32 %v3537, %v3663
      %v3665 = vpop.f32.mrb[0].mxu0
      %3666 = vmatprep.mubr.bf16.mxu0 0
      %3667 = vmatmul.mubr.bf16.gmra.mrb[0].mxu0 %v3586
      %v3668 = vpop.f32.mrb[0].mxu0
      %v3669 = vadd.f32 %v3542, %v3668
      %v3670 = vpop.f32.mrb[0].mxu0
      %v3671 = vpop.f32.mrb[0].mxu0
      %v3672 = vadd.f32 %v3545, %v3671
      %v3673 = vpop.f32.mrb[0].mxu0
      %3674 = vmatprep.mubr.bf16.mxu0 0
      %3675 = vmatmul.mubr.bf16.gmra.mrb[0].mxu0 %v3589
      %v3676 = vpop.f32.mrb[0].mxu0
      %v3677 = vadd.f32 %v3550, %v3676
      %v3678 = vpop.f32.mrb[0].mxu0
      %v3679 = vpop.f32.mrb[0].mxu0
      %v3680 = vadd.f32 %v3553, %v3679
      %v3681 = vpop.f32.mrb[0].mxu0
      %3682 = vmatprep.mubr.bf16.mxu0 0
      %3683 = vmatmul.mubr.bf16.gmra.mrb[0].mxu0 %v3592
      %v3684 = vpop.f32.mrb[0].mxu0
      %v3685 = vadd.f32 %v3558, %v3684
      %v3686 = vpop.f32.mrb[0].mxu0
      %v3687 = vpop.f32.mrb[0].mxu0
      %v3688 = vadd.f32 %v3561, %v3687
      %v3689 = vpop.f32.mrb[0].mxu0
      %3690 = vdwg.mxu0
      %v3691 = vrot.slane %v3305, 2
      %v3692 = vrot.slane %v3306, 2
      %v3693 = vsel %vm1664, %v3691, %v3692
      %v3694 = vrot.slane %v3307, 2
      %v3695 = vsel %vm1664, %v3692, %v3694
      %v3696 = vrot.slane %v3308, 2
      %v3697 = vrot.slane %v3309, 2
      %v3698 = vsel %vm1664, %v3696, %v3697
      %v3699 = vrot.slane %v3310, 2
      %v3700 = vsel %vm1664, %v3697, %v3699
      %v3701 = vrot.slane %v3311, 2
      %v3702 = vrot.slane %v3312, 2
      %v3703 = vsel %vm1664, %v3701, %v3702
      %v3704 = vrot.slane %v3313, 2
      %v3705 = vsel %vm1664, %v3702, %v3704
      %v3706 = vrot.slane %v3314, 2
      %v3707 = vrot.slane %v3315, 2
      %v3708 = vsel %vm1664, %v3706, %v3707
      %v3709 = vrot.slane %v3316, 2
      %v3710 = vsel %vm1664, %v3707, %v3709
      %v3711 = vrot.slane %v3317, 2
      %v3712 = vrot.slane %v3318, 2
      %v3713 = vsel %vm1664, %v3711, %v3712
      %v3714 = vrot.slane %v3319, 2
      %v3715 = vsel %vm1664, %v3712, %v3714
      %v3716 = vrot.slane %v3320, 2
      %v3717 = vrot.slane %v3321, 2
      %v3718 = vsel %vm1664, %v3716, %v3717
      %v3719 = vrot.slane %v3322, 2
      %v3720 = vsel %vm1664, %v3717, %v3719
      %v3721 = vrot.slane %v3323, 2
      %v3722 = vrot.slane %v3324, 2
      %v3723 = vsel %vm1664, %v3721, %v3722
      %v3724 = vrot.slane %v3325, 2
      %v3725 = vsel %vm1664, %v3722, %v3724
      %v3726 = vrot.slane %v3326, 2
      %v3727 = vrot.slane %v3327, 2
      %v3728 = vsel %vm1664, %v3726, %v3727
      %v3729 = vrot.slane %v3328, 2
      %v3730 = vsel %vm1664, %v3727, %v3729
      %v3747 = vpack.c.bf16 %v3695, %v3693
      %v3748 = vpack.c.bf16 %v3700, %v3698
      %v3749 = vpack.c.bf16 %v3705, %v3703
      %v3750 = vpack.c.bf16 %v3710, %v3708
      %v3751 = vpack.c.bf16 %v3715, %v3713
      %v3752 = vpack.c.bf16 %v3720, %v3718
      %v3753 = vpack.c.bf16 %v3725, %v3723
      %v3754 = vpack.c.bf16 %v3730, %v3728
      %s3755 = scalar_lea.vmem %s3, 16
      %v3756 = vld [vmem:[%s3755] sm:$0xf]
      %v3757 = vld [vmem:[%s3755 + $0x4] sm:$0xf]
      %v3760 = vunpack.c.l.b16 %v3756
      %v3761 = vunpack.c.l.b16 %v3757
      %v3762 = vpack.c.b16 %v3761, %v3760
      %v3765 = vsel %vm3237, %v3747, 0
      %v3768 = vsel %vm3237, %v3748, 0
      %v3771 = vsel %vm3237, %v3749, 0
      %v3774 = vsel %vm3237, %v3750, 0
      %v3777 = vsel %vm3237, %v3751, 0
      %v3780 = vsel %vm3237, %v3752, 0
      %v3783 = vsel %vm3237, %v3753, 0
      %v3786 = vsel %vm3237, %v3754, 0
      %3788 = vmatprep.subr.bf16.mxu0 0
      %3789 = vmatpush1.bf16.msra.mxu0 %v3762
      %3790 = vmatprep.subr.bf16.mxu0 0
      %3791 = vmatpush1.bf16.msra.mxu0 0
      %3792 = vmatprep.subr.bf16.mxu0 0
      %3793 = vmatpush1.bf16.msra.mxu0 0
      %3794 = vmatprep.subr.bf16.mxu0 0
      %3795 = vmatpush1.bf16.msra.mxu0 0
      %3796 = vmatprep.subr.bf16.mxu0 0
      %3797 = vmatpush1.bf16.msra.mxu0 0
      %3798 = vmatprep.subr.bf16.mxu0 0
      %3799 = vmatpush1.bf16.msra.mxu0 0
      %3800 = vmatprep.subr.bf16.mxu0 0
      %3801 = vmatpush1.bf16.msra.mxu0 0
      %3802 = vmatprep.subr.bf16.mxu0 0
      %3803 = vmatpush1.bf16.msra.mxu0 0
      %3804 = vmatprep.subr.bf16.mxu0 0
      %3805 = vmatpush1.bf16.msra.mxu0 0
      %3806 = vmatprep.subr.bf16.mxu0 0
      %3807 = vmatpush1.bf16.msra.mxu0 0
      %3808 = vmatprep.subr.bf16.mxu0 0
      %3809 = vmatpush1.bf16.msra.mxu0 0
      %3810 = vmatprep.subr.bf16.mxu0 0
      %3811 = vmatpush1.bf16.msra.mxu0 0
      %3812 = vmatprep.subr.bf16.mxu0 0
      %3813 = vmatpush1.bf16.msra.mxu0 0
      %3814 = vmatprep.subr.bf16.mxu0 0
      %3815 = vmatpush1.bf16.msra.mxu0 0
      %3816 = vmatprep.subr.bf16.mxu0 0
      %3817 = vmatpush1.bf16.msra.mxu0 0
      %3818 = vmatprep.subr.bf16.mxu0 0
      %3819 = vmatpush1.bf16.msra.mxu0 0
      %3820 = vmatprep.mubr.bf16.mxu0 0
      %3821 = vmatmul.mubr.bf16.gmra.mrb[0].mxu0 %v3765
      %v3822 = vpop.f32.mrb[0].mxu0
      %v3823 = vadd.f32 0.0, %v3822
      %v3824 = vpop.f32.mrb[0].mxu0
      %v3825 = vpop.f32.mrb[0].mxu0
      %v3826 = vadd.f32 0.0, %v3825
      %v3827 = vpop.f32.mrb[0].mxu0
      %3828 = vmatprep.mubr.bf16.mxu0 0
      %3829 = vmatmul.mubr.bf16.gmra.mrb[0].mxu0 %v3768
      %v3830 = vpop.f32.mrb[0].mxu0
      %v3831 = vadd.f32 0.0, %v3830
      %v3832 = vpop.f32.mrb[0].mxu0
      %v3833 = vpop.f32.mrb[0].mxu0
      %v3834 = vadd.f32 0.0, %v3833
      %v3835 = vpop.f32.mrb[0].mxu0
      %3836 = vmatprep.mubr.bf16.mxu0 0
      %3837 = vmatmul.mubr.bf16.gmra.mrb[0].mxu0 %v3771
      %v3838 = vpop.f32.mrb[0].mxu0
      %v3839 = vadd.f32 0.0, %v3838
      %v3840 = vpop.f32.mrb[0].mxu0
      %v3841 = vpop.f32.mrb[0].mxu0
      %v3842 = vadd.f32 0.0, %v3841
      %v3843 = vpop.f32.mrb[0].mxu0
      %3844 = vmatprep.mubr.bf16.mxu0 0
      %3845 = vmatmul.mubr.bf16.gmra.mrb[0].mxu0 %v3774
      %v3846 = vpop.f32.mrb[0].mxu0
      %v3847 = vadd.f32 0.0, %v3846
      %v3848 = vpop.f32.mrb[0].mxu0
      %v3849 = vpop.f32.mrb[0].mxu0
      %v3850 = vadd.f32 0.0, %v3849
      %v3851 = vpop.f32.mrb[0].mxu0
      %3852 = vmatprep.mubr.bf16.mxu0 0
      %3853 = vmatmul.mubr.bf16.gmra.mrb[0].mxu0 %v3777
      %v3854 = vpop.f32.mrb[0].mxu0
      %v3855 = vadd.f32 0.0, %v3854
      %v3856 = vpop.f32.mrb[0].mxu0
      %v3857 = vpop.f32.mrb[0].mxu0
      %v3858 = vadd.f32 0.0, %v3857
      %v3859 = vpop.f32.mrb[0].mxu0
      %3860 = vmatprep.mubr.bf16.mxu0 0
      %3861 = vmatmul.mubr.bf16.gmra.mrb[0].mxu0 %v3780
      %v3862 = vpop.f32.mrb[0].mxu0
      %v3863 = vadd.f32 0.0, %v3862
      %v3864 = vpop.f32.mrb[0].mxu0
      %v3865 = vpop.f32.mrb[0].mxu0
      %v3866 = vadd.f32 0.0, %v3865
      %v3867 = vpop.f32.mrb[0].mxu0
      %3868 = vmatprep.mubr.bf16.mxu0 0
      %3869 = vmatmul.mubr.bf16.gmra.mrb[0].mxu0 %v3783
      %v3870 = vpop.f32.mrb[0].mxu0
      %v3871 = vadd.f32 0.0, %v3870
      %v3872 = vpop.f32.mrb[0].mxu0
      %v3873 = vpop.f32.mrb[0].mxu0
      %v3874 = vadd.f32 0.0, %v3873
      %v3875 = vpop.f32.mrb[0].mxu0
      %3876 = vmatprep.mubr.bf16.mxu0 0
      %3877 = vmatmul.mubr.bf16.gmra.mrb[0].mxu0 %v3786
      %v3878 = vpop.f32.mrb[0].mxu0
      %v3879 = vadd.f32 0.0, %v3878
      %v3880 = vpop.f32.mrb[0].mxu0
      %v3881 = vpop.f32.mrb[0].mxu0
      %v3882 = vadd.f32 0.0, %v3881
      %v3883 = vpop.f32.mrb[0].mxu0
      %3884 = vdwg.mxu0
      %v3885 = vadd.f32 %v3629, %v3823
      %v3886 = vadd.f32 %v3632, %v3826
      %v3887 = vadd.f32 %v3637, %v3831
      %v3888 = vadd.f32 %v3640, %v3834
      %v3889 = vadd.f32 %v3645, %v3839
      %v3890 = vadd.f32 %v3648, %v3842
      %v3891 = vadd.f32 %v3653, %v3847
      %v3892 = vadd.f32 %v3656, %v3850
      %v3893 = vadd.f32 %v3661, %v3855
      %v3894 = vadd.f32 %v3664, %v3858
      %v3895 = vadd.f32 %v3669, %v3863
      %v3896 = vadd.f32 %v3672, %v3866
      %v3897 = vadd.f32 %v3677, %v3871
      %v3898 = vadd.f32 %v3680, %v3874
      %v3899 = vadd.f32 %v3685, %v3879
      %v3900 = vadd.f32 %v3688, %v3882
      %v3901 = vpack.c.bf16 %v3330, %v3329
      %s3902 = scalar_lea.vmem %s3, 24
      %v3903 = vld [vmem:[%s3902] sm:$0xf]
      %v3904 = vld [vmem:[%s3902 + $0x4] sm:$0xf]
      %v3907 = vunpack.c.l.b16 %v3903
      %v3908 = vunpack.c.l.b16 %v3904
      %v3909 = vpack.c.b16 %v3908, %v3907
      %v3912 = vsel %vm3237, %v3901, 0
      %3914 = vmatprep.subr.bf16.mxu0 0
      %3915 = vmatpush1.bf16.msra.mxu0 %v3909
      %3916 = vmatprep.subr.bf16.mxu0 0
      %3917 = vmatpush1.bf16.msra.mxu0 0
      %3918 = vmatprep.subr.bf16.mxu0 0
      %3919 = vmatpush1.bf16.msra.mxu0 0
      %3920 = vmatprep.subr.bf16.mxu0 0
      %3921 = vmatpush1.bf16.msra.mxu0 0
      %3922 = vmatprep.subr.bf16.mxu0 0
      %3923 = vmatpush1.bf16.msra.mxu0 0
      %3924 = vmatprep.subr.bf16.mxu0 0
      %3925 = vmatpush1.bf16.msra.mxu0 0
      %3926 = vmatprep.subr.bf16.mxu0 0
      %3927 = vmatpush1.bf16.msra.mxu0 0
      %3928 = vmatprep.subr.bf16.mxu0 0
      %3929 = vmatpush1.bf16.msra.mxu0 0
      %3930 = vmatprep.subr.bf16.mxu0 0
      %3931 = vmatpush1.bf16.msra.mxu0 0
      %3932 = vmatprep.subr.bf16.mxu0 0
      %3933 = vmatpush1.bf16.msra.mxu0 0
      %3934 = vmatprep.subr.bf16.mxu0 0
      %3935 = vmatpush1.bf16.msra.mxu0 0
      %3936 = vmatprep.subr.bf16.mxu0 0
      %3937 = vmatpush1.bf16.msra.mxu0 0
      %3938 = vmatprep.subr.bf16.mxu0 0
      %3939 = vmatpush1.bf16.msra.mxu0 0
      %3940 = vmatprep.subr.bf16.mxu0 0
      %3941 = vmatpush1.bf16.msra.mxu0 0
      %3942 = vmatprep.subr.bf16.mxu0 0
      %3943 = vmatpush1.bf16.msra.mxu0 0
      %3944 = vmatprep.subr.bf16.mxu0 0
      %3945 = vmatpush1.bf16.msra.mxu0 0
      %3946 = vmatprep.mubr.bf16.mxu0 0
      %3947 = vmatmul.mubr.bf16.gmra.mrb[0].mxu0 %v3574
      %v3948 = vpop.f32.mrb[0].mxu0
      %v3949 = vadd.f32 0.0, %v3948
      %v3950 = vpop.f32.mrb[0].mxu0
      %v3951 = vpop.f32.mrb[0].mxu0
      %v3952 = vadd.f32 0.0, %v3951
      %v3953 = vpop.f32.mrb[0].mxu0
      %3954 = vmatprep.mubr.bf16.mxu0 0
      %3955 = vmatmul.mubr.bf16.gmra.mrb[0].mxu0 %v3577
      %v3956 = vpop.f32.mrb[0].mxu0
      %v3957 = vadd.f32 0.0, %v3956
      %v3958 = vpop.f32.mrb[0].mxu0
      %v3959 = vpop.f32.mrb[0].mxu0
      %v3960 = vadd.f32 0.0, %v3959
      %v3961 = vpop.f32.mrb[0].mxu0
      %3962 = vmatprep.mubr.bf16.mxu0 0
      %3963 = vmatmul.mubr.bf16.gmra.mrb[0].mxu0 %v3580
      %v3964 = vpop.f32.mrb[0].mxu0
      %v3965 = vadd.f32 0.0, %v3964
      %v3966 = vpop.f32.mrb[0].mxu0
      %v3967 = vpop.f32.mrb[0].mxu0
      %v3968 = vadd.f32 0.0, %v3967
      %v3969 = vpop.f32.mrb[0].mxu0
      %3970 = vmatprep.mubr.bf16.mxu0 0
      %3971 = vmatmul.mubr.bf16.gmra.mrb[0].mxu0 %v3583
      %v3972 = vpop.f32.mrb[0].mxu0
      %v3973 = vadd.f32 0.0, %v3972
      %v3974 = vpop.f32.mrb[0].mxu0
      %v3975 = vpop.f32.mrb[0].mxu0
      %v3976 = vadd.f32 0.0, %v3975
      %v3977 = vpop.f32.mrb[0].mxu0
      %3978 = vmatprep.mubr.bf16.mxu0 0
      %3979 = vmatmul.mubr.bf16.gmra.mrb[0].mxu0 %v3586
      %v3980 = vpop.f32.mrb[0].mxu0
      %v3981 = vadd.f32 0.0, %v3980
      %v3982 = vpop.f32.mrb[0].mxu0
      %v3983 = vpop.f32.mrb[0].mxu0
      %v3984 = vadd.f32 0.0, %v3983
      %v3985 = vpop.f32.mrb[0].mxu0
      %3986 = vmatprep.mubr.bf16.mxu0 0
      %3987 = vmatmul.mubr.bf16.gmra.mrb[0].mxu0 %v3589
      %v3988 = vpop.f32.mrb[0].mxu0
      %v3989 = vadd.f32 0.0, %v3988
      %v3990 = vpop.f32.mrb[0].mxu0
      %v3991 = vpop.f32.mrb[0].mxu0
      %v3992 = vadd.f32 0.0, %v3991
      %v3993 = vpop.f32.mrb[0].mxu0
      %3994 = vmatprep.mubr.bf16.mxu0 0
      %3995 = vmatmul.mubr.bf16.gmra.mrb[0].mxu0 %v3592
      %v3996 = vpop.f32.mrb[0].mxu0
      %v3997 = vadd.f32 0.0, %v3996
      %v3998 = vpop.f32.mrb[0].mxu0
      %v3999 = vpop.f32.mrb[0].mxu0
      %v4000 = vadd.f32 0.0, %v3999
      %v4001 = vpop.f32.mrb[0].mxu0
      %4002 = vmatprep.mubr.bf16.mxu0 0
      %4003 = vmatmul.mubr.bf16.gmra.mrb[0].mxu0 %v3912
      %v4004 = vpop.f32.mrb[0].mxu0
      %v4005 = vadd.f32 0.0, %v4004
      %v4006 = vpop.f32.mrb[0].mxu0
      %v4007 = vpop.f32.mrb[0].mxu0
      %v4008 = vadd.f32 0.0, %v4007
      %v4009 = vpop.f32.mrb[0].mxu0
      %4010 = vdwg.mxu0
      %v4011 = vadd.f32 %v3885, %v3949
      %v4012 = vadd.f32 %v3886, %v3952
      %v4013 = vadd.f32 %v3887, %v3957
      %v4014 = vadd.f32 %v3888, %v3960
      %v4015 = vadd.f32 %v3889, %v3965
      %v4016 = vadd.f32 %v3890, %v3968
      %v4017 = vadd.f32 %v3891, %v3973
      %v4018 = vadd.f32 %v3892, %v3976
      %v4019 = vadd.f32 %v3893, %v3981
      %v4020 = vadd.f32 %v3894, %v3984
      %v4021 = vadd.f32 %v3895, %v3989
      %v4022 = vadd.f32 %v3896, %v3992
      %v4023 = vadd.f32 %v3897, %v3997
      %v4024 = vadd.f32 %v3898, %v4000
      %v4025 = vadd.f32 %v3899, %v4005
      %v4026 = vadd.f32 %v3900, %v4008
      %v4030 = vrot.slane %v3329, 1
      %v4031 = vrot.slane %v3330, 1
      %v4032 = vsel %vm3369, %v4030, %v4031
      %v4033 = vrot.slane %v3331, 1
      %v4034 = vsel %vm3369, %v4031, %v4033
      %v4037 = vpack.c.bf16 %v4034, %v4032
      %s4038 = scalar_lea.vmem %s3, 32
      %v4039 = vld [vmem:[%s4038] sm:$0xf]
      %v4040 = vld [vmem:[%s4038 + $0x4] sm:$0xf]
      %v4043 = vunpack.c.l.b16 %v4039
      %v4044 = vunpack.c.l.b16 %v4040
      %v4045 = vpack.c.b16 %v4044, %v4043
      %v4048 = vsel %vm3237, %v4037, 0
      %4050 = vmatprep.subr.bf16.mxu0 0
      %4051 = vmatpush1.bf16.msra.mxu0 %v4045
      %4052 = vmatprep.subr.bf16.mxu0 0
      %4053 = vmatpush1.bf16.msra.mxu0 0
      %4054 = vmatprep.subr.bf16.mxu0 0
      %4055 = vmatpush1.bf16.msra.mxu0 0
      %4056 = vmatprep.subr.bf16.mxu0 0
      %4057 = vmatpush1.bf16.msra.mxu0 0
      %4058 = vmatprep.subr.bf16.mxu0 0
      %4059 = vmatpush1.bf16.msra.mxu0 0
      %4060 = vmatprep.subr.bf16.mxu0 0
      %4061 = vmatpush1.bf16.msra.mxu0 0
      %4062 = vmatprep.subr.bf16.mxu0 0
      %4063 = vmatpush1.bf16.msra.mxu0 0
      %4064 = vmatprep.subr.bf16.mxu0 0
      %4065 = vmatpush1.bf16.msra.mxu0 0
      %4066 = vmatprep.subr.bf16.mxu0 0
      %4067 = vmatpush1.bf16.msra.mxu0 0
      %4068 = vmatprep.subr.bf16.mxu0 0
      %4069 = vmatpush1.bf16.msra.mxu0 0
      %4070 = vmatprep.subr.bf16.mxu0 0
      %4071 = vmatpush1.bf16.msra.mxu0 0
      %4072 = vmatprep.subr.bf16.mxu0 0
      %4073 = vmatpush1.bf16.msra.mxu0 0
      %4074 = vmatprep.subr.bf16.mxu0 0
      %4075 = vmatpush1.bf16.msra.mxu0 0
      %4076 = vmatprep.subr.bf16.mxu0 0
      %4077 = vmatpush1.bf16.msra.mxu0 0
      %4078 = vmatprep.subr.bf16.mxu0 0
      %4079 = vmatpush1.bf16.msra.mxu0 0
      %4080 = vmatprep.subr.bf16.mxu0 0
      %4081 = vmatpush1.bf16.msra.mxu0 0
      %4082 = vmatprep.mubr.bf16.mxu0 0
      %4083 = vmatmul.mubr.bf16.gmra.mrb[0].mxu0 %v3447
      %v4084 = vpop.f32.mrb[0].mxu0
      %v4085 = vadd.f32 0.0, %v4084
      %v4086 = vpop.f32.mrb[0].mxu0
      %v4087 = vpop.f32.mrb[0].mxu0
      %v4088 = vadd.f32 0.0, %v4087
      %v4089 = vpop.f32.mrb[0].mxu0
      %4090 = vmatprep.mubr.bf16.mxu0 0
      %4091 = vmatmul.mubr.bf16.gmra.mrb[0].mxu0 %v3450
      %v4092 = vpop.f32.mrb[0].mxu0
      %v4093 = vadd.f32 0.0, %v4092
      %v4094 = vpop.f32.mrb[0].mxu0
      %v4095 = vpop.f32.mrb[0].mxu0
      %v4096 = vadd.f32 0.0, %v4095
      %v4097 = vpop.f32.mrb[0].mxu0
      %4098 = vmatprep.mubr.bf16.mxu0 0
      %4099 = vmatmul.mubr.bf16.gmra.mrb[0].mxu0 %v3453
      %v4100 = vpop.f32.mrb[0].mxu0
      %v4101 = vadd.f32 0.0, %v4100
      %v4102 = vpop.f32.mrb[0].mxu0
      %v4103 = vpop.f32.mrb[0].mxu0
      %v4104 = vadd.f32 0.0, %v4103
      %v4105 = vpop.f32.mrb[0].mxu0
      %4106 = vmatprep.mubr.bf16.mxu0 0
      %4107 = vmatmul.mubr.bf16.gmra.mrb[0].mxu0 %v3456
      %v4108 = vpop.f32.mrb[0].mxu0
      %v4109 = vadd.f32 0.0, %v4108
      %v4110 = vpop.f32.mrb[0].mxu0
      %v4111 = vpop.f32.mrb[0].mxu0
      %v4112 = vadd.f32 0.0, %v4111
      %v4113 = vpop.f32.mrb[0].mxu0
      %4114 = vmatprep.mubr.bf16.mxu0 0
      %4115 = vmatmul.mubr.bf16.gmra.mrb[0].mxu0 %v3459
      %v4116 = vpop.f32.mrb[0].mxu0
      %v4117 = vadd.f32 0.0, %v4116
      %v4118 = vpop.f32.mrb[0].mxu0
      %v4119 = vpop.f32.mrb[0].mxu0
      %v4120 = vadd.f32 0.0, %v4119
      %v4121 = vpop.f32.mrb[0].mxu0
      %4122 = vmatprep.mubr.bf16.mxu0 0
      %4123 = vmatmul.mubr.bf16.gmra.mrb[0].mxu0 %v3462
      %v4124 = vpop.f32.mrb[0].mxu0
      %v4125 = vadd.f32 0.0, %v4124
      %v4126 = vpop.f32.mrb[0].mxu0
      %v4127 = vpop.f32.mrb[0].mxu0
      %v4128 = vadd.f32 0.0, %v4127
      %v4129 = vpop.f32.mrb[0].mxu0
      %4130 = vmatprep.mubr.bf16.mxu0 0
      %4131 = vmatmul.mubr.bf16.gmra.mrb[0].mxu0 %v3465
      %v4132 = vpop.f32.mrb[0].mxu0
      %v4133 = vadd.f32 0.0, %v4132
      %v4134 = vpop.f32.mrb[0].mxu0
      %v4135 = vpop.f32.mrb[0].mxu0
      %v4136 = vadd.f32 0.0, %v4135
      %v4137 = vpop.f32.mrb[0].mxu0
      %4138 = vmatprep.mubr.bf16.mxu0 0
      %4139 = vmatmul.mubr.bf16.gmra.mrb[0].mxu0 %v4048
      %v4140 = vpop.f32.mrb[0].mxu0
      %v4141 = vadd.f32 0.0, %v4140
      %v4142 = vpop.f32.mrb[0].mxu0
      %v4143 = vpop.f32.mrb[0].mxu0
      %v4144 = vadd.f32 0.0, %v4143
      %v4145 = vpop.f32.mrb[0].mxu0
      %4146 = vdwg.mxu0
      %v4147 = vadd.f32 %v4011, %v4085
      %v4148 = vadd.f32 %v4012, %v4088
      %v4149 = vadd.f32 %v4013, %v4093
      %v4150 = vadd.f32 %v4014, %v4096
      %v4151 = vadd.f32 %v4015, %v4101
      %v4152 = vadd.f32 %v4016, %v4104
      %v4153 = vadd.f32 %v4017, %v4109
      %v4154 = vadd.f32 %v4018, %v4112
      %v4155 = vadd.f32 %v4019, %v4117
      %v4156 = vadd.f32 %v4020, %v4120
      %v4157 = vadd.f32 %v4021, %v4125
      %v4158 = vadd.f32 %v4022, %v4128
      %v4159 = vadd.f32 %v4023, %v4133
      %v4160 = vadd.f32 %v4024, %v4136
      %v4161 = vadd.f32 %v4025, %v4141
      %v4162 = vadd.f32 %v4026, %v4144
      %v4163 = vrot.slane %v3329, 2
      %v4164 = vrot.slane %v3330, 2
      %v4165 = vsel %vm1664, %v4163, %v4164
      %v4166 = vrot.slane %v3331, 2
      %v4167 = vsel %vm1664, %v4164, %v4166
      %v4170 = vpack.c.bf16 %v4167, %v4165
      %s4171 = scalar_lea.vmem %s3, 40
      %v4172 = vld [vmem:[%s4171] sm:$0xf]
      %v4173 = vld [vmem:[%s4171 + $0x4] sm:$0xf]
      %v4176 = vunpack.c.l.b16 %v4172
      %v4177 = vunpack.c.l.b16 %v4173
      %v4178 = vpack.c.b16 %v4177, %v4176
      %v4181 = vsel %vm3237, %v4170, 0
      %4183 = vmatprep.subr.bf16.mxu0 0
      %4184 = vmatpush1.bf16.msra.mxu0 %v4178
      %4185 = vmatprep.subr.bf16.mxu0 0
      %4186 = vmatpush1.bf16.msra.mxu0 0
      %4187 = vmatprep.subr.bf16.mxu0 0
      %4188 = vmatpush1.bf16.msra.mxu0 0
      %4189 = vmatprep.subr.bf16.mxu0 0
      %4190 = vmatpush1.bf16.msra.mxu0 0
      %4191 = vmatprep.subr.bf16.mxu0 0
      %4192 = vmatpush1.bf16.msra.mxu0 0
      %4193 = vmatprep.subr.bf16.mxu0 0
      %4194 = vmatpush1.bf16.msra.mxu0 0
      %4195 = vmatprep.subr.bf16.mxu0 0
      %4196 = vmatpush1.bf16.msra.mxu0 0
      %4197 = vmatprep.subr.bf16.mxu0 0
      %4198 = vmatpush1.bf16.msra.mxu0 0
      %4199 = vmatprep.subr.bf16.mxu0 0
      %4200 = vmatpush1.bf16.msra.mxu0 0
      %4201 = vmatprep.subr.bf16.mxu0 0
      %4202 = vmatpush1.bf16.msra.mxu0 0
      %4203 = vmatprep.subr.bf16.mxu0 0
      %4204 = vmatpush1.bf16.msra.mxu0 0
      %4205 = vmatprep.subr.bf16.mxu0 0
      %4206 = vmatpush1.bf16.msra.mxu0 0
      %4207 = vmatprep.subr.bf16.mxu0 0
      %4208 = vmatpush1.bf16.msra.mxu0 0
      %4209 = vmatprep.subr.bf16.mxu0 0
      %4210 = vmatpush1.bf16.msra.mxu0 0
      %4211 = vmatprep.subr.bf16.mxu0 0
      %4212 = vmatpush1.bf16.msra.mxu0 0
      %4213 = vmatprep.subr.bf16.mxu0 0
      %4214 = vmatpush1.bf16.msra.mxu0 0
      %4215 = vmatprep.mubr.bf16.mxu0 0
      %4216 = vmatmul.mubr.bf16.gmra.mrb[0].mxu0 %v3768
      %v4217 = vpop.f32.mrb[0].mxu0
      %v4218 = vadd.f32 0.0, %v4217
      %v4219 = vpop.f32.mrb[0].mxu0
      %v4220 = vpop.f32.mrb[0].mxu0
      %v4221 = vadd.f32 0.0, %v4220
      %v4222 = vpop.f32.mrb[0].mxu0
      %4223 = vmatprep.mubr.bf16.mxu0 0
      %4224 = vmatmul.mubr.bf16.gmra.mrb[0].mxu0 %v3771
      %v4225 = vpop.f32.mrb[0].mxu0
      %v4226 = vadd.f32 0.0, %v4225
      %v4227 = vpop.f32.mrb[0].mxu0
      %v4228 = vpop.f32.mrb[0].mxu0
      %v4229 = vadd.f32 0.0, %v4228
      %v4230 = vpop.f32.mrb[0].mxu0
      %4231 = vmatprep.mubr.bf16.mxu0 0
      %4232 = vmatmul.mubr.bf16.gmra.mrb[0].mxu0 %v3774
      %v4233 = vpop.f32.mrb[0].mxu0
      %v4234 = vadd.f32 0.0, %v4233
      %v4235 = vpop.f32.mrb[0].mxu0
      %v4236 = vpop.f32.mrb[0].mxu0
      %v4237 = vadd.f32 0.0, %v4236
      %v4238 = vpop.f32.mrb[0].mxu0
      %4239 = vmatprep.mubr.bf16.mxu0 0
      %4240 = vmatmul.mubr.bf16.gmra.mrb[0].mxu0 %v3777
      %v4241 = vpop.f32.mrb[0].mxu0
      %v4242 = vadd.f32 0.0, %v4241
      %v4243 = vpop.f32.mrb[0].mxu0
      %v4244 = vpop.f32.mrb[0].mxu0
      %v4245 = vadd.f32 0.0, %v4244
      %v4246 = vpop.f32.mrb[0].mxu0
      %4247 = vmatprep.mubr.bf16.mxu0 0
      %4248 = vmatmul.mubr.bf16.gmra.mrb[0].mxu0 %v3780
      %v4249 = vpop.f32.mrb[0].mxu0
      %v4250 = vadd.f32 0.0, %v4249
      %v4251 = vpop.f32.mrb[0].mxu0
      %v4252 = vpop.f32.mrb[0].mxu0
      %v4253 = vadd.f32 0.0, %v4252
      %v4254 = vpop.f32.mrb[0].mxu0
      %4255 = vmatprep.mubr.bf16.mxu0 0
      %4256 = vmatmul.mubr.bf16.gmra.mrb[0].mxu0 %v3783
      %v4257 = vpop.f32.mrb[0].mxu0
      %v4258 = vadd.f32 0.0, %v4257
      %v4259 = vpop.f32.mrb[0].mxu0
      %v4260 = vpop.f32.mrb[0].mxu0
      %v4261 = vadd.f32 0.0, %v4260
      %v4262 = vpop.f32.mrb[0].mxu0
      %4263 = vmatprep.mubr.bf16.mxu0 0
      %4264 = vmatmul.mubr.bf16.gmra.mrb[0].mxu0 %v3786
      %v4265 = vpop.f32.mrb[0].mxu0
      %v4266 = vadd.f32 0.0, %v4265
      %v4267 = vpop.f32.mrb[0].mxu0
      %v4268 = vpop.f32.mrb[0].mxu0
      %v4269 = vadd.f32 0.0, %v4268
      %v4270 = vpop.f32.mrb[0].mxu0
      %4271 = vmatprep.mubr.bf16.mxu0 0
      %4272 = vmatmul.mubr.bf16.gmra.mrb[0].mxu0 %v4181
      %v4273 = vpop.f32.mrb[0].mxu0
      %v4274 = vadd.f32 0.0, %v4273
      %v4275 = vpop.f32.mrb[0].mxu0
      %v4276 = vpop.f32.mrb[0].mxu0
      %v4277 = vadd.f32 0.0, %v4276
      %v4278 = vpop.f32.mrb[0].mxu0
      %4279 = vdwg.mxu0
      %v4280 = vadd.f32 %v4147, %v4218
      %v4281 = vadd.f32 %v4148, %v4221
      %v4282 = vadd.f32 %v4149, %v4226
      %v4283 = vadd.f32 %v4150, %v4229
      %v4284 = vadd.f32 %v4151, %v4234
      %v4285 = vadd.f32 %v4152, %v4237
      %v4286 = vadd.f32 %v4153, %v4242
      %v4287 = vadd.f32 %v4154, %v4245
      %v4288 = vadd.f32 %v4155, %v4250
      %v4289 = vadd.f32 %v4156, %v4253
      %v4290 = vadd.f32 %v4157, %v4258
      %v4291 = vadd.f32 %v4158, %v4261
      %v4292 = vadd.f32 %v4159, %v4266
      %v4293 = vadd.f32 %v4160, %v4269
      %v4294 = vadd.f32 %v4161, %v4274
      %v4295 = vadd.f32 %v4162, %v4277
      %v4296 = vpack.c.bf16 %v3333, %v3332
      %s4297 = scalar_lea.vmem %s3, 48
      %v4298 = vld [vmem:[%s4297] sm:$0xf]
      %v4299 = vld [vmem:[%s4297 + $0x4] sm:$0xf]
      %v4302 = vunpack.c.l.b16 %v4298
      %v4303 = vunpack.c.l.b16 %v4299
      %v4304 = vpack.c.b16 %v4303, %v4302
      %v4307 = vsel %vm3237, %v4296, 0
      %4309 = vmatprep.subr.bf16.mxu0 0
      %4310 = vmatpush1.bf16.msra.mxu0 %v4304
      %4311 = vmatprep.subr.bf16.mxu0 0
      %4312 = vmatpush1.bf16.msra.mxu0 0
      %4313 = vmatprep.subr.bf16.mxu0 0
      %4314 = vmatpush1.bf16.msra.mxu0 0
      %4315 = vmatprep.subr.bf16.mxu0 0
      %4316 = vmatpush1.bf16.msra.mxu0 0
      %4317 = vmatprep.subr.bf16.mxu0 0
      %4318 = vmatpush1.bf16.msra.mxu0 0
      %4319 = vmatprep.subr.bf16.mxu0 0
      %4320 = vmatpush1.bf16.msra.mxu0 0
      %4321 = vmatprep.subr.bf16.mxu0 0
      %4322 = vmatpush1.bf16.msra.mxu0 0
      %4323 = vmatprep.subr.bf16.mxu0 0
      %4324 = vmatpush1.bf16.msra.mxu0 0
      %4325 = vmatprep.subr.bf16.mxu0 0
      %4326 = vmatpush1.bf16.msra.mxu0 0
      %4327 = vmatprep.subr.bf16.mxu0 0
      %4328 = vmatpush1.bf16.msra.mxu0 0
      %4329 = vmatprep.subr.bf16.mxu0 0
      %4330 = vmatpush1.bf16.msra.mxu0 0
      %4331 = vmatprep.subr.bf16.mxu0 0
      %4332 = vmatpush1.bf16.msra.mxu0 0
      %4333 = vmatprep.subr.bf16.mxu0 0
      %4334 = vmatpush1.bf16.msra.mxu0 0
      %4335 = vmatprep.subr.bf16.mxu0 0
      %4336 = vmatpush1.bf16.msra.mxu0 0
      %4337 = vmatprep.subr.bf16.mxu0 0
      %4338 = vmatpush1.bf16.msra.mxu0 0
      %4339 = vmatprep.subr.bf16.mxu0 0
      %4340 = vmatpush1.bf16.msra.mxu0 0
      %4341 = vmatprep.mubr.bf16.mxu0 0
      %4342 = vmatmul.mubr.bf16.gmra.mrb[0].mxu0 %v3577
      %v4343 = vpop.f32.mrb[0].mxu0
      %v4344 = vadd.f32 0.0, %v4343
      %v4345 = vpop.f32.mrb[0].mxu0
      %v4346 = vpop.f32.mrb[0].mxu0
      %v4347 = vadd.f32 0.0, %v4346
      %v4348 = vpop.f32.mrb[0].mxu0
      %4349 = vmatprep.mubr.bf16.mxu0 0
      %4350 = vmatmul.mubr.bf16.gmra.mrb[0].mxu0 %v3580
      %v4351 = vpop.f32.mrb[0].mxu0
      %v4352 = vadd.f32 0.0, %v4351
      %v4353 = vpop.f32.mrb[0].mxu0
      %v4354 = vpop.f32.mrb[0].mxu0
      %v4355 = vadd.f32 0.0, %v4354
      %v4356 = vpop.f32.mrb[0].mxu0
      %4357 = vmatprep.mubr.bf16.mxu0 0
      %4358 = vmatmul.mubr.bf16.gmra.mrb[0].mxu0 %v3583
      %v4359 = vpop.f32.mrb[0].mxu0
      %v4360 = vadd.f32 0.0, %v4359
      %v4361 = vpop.f32.mrb[0].mxu0
      %v4362 = vpop.f32.mrb[0].mxu0
      %v4363 = vadd.f32 0.0, %v4362
      %v4364 = vpop.f32.mrb[0].mxu0
      %4365 = vmatprep.mubr.bf16.mxu0 0
      %4366 = vmatmul.mubr.bf16.gmra.mrb[0].mxu0 %v3586
      %v4367 = vpop.f32.mrb[0].mxu0
      %v4368 = vadd.f32 0.0, %v4367
      %v4369 = vpop.f32.mrb[0].mxu0
      %v4370 = vpop.f32.mrb[0].mxu0
      %v4371 = vadd.f32 0.0, %v4370
      %v4372 = vpop.f32.mrb[0].mxu0
      %4373 = vmatprep.mubr.bf16.mxu0 0
      %4374 = vmatmul.mubr.bf16.gmra.mrb[0].mxu0 %v3589
      %v4375 = vpop.f32.mrb[0].mxu0
      %v4376 = vadd.f32 0.0, %v4375
      %v4377 = vpop.f32.mrb[0].mxu0
      %v4378 = vpop.f32.mrb[0].mxu0
      %v4379 = vadd.f32 0.0, %v4378
      %v4380 = vpop.f32.mrb[0].mxu0
      %4381 = vmatprep.mubr.bf16.mxu0 0
      %4382 = vmatmul.mubr.bf16.gmra.mrb[0].mxu0 %v3592
      %v4383 = vpop.f32.mrb[0].mxu0
      %v4384 = vadd.f32 0.0, %v4383
      %v4385 = vpop.f32.mrb[0].mxu0
      %v4386 = vpop.f32.mrb[0].mxu0
      %v4387 = vadd.f32 0.0, %v4386
      %v4388 = vpop.f32.mrb[0].mxu0
      %4389 = vmatprep.mubr.bf16.mxu0 0
      %4390 = vmatmul.mubr.bf16.gmra.mrb[0].mxu0 %v3912
      %v4391 = vpop.f32.mrb[0].mxu0
      %v4392 = vadd.f32 0.0, %v4391
      %v4393 = vpop.f32.mrb[0].mxu0
      %v4394 = vpop.f32.mrb[0].mxu0
      %v4395 = vadd.f32 0.0, %v4394
      %v4396 = vpop.f32.mrb[0].mxu0
      %4397 = vmatprep.mubr.bf16.mxu0 0
      %4398 = vmatmul.mubr.bf16.gmra.mrb[0].mxu0 %v4307
      %v4399 = vpop.f32.mrb[0].mxu0
      %v4400 = vadd.f32 0.0, %v4399
      %v4401 = vpop.f32.mrb[0].mxu0
      %v4402 = vpop.f32.mrb[0].mxu0
      %v4403 = vadd.f32 0.0, %v4402
      %v4404 = vpop.f32.mrb[0].mxu0
      %4405 = vdwg.mxu0
      %v4406 = vadd.f32 %v4280, %v4344
      %v4407 = vadd.f32 %v4281, %v4347
      %v4408 = vadd.f32 %v4282, %v4352
      %v4409 = vadd.f32 %v4283, %v4355
      %v4410 = vadd.f32 %v4284, %v4360
      %v4411 = vadd.f32 %v4285, %v4363
      %v4412 = vadd.f32 %v4286, %v4368
      %v4413 = vadd.f32 %v4287, %v4371
      %v4414 = vadd.f32 %v4288, %v4376
      %v4415 = vadd.f32 %v4289, %v4379
      %v4416 = vadd.f32 %v4290, %v4384
      %v4417 = vadd.f32 %v4291, %v4387
      %v4418 = vadd.f32 %v4292, %v4392
      %v4419 = vadd.f32 %v4293, %v4395
      %v4420 = vadd.f32 %v4294, %v4400
      %v4421 = vadd.f32 %v4295, %v4403
      %v4425 = vrot.slane %v3332, 1
      %v4426 = vrot.slane %v3333, 1
      %v4427 = vsel %vm3369, %v4425, %v4426
      %v4428 = vrot.slane %v3334, 1
      %v4429 = vsel %vm3369, %v4426, %v4428
      %v4432 = vpack.c.bf16 %v4429, %v4427
      %s4433 = scalar_lea.vmem %s3, 56
      %v4434 = vld [vmem:[%s4433] sm:$0xf]
      %v4435 = vld [vmem:[%s4433 + $0x4] sm:$0xf]
      %v4438 = vunpack.c.l.b16 %v4434
      %v4439 = vunpack.c.l.b16 %v4435
      %v4440 = vpack.c.b16 %v4439, %v4438
      %v4443 = vsel %vm3237, %v4432, 0
      %4445 = vmatprep.subr.bf16.mxu0 0
      %4446 = vmatpush1.bf16.msra.mxu0 %v4440
      %4447 = vmatprep.subr.bf16.mxu0 0
      %4448 = vmatpush1.bf16.msra.mxu0 0
      %4449 = vmatprep.subr.bf16.mxu0 0
      %4450 = vmatpush1.bf16.msra.mxu0 0
      %4451 = vmatprep.subr.bf16.mxu0 0
      %4452 = vmatpush1.bf16.msra.mxu0 0
      %4453 = vmatprep.subr.bf16.mxu0 0
      %4454 = vmatpush1.bf16.msra.mxu0 0
      %4455 = vmatprep.subr.bf16.mxu0 0
      %4456 = vmatpush1.bf16.msra.mxu0 0
      %4457 = vmatprep.subr.bf16.mxu0 0
      %4458 = vmatpush1.bf16.msra.mxu0 0
      %4459 = vmatprep.subr.bf16.mxu0 0
      %4460 = vmatpush1.bf16.msra.mxu0 0
      %4461 = vmatprep.subr.bf16.mxu0 0
      %4462 = vmatpush1.bf16.msra.mxu0 0
      %4463 = vmatprep.subr.bf16.mxu0 0
      %4464 = vmatpush1.bf16.msra.mxu0 0
      %4465 = vmatprep.subr.bf16.mxu0 0
      %4466 = vmatpush1.bf16.msra.mxu0 0
      %4467 = vmatprep.subr.bf16.mxu0 0
      %4468 = vmatpush1.bf16.msra.mxu0 0
      %4469 = vmatprep.subr.bf16.mxu0 0
      %4470 = vmatpush1.bf16.msra.mxu0 0
      %4471 = vmatprep.subr.bf16.mxu0 0
      %4472 = vmatpush1.bf16.msra.mxu0 0
      %4473 = vmatprep.subr.bf16.mxu0 0
      %4474 = vmatpush1.bf16.msra.mxu0 0
      %4475 = vmatprep.subr.bf16.mxu0 0
      %4476 = vmatpush1.bf16.msra.mxu0 0
      %4477 = vmatprep.mubr.bf16.mxu0 0
      %4478 = vmatmul.mubr.bf16.gmra.mrb[0].mxu0 %v3450
      %v4479 = vpop.f32.mrb[0].mxu0
      %v4480 = vadd.f32 0.0, %v4479
      %v4481 = vpop.f32.mrb[0].mxu0
      %v4482 = vpop.f32.mrb[0].mxu0
      %v4483 = vadd.f32 0.0, %v4482
      %v4484 = vpop.f32.mrb[0].mxu0
      %4485 = vmatprep.mubr.bf16.mxu0 0
      %4486 = vmatmul.mubr.bf16.gmra.mrb[0].mxu0 %v3453
      %v4487 = vpop.f32.mrb[0].mxu0
      %v4488 = vadd.f32 0.0, %v4487
      %v4489 = vpop.f32.mrb[0].mxu0
      %v4490 = vpop.f32.mrb[0].mxu0
      %v4491 = vadd.f32 0.0, %v4490
      %v4492 = vpop.f32.mrb[0].mxu0
      %4493 = vmatprep.mubr.bf16.mxu0 0
      %4494 = vmatmul.mubr.bf16.gmra.mrb[0].mxu0 %v3456
      %v4495 = vpop.f32.mrb[0].mxu0
      %v4496 = vadd.f32 0.0, %v4495
      %v4497 = vpop.f32.mrb[0].mxu0
      %v4498 = vpop.f32.mrb[0].mxu0
      %v4499 = vadd.f32 0.0, %v4498
      %v4500 = vpop.f32.mrb[0].mxu0
      %4501 = vmatprep.mubr.bf16.mxu0 0
      %4502 = vmatmul.mubr.bf16.gmra.mrb[0].mxu0 %v3459
      %v4503 = vpop.f32.mrb[0].mxu0
      %v4504 = vadd.f32 0.0, %v4503
      %v4505 = vpop.f32.mrb[0].mxu0
      %v4506 = vpop.f32.mrb[0].mxu0
      %v4507 = vadd.f32 0.0, %v4506
      %v4508 = vpop.f32.mrb[0].mxu0
      %4509 = vmatprep.mubr.bf16.mxu0 0
      %4510 = vmatmul.mubr.bf16.gmra.mrb[0].mxu0 %v3462
      %v4511 = vpop.f32.mrb[0].mxu0
      %v4512 = vadd.f32 0.0, %v4511
      %v4513 = vpop.f32.mrb[0].mxu0
      %v4514 = vpop.f32.mrb[0].mxu0
      %v4515 = vadd.f32 0.0, %v4514
      %v4516 = vpop.f32.mrb[0].mxu0
      %4517 = vmatprep.mubr.bf16.mxu0 0
      %4518 = vmatmul.mubr.bf16.gmra.mrb[0].mxu0 %v3465
      %v4519 = vpop.f32.mrb[0].mxu0
      %v4520 = vadd.f32 0.0, %v4519
      %v4521 = vpop.f32.mrb[0].mxu0
      %v4522 = vpop.f32.mrb[0].mxu0
      %v4523 = vadd.f32 0.0, %v4522
      %v4524 = vpop.f32.mrb[0].mxu0
      %4525 = vmatprep.mubr.bf16.mxu0 0
      %4526 = vmatmul.mubr.bf16.gmra.mrb[0].mxu0 %v4048
      %v4527 = vpop.f32.mrb[0].mxu0
      %v4528 = vadd.f32 0.0, %v4527
      %v4529 = vpop.f32.mrb[0].mxu0
      %v4530 = vpop.f32.mrb[0].mxu0
      %v4531 = vadd.f32 0.0, %v4530
      %v4532 = vpop.f32.mrb[0].mxu0
      %4533 = vmatprep.mubr.bf16.mxu0 0
      %4534 = vmatmul.mubr.bf16.gmra.mrb[0].mxu0 %v4443
      %v4535 = vpop.f32.mrb[0].mxu0
      %v4536 = vadd.f32 0.0, %v4535
      %v4537 = vpop.f32.mrb[0].mxu0
      %v4538 = vpop.f32.mrb[0].mxu0
      %v4539 = vadd.f32 0.0, %v4538
      %v4540 = vpop.f32.mrb[0].mxu0
      %4541 = vdwg.mxu0
      %v4542 = vadd.f32 %v4406, %v4480
      %v4543 = vadd.f32 %v4407, %v4483
      %v4544 = vadd.f32 %v4408, %v4488
      %v4545 = vadd.f32 %v4409, %v4491
      %v4546 = vadd.f32 %v4410, %v4496
      %v4547 = vadd.f32 %v4411, %v4499
      %v4548 = vadd.f32 %v4412, %v4504
      %v4549 = vadd.f32 %v4413, %v4507
      %v4550 = vadd.f32 %v4414, %v4512
      %v4551 = vadd.f32 %v4415, %v4515
      %v4552 = vadd.f32 %v4416, %v4520
      %v4553 = vadd.f32 %v4417, %v4523
      %v4554 = vadd.f32 %v4418, %v4528
      %v4555 = vadd.f32 %v4419, %v4531
      %v4556 = vadd.f32 %v4420, %v4536
      %v4557 = vadd.f32 %v4421, %v4539
      %v4558 = vrot.slane %v3332, 2
      %v4559 = vrot.slane %v3333, 2
      %v4560 = vsel %vm1664, %v4558, %v4559
      %v4561 = vrot.slane %v3334, 2
      %v4562 = vsel %vm1664, %v4559, %v4561
      %v4565 = vpack.c.bf16 %v4562, %v4560
      %s4566 = scalar_lea.vmem %s3, 64
      %v4567 = vld [vmem:[%s4566] sm:$0xf]
      %v4568 = vld [vmem:[%s4566 + $0x4] sm:$0xf]
      %v4571 = vunpack.c.l.b16 %v4567
      %v4572 = vunpack.c.l.b16 %v4568
      %v4573 = vpack.c.b16 %v4572, %v4571
      %v4576 = vsel %vm3237, %v4565, 0
      %4578 = vmatprep.subr.bf16.mxu0 0
      %4579 = vmatpush1.bf16.msra.mxu0 %v4573
      %4580 = vmatprep.subr.bf16.mxu0 0
      %4581 = vmatpush1.bf16.msra.mxu0 0
      %4582 = vmatprep.subr.bf16.mxu0 0
      %4583 = vmatpush1.bf16.msra.mxu0 0
      %4584 = vmatprep.subr.bf16.mxu0 0
      %4585 = vmatpush1.bf16.msra.mxu0 0
      %4586 = vmatprep.subr.bf16.mxu0 0
      %4587 = vmatpush1.bf16.msra.mxu0 0
      %4588 = vmatprep.subr.bf16.mxu0 0
      %4589 = vmatpush1.bf16.msra.mxu0 0
      %4590 = vmatprep.subr.bf16.mxu0 0
      %4591 = vmatpush1.bf16.msra.mxu0 0
      %4592 = vmatprep.subr.bf16.mxu0 0
      %4593 = vmatpush1.bf16.msra.mxu0 0
      %4594 = vmatprep.subr.bf16.mxu0 0
      %4595 = vmatpush1.bf16.msra.mxu0 0
      %4596 = vmatprep.subr.bf16.mxu0 0
      %4597 = vmatpush1.bf16.msra.mxu0 0
      %4598 = vmatprep.subr.bf16.mxu0 0
      %4599 = vmatpush1.bf16.msra.mxu0 0
      %4600 = vmatprep.subr.bf16.mxu0 0
      %4601 = vmatpush1.bf16.msra.mxu0 0
      %4602 = vmatprep.subr.bf16.mxu0 0
      %4603 = vmatpush1.bf16.msra.mxu0 0
      %4604 = vmatprep.subr.bf16.mxu0 0
      %4605 = vmatpush1.bf16.msra.mxu0 0
      %4606 = vmatprep.subr.bf16.mxu0 0
      %4607 = vmatpush1.bf16.msra.mxu0 0
      %4608 = vmatprep.subr.bf16.mxu0 0
      %4609 = vmatpush1.bf16.msra.mxu0 0
      %4610 = vmatprep.mubr.bf16.mxu0 0
      %4611 = vmatmul.mubr.bf16.gmra.mrb[0].mxu0 %v3771
      %v4612 = vpop.f32.mrb[0].mxu0
      %v4613 = vadd.f32 0.0, %v4612
      %v4614 = vpop.f32.mrb[0].mxu0
      %v4615 = vpop.f32.mrb[0].mxu0
      %v4616 = vadd.f32 0.0, %v4615
      %v4617 = vpop.f32.mrb[0].mxu0
      %4618 = vmatprep.mubr.bf16.mxu0 0
      %4619 = vmatmul.mubr.bf16.gmra.mrb[0].mxu0 %v3774
      %v4620 = vpop.f32.mrb[0].mxu0
      %v4621 = vadd.f32 0.0, %v4620
      %v4622 = vpop.f32.mrb[0].mxu0
      %v4623 = vpop.f32.mrb[0].mxu0
      %v4624 = vadd.f32 0.0, %v4623
      %v4625 = vpop.f32.mrb[0].mxu0
      %4626 = vmatprep.mubr.bf16.mxu0 0
      %4627 = vmatmul.mubr.bf16.gmra.mrb[0].mxu0 %v3777
      %v4628 = vpop.f32.mrb[0].mxu0
      %v4629 = vadd.f32 0.0, %v4628
      %v4630 = vpop.f32.mrb[0].mxu0
      %v4631 = vpop.f32.mrb[0].mxu0
      %v4632 = vadd.f32 0.0, %v4631
      %v4633 = vpop.f32.mrb[0].mxu0
      %4634 = vmatprep.mubr.bf16.mxu0 0
      %4635 = vmatmul.mubr.bf16.gmra.mrb[0].mxu0 %v3780
      %v4636 = vpop.f32.mrb[0].mxu0
      %v4637 = vadd.f32 0.0, %v4636
      %v4638 = vpop.f32.mrb[0].mxu0
      %v4639 = vpop.f32.mrb[0].mxu0
      %v4640 = vadd.f32 0.0, %v4639
      %v4641 = vpop.f32.mrb[0].mxu0
      %4642 = vmatprep.mubr.bf16.mxu0 0
      %4643 = vmatmul.mubr.bf16.gmra.mrb[0].mxu0 %v3783
      %v4644 = vpop.f32.mrb[0].mxu0
      %v4645 = vadd.f32 0.0, %v4644
      %v4646 = vpop.f32.mrb[0].mxu0
      %v4647 = vpop.f32.mrb[0].mxu0
      %v4648 = vadd.f32 0.0, %v4647
      %v4649 = vpop.f32.mrb[0].mxu0
      %4650 = vmatprep.mubr.bf16.mxu0 0
      %4651 = vmatmul.mubr.bf16.gmra.mrb[0].mxu0 %v3786
      %v4652 = vpop.f32.mrb[0].mxu0
      %v4653 = vadd.f32 0.0, %v4652
      %v4654 = vpop.f32.mrb[0].mxu0
      %v4655 = vpop.f32.mrb[0].mxu0
      %v4656 = vadd.f32 0.0, %v4655
      %v4657 = vpop.f32.mrb[0].mxu0
      %4658 = vmatprep.mubr.bf16.mxu0 0
      %4659 = vmatmul.mubr.bf16.gmra.mrb[0].mxu0 %v4181
      %v4660 = vpop.f32.mrb[0].mxu0
      %v4661 = vadd.f32 0.0, %v4660
      %v4662 = vpop.f32.mrb[0].mxu0
      %v4663 = vpop.f32.mrb[0].mxu0
      %v4664 = vadd.f32 0.0, %v4663
      %v4665 = vpop.f32.mrb[0].mxu0
      %4666 = vmatprep.mubr.bf16.mxu0 0
      %4667 = vmatmul.mubr.bf16.gmra.mrb[0].mxu0 %v4576
      %v4668 = vpop.f32.mrb[0].mxu0
      %v4669 = vadd.f32 0.0, %v4668
      %v4670 = vpop.f32.mrb[0].mxu0
      %v4671 = vpop.f32.mrb[0].mxu0
      %v4672 = vadd.f32 0.0, %v4671
      %v4673 = vpop.f32.mrb[0].mxu0
      %4674 = vdwg.mxu0
      %v4675 = vadd.f32 %v4542, %v4613
      %v4676 = vadd.f32 %v4543, %v4616
      %v4677 = vadd.f32 %v4544, %v4621
      %v4678 = vadd.f32 %v4545, %v4624
      %v4679 = vadd.f32 %v4546, %v4629
      %v4680 = vadd.f32 %v4547, %v4632
      %v4681 = vadd.f32 %v4548, %v4637
      %v4682 = vadd.f32 %v4549, %v4640
      %v4683 = vadd.f32 %v4550, %v4645
      %v4684 = vadd.f32 %v4551, %v4648
      %v4685 = vadd.f32 %v4552, %v4653
      %v4686 = vadd.f32 %v4553, %v4656
      %v4687 = vadd.f32 %v4554, %v4661
      %v4688 = vadd.f32 %v4555, %v4664
      %v4689 = vadd.f32 %v4556, %v4669
      %v4690 = vadd.f32 %v4557, %v4672
      %v4691 = vld [vmem:[%s4] sm:$0x1]
      %v4693 = vlaneseq
      %v4694 = vshrl.u32 %v4693, 7
      %v4695 = vsub.s32 0, %v4694
      %v4696 = vrot.slane %v4691, %v4695
      %v4698 = vadd.f32 %v4675, %v4696
      %v4699 = vadd.f32 %v4676, %v4696
      %v4700 = vadd.f32 %v4677, %v4696
      %v4701 = vadd.f32 %v4678, %v4696
      %v4702 = vadd.f32 %v4679, %v4696
      %v4703 = vadd.f32 %v4680, %v4696
      %v4704 = vadd.f32 %v4681, %v4696
      %v4705 = vadd.f32 %v4682, %v4696
      %v4706 = vadd.f32 %v4683, %v4696
      %v4707 = vadd.f32 %v4684, %v4696
      %v4708 = vadd.f32 %v4685, %v4696
      %v4709 = vadd.f32 %v4686, %v4696
      %v4710 = vadd.f32 %v4687, %v4696
      %v4711 = vadd.f32 %v4688, %v4696
      %v4712 = vadd.f32 %v4689, %v4696
      %v4713 = vadd.f32 %v4690, %v4696
      %v4714 = vrot.slane %v269, 2
      %v4715 = vrot.slane %v270, 2
      %v4716 = vsel %vm1664, %v4714, %v4715
      %v4717 = vrot.slane %v271, 2
      %v4718 = vsel %vm1664, %v4715, %v4717
      %v4719 = vrot.slane %v272, 2
      %v4720 = vrot.slane %v273, 2
      %v4721 = vsel %vm1664, %v4719, %v4720
      %v4722 = vrot.slane %v274, 2
      %v4723 = vsel %vm1664, %v4720, %v4722
      %v4724 = vrot.slane %v275, 2
      %v4725 = vrot.slane %v276, 2
      %v4726 = vsel %vm1664, %v4724, %v4725
      %v4727 = vrot.slane %v277, 2
      %v4728 = vsel %vm1664, %v4725, %v4727
      %v4729 = vrot.slane %v278, 2
      %v4730 = vrot.slane %v279, 2
      %v4731 = vsel %vm1664, %v4729, %v4730
      %v4732 = vrot.slane %v280, 2
      %v4733 = vsel %vm1664, %v4730, %v4732
      %v4734 = vrot.slane %v281, 2
      %v4735 = vrot.slane %v282, 2
      %v4736 = vsel %vm1664, %v4734, %v4735
      %v4737 = vrot.slane %v283, 2
      %v4738 = vsel %vm1664, %v4735, %v4737
      %v4739 = vrot.slane %v284, 2
      %v4740 = vrot.slane %v285, 2
      %v4741 = vsel %vm1664, %v4739, %v4740
      %v4742 = vrot.slane %v286, 2
      %v4743 = vsel %vm1664, %v4740, %v4742
      %v4744 = vrot.slane %v287, 2
      %v4745 = vrot.slane %v288, 2
      %v4746 = vsel %vm1664, %v4744, %v4745
      %v4747 = vrot.slane %v289, 2
      %v4748 = vsel %vm1664, %v4745, %v4747
      %v4749 = vrot.slane %v290, 2
      %v4750 = vrot.slane %v291, 2
      %v4751 = vsel %vm1664, %v4749, %v4750
      %v4752 = vrot.slane %v292, 2
      %v4753 = vsel %vm1664, %v4750, %v4752
      %v4770 = vadd.f32 %v4716, %v4698
      %v4771 = vadd.f32 %v4718, %v4699
      %v4772 = vadd.f32 %v4721, %v4700
      %v4773 = vadd.f32 %v4723, %v4701
      %v4774 = vadd.f32 %v4726, %v4702
      %v4775 = vadd.f32 %v4728, %v4703
      %v4776 = vadd.f32 %v4731, %v4704
      %v4777 = vadd.f32 %v4733, %v4705
      %v4778 = vadd.f32 %v4736, %v4706
      %v4779 = vadd.f32 %v4738, %v4707
      %v4780 = vadd.f32 %v4741, %v4708
      %v4781 = vadd.f32 %v4743, %v4709
      %v4782 = vadd.f32 %v4746, %v4710
      %v4783 = vadd.f32 %v4748, %v4711
      %v4784 = vadd.f32 %v4751, %v4712
      %v4785 = vadd.f32 %v4753, %v4713
      %vm4786 = vcmask 31744
      %4787 = vst.msk [vmem:[%s260] sm:$0xff] %vm4786, %v4770
      %4788 = vst.msk [vmem:[%s260 + $0x8] sm:$0xff] %vm4786, %v4771
      %4789 = vst.msk [vmem:[%s260 + $0x10] sm:$0xff] %vm4786, %v4772
      %4790 = vst.msk [vmem:[%s260 + $0x18] sm:$0xff] %vm4786, %v4773
      %4791 = vst.msk [vmem:[%s260 + $0x20] sm:$0xff] %vm4786, %v4774
      %4792 = vst.msk [vmem:[%s260 + $0x28] sm:$0xff] %vm4786, %v4775
      %4793 = vst.msk [vmem:[%s260 + $0x30] sm:$0xff] %vm4786, %v4776
      %4794 = vst.msk [vmem:[%s260 + $0x38] sm:$0xff] %vm4786, %v4777
      %4795 = vst.msk [vmem:[%s260 + $0x40] sm:$0xff] %vm4786, %v4778
      %4796 = vst.msk [vmem:[%s260 + $0x48] sm:$0xff] %vm4786, %v4779
      %4797 = vst.msk [vmem:[%s260 + $0x50] sm:$0xff] %vm4786, %v4780
      %4798 = vst.msk [vmem:[%s260 + $0x58] sm:$0xff] %vm4786, %v4781
      %4799 = vst.msk [vmem:[%s260 + $0x60] sm:$0xff] %vm4786, %v4782
      %4800 = vst.msk [vmem:[%s260 + $0x68] sm:$0xff] %vm4786, %v4783
      %4801 = vst.msk [vmem:[%s260 + $0x70] sm:$0xff] %vm4786, %v4784
      %4802 = vst.msk [vmem:[%s260 + $0x78] sm:$0xff] %vm4786, %v4785
      %s4803 = smul.u32 16, %s21
      %p4804 = scmp.lt.s32.totalorder %s20, 1
      %s4805 = scalar_select %p4804, %s20, 1
      %p4806 = scmp.lt.s32.totalorder %s4803, 31
      %s4807 = scalar_select %p4806, %s4803, 31
      %s4808 = smul.addr %s4805, 32
      %s4809 = sadd.s32 %s4807, %s4808
      %s4810 = smul.addr %s4809, 8
      %s4811 = scalar_lea.vmem %s5, %s4810
      // Predicated region
      $region49: #{tpu_custom_call.1} parent=39 // pred_check
        %p4812 = pneg %p160
      $region50: #{tpu_custom_call.1} parent=39 // pred_check_branch
        %4814 = sbr.rel (%p4812) target = $region52
      $region51: #{tpu_custom_call.1} parent=39 // pred_region
        %s4815 = smul.u32 16, %s21
      $region52: #{tpu_custom_call.1} parent=39 // pred_fallthru
        _
    $region40: #{tpu_custom_call.1} parent=5 // pred_fallthru
      _
    %p4816 = scmp.le.s32.totalorder 2, %s11
    // Predicated region
    $region53: #{tpu_custom_call.1} parent=5 // pred_check
      %p4817 = pneg %p4816
    $region54: #{tpu_custom_call.1} parent=5 // pred_check_branch
      %4819 = sbr.rel (%p4817) target = $region56
    $region55: #{tpu_custom_call.1} parent=5 // pred_region
      %s4820 = ssub.s32 %s11, 2
      // Predicated region
      $region57: #{tpu_custom_call.1} parent=55 // pred_check
        %p4821 = pneg %p166
      $region58: #{tpu_custom_call.1} parent=55 // pred_check_branch
        %4823 = sbr.rel (%p4821) target = $region60
      $region59: #{tpu_custom_call.1} parent=55 // pred_region
        %s4824 = smul.u32 16, %s23
        %p4825 = scmp.lt.s32.totalorder %s22, 1
        %s4826 = scalar_select %p4825, %s22, 1
        %p4827 = scmp.lt.s32.totalorder %s4824, 31
        %s4828 = scalar_select %p4827, %s4824, 31
        %s4829 = smul.addr %s4826, 32
        %s4830 = sadd.s32 %s4828, %s4829
        %s4831 = smul.addr %s4830, 8
        %s4832 = scalar_lea.vmem %s5, %s4831
      $region60: #{tpu_custom_call.1} parent=55 // pred_fallthru
        _
    $region56: #{tpu_custom_call.1} parent=5 // pred_fallthru
      _
  $region6: #{tpu_custom_call.1} parent=0 // loop_footer
    %s15 = sadd.s32 1, %s11
  $region7: #{tpu_custom_call.1} parent=0 // loop_footer_branch
    %10 = sbr.rel target = $region3
  $region8: #{tpu_custom_call.1} parent=0 // loop_exit
    _

</llo_original>
